<compile_context>
chip_gen: v6e
topology: v6e:2x2x1
jax: 0.10.0
libtpu: 0.0.40
codegen_flags: <defaults>
</compile_context>

<pallas_src>
import jax
import jax.numpy as jnp
from jax import lax
from jax.experimental import pallas as pl
from jax.experimental.pallas import tpu as pltpu


def _deconv_block_kernel(x_ref, w1_ref, b1_ref, w2t_ref, b2_ref, o_ref, mid_ref):
    # x_ref   : (1, H+2, W+2, Cin)  bf16  spatially padded concat([x2, up(x1)]) (NHWC)
    # w1_ref  : (3, 3, Cin, Cmid)   bf16  conv1 weights, BN1 scale folded in
    # b1_ref  : (1, Cmid)           f32   folded BN1 bias
    # w2t_ref : (3, 3, Cout, Cmid)  f32   conv2 weights, BN2 scale folded, (co, ci) order
    # b2_ref  : (Cout, 1)           f32   folded BN2 bias
    # o_ref   : (1, Cout, H*W)      f32   lane-dense NCHW(flat) output
    # mid_ref : (H+2, W+2, Cmid)    f32   VMEM scratch: zero-padded mid activation
    Hp, Wp, Cin = x_ref.shape[1], x_ref.shape[2], x_ref.shape[3]
    H, W = Hp - 2, Wp - 2
    Cmid = w1_ref.shape[3]
    Cout = o_ref.shape[1]

    # ---- conv1 (3x3, pad=1) + folded BN1 + ReLU ---------------------------
    # Accumulator starts at the folded bias -> no separate scale/add pass.
    acc1 = jnp.broadcast_to(b1_ref[...], (H * W, Cmid))
    for kx in range(3):
        # one (possibly sublane-misaligned) width slice per kx, reused for all ky
        xs = x_ref[0, :, kx:kx + W, :]                        # (H+2, W, Cin) bf16
        for ky in range(3):
            patch = xs[ky:ky + H].reshape(H * W, Cin)         # cheap major-axis slice
            acc1 = acc1 + jnp.dot(patch, w1_ref[ky, kx],
                                  preferred_element_type=jnp.float32)
    mid = jnp.maximum(acc1, 0.0).reshape(H, W, Cmid)

    # Stage mid activation in VMEM with a zero halo (conv2 padding=1).
    mid_ref[...] = jnp.zeros_like(mid_ref)
    mid_ref[1:H + 1, 1:W + 1, :] = mid

    # ---- conv2 (3x3, pad=1) + folded BN2 + ReLU ---------------------------
    # Accumulate as (Cout, H*W): lane-dense accumulator/store and directly
    # NCHW, so the wrapper needs no output transpose.
    acc2 = jnp.broadcast_to(b2_ref[...], (Cout, H * W))
    for kx in range(3):
        ms = mid_ref[:, kx:kx + W, :]                          # (H+2, W, Cmid) f32
        for ky in range(3):
            patch = ms[ky:ky + H].reshape(H * W, Cmid)
            # (Cout, Cmid) @ (H*W, Cmid)^T -> (Cout, H*W)   ("NT" matmul)
            acc2 = acc2 + lax.dot_general(
                w2t_ref[ky, kx], patch,
                dimension_numbers=(((1,), (1,)), ((), ())),
                preferred_element_type=jnp.float32)
    o_ref[0] = jnp.maximum(acc2, 0.0).astype(o_ref.dtype)


def _double_conv_fused(xp, w1, b1, w2t, b2):
    """xp: (B, H+2, W+2, Cin) bf16; returns (B, Cout, H*W) f32 (NCHW, HW flat)."""
    B, Hp, Wp, Cin = xp.shape
    H, W = Hp - 2, Wp - 2
    Cmid = w1.shape[-1]
    Cout = w2t.shape[2]

    return pl.pallas_call(
        _deconv_block_kernel,
        out_shape=jax.ShapeDtypeStruct((B, Cout, H * W), jnp.float32),
        grid_spec=pltpu.PrefetchScalarGridSpec(
            num_scalar_prefetch=0,
            grid=(B,),
            in_specs=[
                pl.BlockSpec((1, Hp, Wp, Cin), lambda b: (b, 0, 0, 0)),
                pl.BlockSpec((3, 3, Cin, Cmid), lambda b: (0, 0, 0, 0)),
                pl.BlockSpec((1, Cmid), lambda b: (0, 0)),
                pl.BlockSpec((3, 3, Cout, Cmid), lambda b: (0, 0, 0, 0)),
                pl.BlockSpec((Cout, 1), lambda b: (0, 0)),
            ],
            out_specs=pl.BlockSpec((1, Cout, H * W), lambda b: (b, 0, 0)),
            scratch_shapes=[pltpu.VMEM((Hp, Wp, Cmid), jnp.float32)],
        ),
        compiler_params=pltpu.CompilerParams(
            dimension_semantics=("parallel",),          # megacore over batch
            vmem_limit_bytes=64 * 1024 * 1024),
    )(xp, w1, b1, w2t, b2)


def _fold_bn_into_conv(w_hwio, conv_b, gamma, beta, mean, var, eps=1e-5):
    """Fold eval-mode BN into the conv: returns (scaled weights, fused bias)."""
    scale = gamma / jnp.sqrt(var + eps)                    # (Cout,)
    w_folded = w_hwio * scale[None, None, None, :]
    bias = (beta + (conv_b - mean) * scale).astype(jnp.float32)
    return w_folded, bias


def init_params(key, in_channels, out_channels):
    mid_channels = in_channels // 2
    ks = jax.random.split(key, 10)

    def conv_w(k, cout, cin):  # PyTorch OIHW -> HWIO
        w = 0.1 * jax.random.normal(k, (cout, cin, 3, 3), jnp.float32)
        return jnp.transpose(w, (2, 3, 1, 0))

    w1 = conv_w(ks[0], mid_channels, in_channels)
    b1 = 0.1 * jax.random.normal(ks[1], (mid_channels,), jnp.float32)
    g1 = 1.0 + 0.1 * jax.random.normal(ks[2], (mid_channels,), jnp.float32)
    be1 = 0.1 * jax.random.normal(ks[3], (mid_channels,), jnp.float32)
    m1 = 0.05 * jax.random.normal(ks[4], (mid_channels,), jnp.float32)
    v1 = 1.0 + 0.1 * jax.random.uniform(ks[5], (mid_channels,), jnp.float32)

    w2 = conv_w(ks[6], out_channels, mid_channels)
    b2 = 0.1 * jax.random.normal(ks[7], (out_channels,), jnp.float32)
    g2 = 1.0 + 0.1 * jax.random.normal(ks[8], (out_channels,), jnp.float32)
    be2 = 0.1 * jax.random.normal(ks[9], (out_channels,), jnp.float32)
    m2 = jnp.zeros((out_channels,), jnp.float32)
    v2 = jnp.ones((out_channels,), jnp.float32)

    # TODO(synk): BatchNorm is implemented in eval mode (running stats folded
    # into the conv); PyTorch train-mode batch statistics are not reproduced.
    w1f, bias1 = _fold_bn_into_conv(w1, b1, g1, be1, m1, v1)
    w2f, bias2 = _fold_bn_into_conv(w2, b2, g2, be2, m2, v2)

    return dict(
        w1=w1f.astype(jnp.bfloat16),                  # (3,3,Cin,Cmid)  bf16
        bias1=bias1.reshape(1, -1),                   # (1,Cmid)        f32
        w2t=jnp.transpose(w2f, (0, 1, 3, 2)),         # (3,3,Cout,Cmid) f32
        bias2=bias2.reshape(-1, 1),                   # (Cout,1)        f32
    )


def deconv_block_forward(x1, x2, params):
    """x1: (B, Cin/2, H/2, W/2), x2: (B, Cin/2, H, W) — NCHW in, NCHW out."""
    B, _, H, W = x2.shape
    Cout = params["w2t"].shape[2]

    # Pre-kernel prep (nearest upsample, pad, channel concat, NCHW->NHWC, halo
    # pad) in bf16 — these are fusible copy ops and XLA emits them as roughly
    # one pass over the activations.
    # TODO(synk): the upsample/concat could also be folded into the Pallas
    # kernel to remove that remaining pre-pass.
    x1b = x1.astype(jnp.bfloat16)
    x2b = x2.astype(jnp.bfloat16)
    x1u = jnp.repeat(jnp.repeat(x1b, 2, axis=2), 2, axis=3)
    dY = H - x1u.shape[2]
    dX = W - x1u.shape[3]
    x1u = jnp.pad(x1u, ((0, 0), (0, 0),
                        (dY // 2, dY - dY // 2),
                        (dX // 2, dX - dX // 2)))
    x = jnp.concatenate([x2b, x1u], axis=1)                 # (B, Cin, H, W)
    x = jnp.transpose(x, (0, 2, 3, 1))                      # NHWC
    xp = jnp.pad(x, ((0, 0), (1, 1), (1, 1), (0, 0)))       # single halo pad

    out = _double_conv_fused(xp, params["w1"], params["bias1"],
                             params["w2t"], params["bias2"])
    return out.reshape(B, Cout, H, W)                       # already NCHW


if __name__ == "__main__":
    in_channels, out_channels = 8, 4                # mid = in_channels // 2 = 4
    B, H, W = 2, 16, 16

    key = jax.random.PRNGKey(0)
    k_x1, k_x2, k_p = jax.random.split(key, 3)
    # x1: low-res feature map (half spatial), x2: skip connection
    x1 = jax.random.normal(k_x1, (B, in_channels // 2, H // 2, W // 2), jnp.float32)
    x2 = jax.random.normal(k_x2, (B, in_channels // 2, H, W), jnp.float32)
    params = init_params(k_p, in_channels, out_channels)

    out = jax.jit(deconv_block_forward)(x1, x2, params)
    jax.block_until_ready(out)
    assert out.shape == (B, out_channels, H, W), out.shape
    print("KERNEL_OK")
</pallas_src>

<mosaic_0001>
module attributes {stable_mosaic.version = 11 : i64} {
  func.func @_deconv_block_kernel(%arg0: i32, %arg1: memref<1x18x18x8xbf16, #tpu.memory_space<vmem>>, %arg2: memref<3x3x8x4xbf16, #tpu.memory_space<vmem>>, %arg3: memref<1x4xf32, #tpu.memory_space<vmem>>, %arg4: memref<3x3x4x4xf32, #tpu.memory_space<vmem>>, %arg5: memref<4x1xf32, #tpu.memory_space<vmem>>, %arg6: memref<1x4x256xf32, #tpu.memory_space<vmem>>, %arg7: memref<18x18x4xf32, #tpu.memory_space<vmem>>) attributes {dimension_semantics = [#tpu.dimension_semantics<parallel>], iteration_bounds = array<i64: 2>, scalar_prefetch = 0 : i64, scratch_operands = 1 : i64, tpu.core_type = #tpu.core_type<tc>, window_params = [{transform_indices = @transform_0, window_bounds = array<i64: 1, 18, 18, 8>}, {pipeline_mode = #tpu.pipeline_mode<synchronous>, transform_indices = @transform_1, window_bounds = array<i64: 3, 3, 8, 4>}, {pipeline_mode = #tpu.pipeline_mode<synchronous>, transform_indices = @transform_2, window_bounds = array<i64: 1, 4>}, {pipeline_mode = #tpu.pipeline_mode<synchronous>, transform_indices = @transform_3, window_bounds = array<i64: 3, 3, 4, 4>}, {pipeline_mode = #tpu.pipeline_mode<synchronous>, transform_indices = @transform_4, window_bounds = array<i64: 4, 1>}, {transform_indices = @transform_5, window_bounds = array<i64: 1, 4, 256>}]} {
    %c0 = arith.constant 0 : index
    %c0_0 = arith.constant 0 : index
    %0 = vector.load %arg3[%c0, %c0_0] : memref<1x4xf32, #tpu.memory_space<vmem>>, vector<1x4xf32>
    %1 = vector.shape_cast %0 : vector<1x4xf32> to vector<1x4xf32>
    %2 = vector.broadcast %1 : vector<1x4xf32> to vector<256x4xf32>
    %c0_1 = arith.constant 0 : index
    %c0_2 = arith.constant 0 : index
    %c0_3 = arith.constant 0 : index
    %c0_4 = arith.constant 0 : index
    %3 = vector.load %arg1[%c0_1, %c0_2, %c0_3, %c0_4] : memref<1x18x18x8xbf16, #tpu.memory_space<vmem>>, vector<1x18x16x8xbf16>
    %4 = vector.shape_cast %3 : vector<1x18x16x8xbf16> to vector<18x16x8xbf16>
    %5 = vector.extract_strided_slice %4 {offsets = [0, 0, 0], sizes = [16, 16, 8], strides = [1, 1, 1]} : vector<18x16x8xbf16> to vector<16x16x8xbf16>
    %6 = vector.shape_cast %5 : vector<16x16x8xbf16> to vector<256x8xbf16>
    %c0_5 = arith.constant 0 : index
    %c0_6 = arith.constant 0 : index
    %c0_7 = arith.constant 0 : index
    %c0_8 = arith.constant 0 : index
    %7 = vector.load %arg2[%c0_5, %c0_6, %c0_7, %c0_8] : memref<3x3x8x4xbf16, #tpu.memory_space<vmem>>, vector<1x1x8x4xbf16>
    %8 = vector.shape_cast %7 : vector<1x1x8x4xbf16> to vector<8x4xbf16>
    %cst = arith.constant dense<0.000000e+00> : vector<256x4xf32>
    %9 = tpu.matmul %6, %8, %cst {dimension_numbers = #tpu.dot_dimension_numbers<[1], [0], [0], [1], [0, 0, 1, 1], [], []>} : vector<256x8xbf16>, vector<8x4xbf16>, vector<256x4xf32> -> vector<256x4xf32>
    %10 = arith.addf %2, %9 : vector<256x4xf32>
    %11 = vector.extract_strided_slice %4 {offsets = [1, 0, 0], sizes = [16, 16, 8], strides = [1, 1, 1]} : vector<18x16x8xbf16> to vector<16x16x8xbf16>
    %12 = vector.shape_cast %11 : vector<16x16x8xbf16> to vector<256x8xbf16>
    %c1 = arith.constant 1 : index
    %c0_9 = arith.constant 0 : index
    %c0_10 = arith.constant 0 : index
    %c0_11 = arith.constant 0 : index
    %13 = vector.load %arg2[%c1, %c0_9, %c0_10, %c0_11] : memref<3x3x8x4xbf16, #tpu.memory_space<vmem>>, vector<1x1x8x4xbf16>
    %14 = vector.shape_cast %13 : vector<1x1x8x4xbf16> to vector<8x4xbf16>
    %cst_12 = arith.constant dense<0.000000e+00> : vector<256x4xf32>
    %15 = tpu.matmul %12, %14, %cst_12 {dimension_numbers = #tpu.dot_dimension_numbers<[1], [0], [0], [1], [0, 0, 1, 1], [], []>} : vector<256x8xbf16>, vector<8x4xbf16>, vector<256x4xf32> -> vector<256x4xf32>
    %16 = arith.addf %10, %15 : vector<256x4xf32>
    %17 = vector.extract_strided_slice %4 {offsets = [2, 0, 0], sizes = [16, 16, 8], strides = [1, 1, 1]} : vector<18x16x8xbf16> to vector<16x16x8xbf16>
    %18 = vector.shape_cast %17 : vector<16x16x8xbf16> to vector<256x8xbf16>
    %c2 = arith.constant 2 : index
    %c0_13 = arith.constant 0 : index
    %c0_14 = arith.constant 0 : index
    %c0_15 = arith.constant 0 : index
    %19 = vector.load %arg2[%c2, %c0_13, %c0_14, %c0_15] : memref<3x3x8x4xbf16, #tpu.memory_space<vmem>>, vector<1x1x8x4xbf16>
    %20 = vector.shape_cast %19 : vector<1x1x8x4xbf16> to vector<8x4xbf16>
    %cst_16 = arith.constant dense<0.000000e+00> : vector<256x4xf32>
    %21 = tpu.matmul %18, %20, %cst_16 {dimension_numbers = #tpu.dot_dimension_numbers<[1], [0], [0], [1], [0, 0, 1, 1], [], []>} : vector<256x8xbf16>, vector<8x4xbf16>, vector<256x4xf32> -> vector<256x4xf32>
    %22 = arith.addf %16, %21 : vector<256x4xf32>
    %c0_17 = arith.constant 0 : index
    %c0_18 = arith.constant 0 : index
    %c1_19 = arith.constant 1 : index
    %c0_20 = arith.constant 0 : index
    %23 = vector.load %arg1[%c0_17, %c0_18, %c1_19, %c0_20] : memref<1x18x18x8xbf16, #tpu.memory_space<vmem>>, vector<1x18x16x8xbf16>
    %24 = vector.shape_cast %23 : vector<1x18x16x8xbf16> to vector<18x16x8xbf16>
    %25 = vector.extract_strided_slice %24 {offsets = [0, 0, 0], sizes = [16, 16, 8], strides = [1, 1, 1]} : vector<18x16x8xbf16> to vector<16x16x8xbf16>
    %26 = vector.shape_cast %25 : vector<16x16x8xbf16> to vector<256x8xbf16>
    %c0_21 = arith.constant 0 : index
    %c1_22 = arith.constant 1 : index
    %c0_23 = arith.constant 0 : index
    %c0_24 = arith.constant 0 : index
    %27 = vector.load %arg2[%c0_21, %c1_22, %c0_23, %c0_24] : memref<3x3x8x4xbf16, #tpu.memory_space<vmem>>, vector<1x1x8x4xbf16>
    %28 = vector.shape_cast %27 : vector<1x1x8x4xbf16> to vector<8x4xbf16>
    %cst_25 = arith.constant dense<0.000000e+00> : vector<256x4xf32>
    %29 = tpu.matmul %26, %28, %cst_25 {dimension_numbers = #tpu.dot_dimension_numbers<[1], [0], [0], [1], [0, 0, 1, 1], [], []>} : vector<256x8xbf16>, vector<8x4xbf16>, vector<256x4xf32> -> vector<256x4xf32>
    %30 = arith.addf %22, %29 : vector<256x4xf32>
    %31 = vector.extract_strided_slice %24 {offsets = [1, 0, 0], sizes = [16, 16, 8], strides = [1, 1, 1]} : vector<18x16x8xbf16> to vector<16x16x8xbf16>
    %32 = vector.shape_cast %31 : vector<16x16x8xbf16> to vector<256x8xbf16>
    %c1_26 = arith.constant 1 : index
    %c1_27 = arith.constant 1 : index
    %c0_28 = arith.constant 0 : index
    %c0_29 = arith.constant 0 : index
    %33 = vector.load %arg2[%c1_26, %c1_27, %c0_28, %c0_29] : memref<3x3x8x4xbf16, #tpu.memory_space<vmem>>, vector<1x1x8x4xbf16>
    %34 = vector.shape_cast %33 : vector<1x1x8x4xbf16> to vector<8x4xbf16>
    %cst_30 = arith.constant dense<0.000000e+00> : vector<256x4xf32>
    %35 = tpu.matmul %32, %34, %cst_30 {dimension_numbers = #tpu.dot_dimension_numbers<[1], [0], [0], [1], [0, 0, 1, 1], [], []>} : vector<256x8xbf16>, vector<8x4xbf16>, vector<256x4xf32> -> vector<256x4xf32>
    %36 = arith.addf %30, %35 : vector<256x4xf32>
    %37 = vector.extract_strided_slice %24 {offsets = [2, 0, 0], sizes = [16, 16, 8], strides = [1, 1, 1]} : vector<18x16x8xbf16> to vector<16x16x8xbf16>
    %38 = vector.shape_cast %37 : vector<16x16x8xbf16> to vector<256x8xbf16>
    %c2_31 = arith.constant 2 : index
    %c1_32 = arith.constant 1 : index
    %c0_33 = arith.constant 0 : index
    %c0_34 = arith.constant 0 : index
    %39 = vector.load %arg2[%c2_31, %c1_32, %c0_33, %c0_34] : memref<3x3x8x4xbf16, #tpu.memory_space<vmem>>, vector<1x1x8x4xbf16>
    %40 = vector.shape_cast %39 : vector<1x1x8x4xbf16> to vector<8x4xbf16>
    %cst_35 = arith.constant dense<0.000000e+00> : vector<256x4xf32>
    %41 = tpu.matmul %38, %40, %cst_35 {dimension_numbers = #tpu.dot_dimension_numbers<[1], [0], [0], [1], [0, 0, 1, 1], [], []>} : vector<256x8xbf16>, vector<8x4xbf16>, vector<256x4xf32> -> vector<256x4xf32>
    %42 = arith.addf %36, %41 : vector<256x4xf32>
    %c0_36 = arith.constant 0 : index
    %c0_37 = arith.constant 0 : index
    %c2_38 = arith.constant 2 : index
    %c0_39 = arith.constant 0 : index
    %43 = vector.load %arg1[%c0_36, %c0_37, %c2_38, %c0_39] : memref<1x18x18x8xbf16, #tpu.memory_space<vmem>>, vector<1x18x16x8xbf16>
    %44 = vector.shape_cast %43 : vector<1x18x16x8xbf16> to vector<18x16x8xbf16>
    %45 = vector.extract_strided_slice %44 {offsets = [0, 0, 0], sizes = [16, 16, 8], strides = [1, 1, 1]} : vector<18x16x8xbf16> to vector<16x16x8xbf16>
    %46 = vector.shape_cast %45 : vector<16x16x8xbf16> to vector<256x8xbf16>
    %c0_40 = arith.constant 0 : index
    %c2_41 = arith.constant 2 : index
    %c0_42 = arith.constant 0 : index
    %c0_43 = arith.constant 0 : index
    %47 = vector.load %arg2[%c0_40, %c2_41, %c0_42, %c0_43] : memref<3x3x8x4xbf16, #tpu.memory_space<vmem>>, vector<1x1x8x4xbf16>
    %48 = vector.shape_cast %47 : vector<1x1x8x4xbf16> to vector<8x4xbf16>
    %cst_44 = arith.constant dense<0.000000e+00> : vector<256x4xf32>
    %49 = tpu.matmul %46, %48, %cst_44 {dimension_numbers = #tpu.dot_dimension_numbers<[1], [0], [0], [1], [0, 0, 1, 1], [], []>} : vector<256x8xbf16>, vector<8x4xbf16>, vector<256x4xf32> -> vector<256x4xf32>
    %50 = arith.addf %42, %49 : vector<256x4xf32>
    %51 = vector.extract_strided_slice %44 {offsets = [1, 0, 0], sizes = [16, 16, 8], strides = [1, 1, 1]} : vector<18x16x8xbf16> to vector<16x16x8xbf16>
    %52 = vector.shape_cast %51 : vector<16x16x8xbf16> to vector<256x8xbf16>
    %c1_45 = arith.constant 1 : index
    %c2_46 = arith.constant 2 : index
    %c0_47 = arith.constant 0 : index
    %c0_48 = arith.constant 0 : index
    %53 = vector.load %arg2[%c1_45, %c2_46, %c0_47, %c0_48] : memref<3x3x8x4xbf16, #tpu.memory_space<vmem>>, vector<1x1x8x4xbf16>
    %54 = vector.shape_cast %53 : vector<1x1x8x4xbf16> to vector<8x4xbf16>
    %cst_49 = arith.constant dense<0.000000e+00> : vector<256x4xf32>
    %55 = tpu.matmul %52, %54, %cst_49 {dimension_numbers = #tpu.dot_dimension_numbers<[1], [0], [0], [1], [0, 0, 1, 1], [], []>} : vector<256x8xbf16>, vector<8x4xbf16>, vector<256x4xf32> -> vector<256x4xf32>
    %56 = arith.addf %50, %55 : vector<256x4xf32>
    %57 = vector.extract_strided_slice %44 {offsets = [2, 0, 0], sizes = [16, 16, 8], strides = [1, 1, 1]} : vector<18x16x8xbf16> to vector<16x16x8xbf16>
    %58 = vector.shape_cast %57 : vector<16x16x8xbf16> to vector<256x8xbf16>
    %c2_50 = arith.constant 2 : index
    %c2_51 = arith.constant 2 : index
    %c0_52 = arith.constant 0 : index
    %c0_53 = arith.constant 0 : index
    %59 = vector.load %arg2[%c2_50, %c2_51, %c0_52, %c0_53] : memref<3x3x8x4xbf16, #tpu.memory_space<vmem>>, vector<1x1x8x4xbf16>
    %60 = vector.shape_cast %59 : vector<1x1x8x4xbf16> to vector<8x4xbf16>
    %cst_54 = arith.constant dense<0.000000e+00> : vector<256x4xf32>
    %61 = tpu.matmul %58, %60, %cst_54 {dimension_numbers = #tpu.dot_dimension_numbers<[1], [0], [0], [1], [0, 0, 1, 1], [], []>} : vector<256x8xbf16>, vector<8x4xbf16>, vector<256x4xf32> -> vector<256x4xf32>
    %62 = arith.addf %56, %61 : vector<256x4xf32>
    %cst_55 = arith.constant 0.000000e+00 : f32
    %63 = vector.broadcast %cst_55 : f32 to vector<256x4xf32>
    %64 = arith.maximumf %62, %63 : vector<256x4xf32>
    %65 = vector.shape_cast %64 : vector<256x4xf32> to vector<16x16x4xf32>
    %cst_56 = arith.constant 0.000000e+00 : f32
    %66 = vector.broadcast %cst_56 : f32 to vector<18x18x4xf32>
    %c0_57 = arith.constant 0 : index
    %c0_58 = arith.constant 0 : index
    %c0_59 = arith.constant 0 : index
    %67 = vector.load %arg7[%c0_57, %c0_58, %c0_59] : memref<18x18x4xf32, #tpu.memory_space<vmem>>, vector<18x18x4xf32>
    tpu.vector_store %arg7[%c0_57, %c0_58, %c0_59], %66 {strides = array<i32>} : memref<18x18x4xf32, #tpu.memory_space<vmem>>, vector<18x18x4xf32>,
    %c1_60 = arith.constant 1 : index
    %c1_61 = arith.constant 1 : index
    %c0_62 = arith.constant 0 : index
    %68 = vector.load %arg7[%c1_60, %c1_61, %c0_62] : memref<18x18x4xf32, #tpu.memory_space<vmem>>, vector<16x16x4xf32>
    tpu.vector_store %arg7[%c1_60, %c1_61, %c0_62], %65 {strides = array<i32>} : memref<18x18x4xf32, #tpu.memory_space<vmem>>, vector<16x16x4xf32>,
    %c0_63 = arith.constant 0 : index
    %c0_64 = arith.constant 0 : index
    %69 = vector.load %arg5[%c0_63, %c0_64] : memref<4x1xf32, #tpu.memory_space<vmem>>, vector<4x1xf32>
    %70 = vector.shape_cast %69 : vector<4x1xf32> to vector<4x1xf32>
    %71 = vector.broadcast %70 : vector<4x1xf32> to vector<4x256xf32>
    %c0_65 = arith.constant 0 : index
    %c0_66 = arith.constant 0 : index
    %c0_67 = arith.constant 0 : index
    %72 = vector.load %arg7[%c0_65, %c0_66, %c0_67] : memref<18x18x4xf32, #tpu.memory_space<vmem>>, vector<18x16x4xf32>
    %73 = vector.extract_strided_slice %72 {offsets = [0, 0, 0], sizes = [16, 16, 4], strides = [1, 1, 1]} : vector<18x16x4xf32> to vector<16x16x4xf32>
    %74 = vector.shape_cast %73 : vector<16x16x4xf32> to vector<256x4xf32>
    %c0_68 = arith.constant 0 : index
    %c0_69 = arith.constant 0 : index
    %c0_70 = arith.constant 0 : index
    %c0_71 = arith.constant 0 : index
    %75 = vector.load %arg4[%c0_68, %c0_69, %c0_70, %c0_71] : memref<3x3x4x4xf32, #tpu.memory_space<vmem>>, vector<1x1x4x4xf32>
    %76 = vector.shape_cast %75 : vector<1x1x4x4xf32> to vector<4x4xf32>
    %cst_72 = arith.constant dense<0.000000e+00> : vector<4x256xf32>
    %77 = tpu.matmul %76, %74, %cst_72 {dimension_numbers = #tpu.dot_dimension_numbers<[1], [1], [0], [0], [0, 0, 1, 0], [], []>} : vector<4x4xf32>, vector<256x4xf32>, vector<4x256xf32> -> vector<4x256xf32>
    %78 = arith.addf %71, %77 : vector<4x256xf32>
    %79 = vector.extract_strided_slice %72 {offsets = [1, 0, 0], sizes = [16, 16, 4], strides = [1, 1, 1]} : vector<18x16x4xf32> to vector<16x16x4xf32>
    %80 = vector.shape_cast %79 : vector<16x16x4xf32> to vector<256x4xf32>
    %c1_73 = arith.constant 1 : index
    %c0_74 = arith.constant 0 : index
    %c0_75 = arith.constant 0 : index
    %c0_76 = arith.constant 0 : index
    %81 = vector.load %arg4[%c1_73, %c0_74, %c0_75, %c0_76] : memref<3x3x4x4xf32, #tpu.memory_space<vmem>>, vector<1x1x4x4xf32>
    %82 = vector.shape_cast %81 : vector<1x1x4x4xf32> to vector<4x4xf32>
    %cst_77 = arith.constant dense<0.000000e+00> : vector<4x256xf32>
    %83 = tpu.matmul %82, %80, %cst_77 {dimension_numbers = #tpu.dot_dimension_numbers<[1], [1], [0], [0], [0, 0, 1, 0], [], []>} : vector<4x4xf32>, vector<256x4xf32>, vector<4x256xf32> -> vector<4x256xf32>
    %84 = arith.addf %78, %83 : vector<4x256xf32>
    %85 = vector.extract_strided_slice %72 {offsets = [2, 0, 0], sizes = [16, 16, 4], strides = [1, 1, 1]} : vector<18x16x4xf32> to vector<16x16x4xf32>
    %86 = vector.shape_cast %85 : vector<16x16x4xf32> to vector<256x4xf32>
    %c2_78 = arith.constant 2 : index
    %c0_79 = arith.constant 0 : index
    %c0_80 = arith.constant 0 : index
    %c0_81 = arith.constant 0 : index
    %87 = vector.load %arg4[%c2_78, %c0_79, %c0_80, %c0_81] : memref<3x3x4x4xf32, #tpu.memory_space<vmem>>, vector<1x1x4x4xf32>
    %88 = vector.shape_cast %87 : vector<1x1x4x4xf32> to vector<4x4xf32>
    %cst_82 = arith.constant dense<0.000000e+00> : vector<4x256xf32>
    %89 = tpu.matmul %88, %86, %cst_82 {dimension_numbers = #tpu.dot_dimension_numbers<[1], [1], [0], [0], [0, 0, 1, 0], [], []>} : vector<4x4xf32>, vector<256x4xf32>, vector<4x256xf32> -> vector<4x256xf32>
    %90 = arith.addf %84, %89 : vector<4x256xf32>
    %c0_83 = arith.constant 0 : index
    %c1_84 = arith.constant 1 : index
    %c0_85 = arith.constant 0 : index
    %91 = vector.load %arg7[%c0_83, %c1_84, %c0_85] : memref<18x18x4xf32, #tpu.memory_space<vmem>>, vector<18x16x4xf32>
    %92 = vector.extract_strided_slice %91 {offsets = [0, 0, 0], sizes = [16, 16, 4], strides = [1, 1, 1]} : vector<18x16x4xf32> to vector<16x16x4xf32>
    %93 = vector.shape_cast %92 : vector<16x16x4xf32> to vector<256x4xf32>
    %c0_86 = arith.constant 0 : index
    %c1_87 = arith.constant 1 : index
    %c0_88 = arith.constant 0 : index
    %c0_89 = arith.constant 0 : index
    %94 = vector.load %arg4[%c0_86, %c1_87, %c0_88, %c0_89] : memref<3x3x4x4xf32, #tpu.memory_space<vmem>>, vector<1x1x4x4xf32>
    %95 = vector.shape_cast %94 : vector<1x1x4x4xf32> to vector<4x4xf32>
    %cst_90 = arith.constant dense<0.000000e+00> : vector<4x256xf32>
    %96 = tpu.matmul %95, %93, %cst_90 {dimension_numbers = #tpu.dot_dimension_numbers<[1], [1], [0], [0], [0, 0, 1, 0], [], []>} : vector<4x4xf32>, vector<256x4xf32>, vector<4x256xf32> -> vector<4x256xf32>
    %97 = arith.addf %90, %96 : vector<4x256xf32>
    %98 = vector.extract_strided_slice %91 {offsets = [1, 0, 0], sizes = [16, 16, 4], strides = [1, 1, 1]} : vector<18x16x4xf32> to vector<16x16x4xf32>
    %99 = vector.shape_cast %98 : vector<16x16x4xf32> to vector<256x4xf32>
    %c1_91 = arith.constant 1 : index
    %c1_92 = arith.constant 1 : index
    %c0_93 = arith.constant 0 : index
    %c0_94 = arith.constant 0 : index
    %100 = vector.load %arg4[%c1_91, %c1_92, %c0_93, %c0_94] : memref<3x3x4x4xf32, #tpu.memory_space<vmem>>, vector<1x1x4x4xf32>
    %101 = vector.shape_cast %100 : vector<1x1x4x4xf32> to vector<4x4xf32>
    %cst_95 = arith.constant dense<0.000000e+00> : vector<4x256xf32>
    %102 = tpu.matmul %101, %99, %cst_95 {dimension_numbers = #tpu.dot_dimension_numbers<[1], [1], [0], [0], [0, 0, 1, 0], [], []>} : vector<4x4xf32>, vector<256x4xf32>, vector<4x256xf32> -> vector<4x256xf32>
    %103 = arith.addf %97, %102 : vector<4x256xf32>
    %104 = vector.extract_strided_slice %91 {offsets = [2, 0, 0], sizes = [16, 16, 4], strides = [1, 1, 1]} : vector<18x16x4xf32> to vector<16x16x4xf32>
    %105 = vector.shape_cast %104 : vector<16x16x4xf32> to vector<256x4xf32>
    %c2_96 = arith.constant 2 : index
    %c1_97 = arith.constant 1 : index
    %c0_98 = arith.constant 0 : index
    %c0_99 = arith.constant 0 : index
    %106 = vector.load %arg4[%c2_96, %c1_97, %c0_98, %c0_99] : memref<3x3x4x4xf32, #tpu.memory_space<vmem>>, vector<1x1x4x4xf32>
    %107 = vector.shape_cast %106 : vector<1x1x4x4xf32> to vector<4x4xf32>
    %cst_100 = arith.constant dense<0.000000e+00> : vector<4x256xf32>
    %108 = tpu.matmul %107, %105, %cst_100 {dimension_numbers = #tpu.dot_dimension_numbers<[1], [1], [0], [0], [0, 0, 1, 0], [], []>} : vector<4x4xf32>, vector<256x4xf32>, vector<4x256xf32> -> vector<4x256xf32>
    %109 = arith.addf %103, %108 : vector<4x256xf32>
    %c0_101 = arith.constant 0 : index
    %c2_102 = arith.constant 2 : index
    %c0_103 = arith.constant 0 : index
    %110 = vector.load %arg7[%c0_101, %c2_102, %c0_103] : memref<18x18x4xf32, #tpu.memory_space<vmem>>, vector<18x16x4xf32>
    %111 = vector.extract_strided_slice %110 {offsets = [0, 0, 0], sizes = [16, 16, 4], strides = [1, 1, 1]} : vector<18x16x4xf32> to vector<16x16x4xf32>
    %112 = vector.shape_cast %111 : vector<16x16x4xf32> to vector<256x4xf32>
    %c0_104 = arith.constant 0 : index
    %c2_105 = arith.constant 2 : index
    %c0_106 = arith.constant 0 : index
    %c0_107 = arith.constant 0 : index
    %113 = vector.load %arg4[%c0_104, %c2_105, %c0_106, %c0_107] : memref<3x3x4x4xf32, #tpu.memory_space<vmem>>, vector<1x1x4x4xf32>
    %114 = vector.shape_cast %113 : vector<1x1x4x4xf32> to vector<4x4xf32>
    %cst_108 = arith.constant dense<0.000000e+00> : vector<4x256xf32>
    %115 = tpu.matmul %114, %112, %cst_108 {dimension_numbers = #tpu.dot_dimension_numbers<[1], [1], [0], [0], [0, 0, 1, 0], [], []>} : vector<4x4xf32>, vector<256x4xf32>, vector<4x256xf32> -> vector<4x256xf32>
    %116 = arith.addf %109, %115 : vector<4x256xf32>
    %117 = vector.extract_strided_slice %110 {offsets = [1, 0, 0], sizes = [16, 16, 4], strides = [1, 1, 1]} : vector<18x16x4xf32> to vector<16x16x4xf32>
    %118 = vector.shape_cast %117 : vector<16x16x4xf32> to vector<256x4xf32>
    %c1_109 = arith.constant 1 : index
    %c2_110 = arith.constant 2 : index
    %c0_111 = arith.constant 0 : index
    %c0_112 = arith.constant 0 : index
    %119 = vector.load %arg4[%c1_109, %c2_110, %c0_111, %c0_112] : memref<3x3x4x4xf32, #tpu.memory_space<vmem>>, vector<1x1x4x4xf32>
    %120 = vector.shape_cast %119 : vector<1x1x4x4xf32> to vector<4x4xf32>
    %cst_113 = arith.constant dense<0.000000e+00> : vector<4x256xf32>
    %121 = tpu.matmul %120, %118, %cst_113 {dimension_numbers = #tpu.dot_dimension_numbers<[1], [1], [0], [0], [0, 0, 1, 0], [], []>} : vector<4x4xf32>, vector<256x4xf32>, vector<4x256xf32> -> vector<4x256xf32>
    %122 = arith.addf %116, %121 : vector<4x256xf32>
    %123 = vector.extract_strided_slice %110 {offsets = [2, 0, 0], sizes = [16, 16, 4], strides = [1, 1, 1]} : vector<18x16x4xf32> to vector<16x16x4xf32>
    %124 = vector.shape_cast %123 : vector<16x16x4xf32> to vector<256x4xf32>
    %c2_114 = arith.constant 2 : index
    %c2_115 = arith.constant 2 : index
    %c0_116 = arith.constant 0 : index
    %c0_117 = arith.constant 0 : index
    %125 = vector.load %arg4[%c2_114, %c2_115, %c0_116, %c0_117] : memref<3x3x4x4xf32, #tpu.memory_space<vmem>>, vector<1x1x4x4xf32>
    %126 = vector.shape_cast %125 : vector<1x1x4x4xf32> to vector<4x4xf32>
    %cst_118 = arith.constant dense<0.000000e+00> : vector<4x256xf32>
    %127 = tpu.matmul %126, %124, %cst_118 {dimension_numbers = #tpu.dot_dimension_numbers<[1], [1], [0], [0], [0, 0, 1, 0], [], []>} : vector<4x4xf32>, vector<256x4xf32>, vector<4x256xf32> -> vector<4x256xf32>
    %128 = arith.addf %122, %127 : vector<4x256xf32>
    %cst_119 = arith.constant 0.000000e+00 : f32
    %129 = vector.broadcast %cst_119 : f32 to vector<4x256xf32>
    %130 = arith.maximumf %128, %129 : vector<4x256xf32>
    %c0_120 = arith.constant 0 : index
    %c0_121 = arith.constant 0 : index
    %c0_122 = arith.constant 0 : index
    %131 = vector.load %arg6[%c0_120, %c0_121, %c0_122] : memref<1x4x256xf32, #tpu.memory_space<vmem>>, vector<1x4x256xf32>
    %132 = vector.shape_cast %131 : vector<1x4x256xf32> to vector<4x256xf32>
    %133 = vector.shape_cast %130 : vector<4x256xf32> to vector<1x4x256xf32>
    tpu.vector_store %arg6[%c0_120, %c0_121, %c0_122], %133 {strides = array<i32>} : memref<1x4x256xf32, #tpu.memory_space<vmem>>, vector<1x4x256xf32>,
    return
  }
  func.func @transform_0(%arg0: i32) -> (i32, i32, i32, i32) {
    %c0_i32 = arith.constant 0 : i32
    %c0_i32_0 = arith.constant 0 : i32
    %c0_i32_1 = arith.constant 0 : i32
    %c0_i32_2 = arith.constant 0 : i32
    return %arg0, %c0_i32, %c0_i32_0, %c0_i32_1 : i32, i32, i32, i32
  }
  func.func @transform_1(%arg0: i32) -> (i32, i32, i32, i32) {
    %c0_i32 = arith.constant 0 : i32
    %c0_i32_0 = arith.constant 0 : i32
    %c0_i32_1 = arith.constant 0 : i32
    %c0_i32_2 = arith.constant 0 : i32
    %c0_i32_3 = arith.constant 0 : i32
    return %c0_i32, %c0_i32_0, %c0_i32_1, %c0_i32_2 : i32, i32, i32, i32
  }
  func.func @transform_2(%arg0: i32) -> (i32, i32) {
    %c0_i32 = arith.constant 0 : i32
    %c0_i32_0 = arith.constant 0 : i32
    %c0_i32_1 = arith.constant 0 : i32
    return %c0_i32, %c0_i32_0 : i32, i32
  }
  func.func @transform_3(%arg0: i32) -> (i32, i32, i32, i32) {
    %c0_i32 = arith.constant 0 : i32
    %c0_i32_0 = arith.constant 0 : i32
    %c0_i32_1 = arith.constant 0 : i32
    %c0_i32_2 = arith.constant 0 : i32
    %c0_i32_3 = arith.constant 0 : i32
    return %c0_i32, %c0_i32_0, %c0_i32_1, %c0_i32_2 : i32, i32, i32, i32
  }
  func.func @transform_4(%arg0: i32) -> (i32, i32) {
    %c0_i32 = arith.constant 0 : i32
    %c0_i32_0 = arith.constant 0 : i32
    %c0_i32_1 = arith.constant 0 : i32
    return %c0_i32, %c0_i32_0 : i32, i32
  }
  func.func @transform_5(%arg0: i32) -> (i32, i32, i32) {
    %c0_i32 = arith.constant 0 : i32
    %c0_i32_0 = arith.constant 0 : i32
    %c0_i32_1 = arith.constant 0 : i32
    return %arg0, %c0_i32, %c0_i32_0 : i32, i32, i32
  }
}

</mosaic_0001>

<llo_original>
// kernel: deconv_block_forward.1
$region0: #{deconv_block_forward.1}
  #allocation0 [shape = 'u32[]', space=smem, size = 0x4, offset = 0x4, fixed_abs, tag = 'smem constant byte address 0x4 - core index']
  #allocation1 [shape = 'u32[144,128]{1,0:T(1,128)}', space=vmem, size = 0x12000, scoped, tag = 'internal scratch']
  #allocation2 [shape = 'f32[18,18,4]{2,1,0:T(8,128)}', space=vmem, size = 0x36000, scoped, tag = 'scratch operand']
  %s0 = inlined_call_operand.vmem [shape: bf16[2,18,18,8], index: 0, kind: input, shape index: {}]
  %s1 = inlined_call_operand.vmem [shape: bf16[3,3,8,4], index: 1, kind: input, shape index: {}]
  %s2 = inlined_call_operand.vmem [shape: f32[1,4], index: 2, kind: input, shape index: {}]
  %s3 = inlined_call_operand.vmem [shape: f32[3,3,4,4], index: 3, kind: input, shape index: {}]
  %s4 = inlined_call_operand.vmem [shape: f32[4,1], index: 4, kind: input, shape index: {}]
  %s5 = inlined_call_operand.vmem [shape: f32[2,4,256], index: 5, kind: output, shape index: {}]
  %s6 = sld [smem:[#allocation0]]
  $region53: #{deconv_block_forward.1} parent=0
    _
  %s8 = ssub.s32 1, %s6
  %s9 = scalar_select 0, %s8, %s6
  loop: start=0, step=1, limit=4
  $region2: #{deconv_block_forward.1} parent=0 // loop_pre_header
    _
  $region3: #{deconv_block_forward.1} parent=0 // loop_header
    %s11 = sphi 0, %s15
    %p12 = scmp.ge.s32.totalorder %s11, 4
    %s21 = sphi 0, %s23
    %s24 = sphi 0, %s21
    %s25 = sphi 0, %s24
    %s41 = sphi 0, %s25
    %s45 = sphi 0, %s45
    %s47 = sphi 0, %s45
    %s48 = sphi 0, %s47
    %s62 = sphi 0, %s48
    %s66 = sphi 0, %s66
    %s68 = sphi 0, %s66
    %s69 = sphi 0, %s68
    %s83 = sphi 0, %s69
    %s87 = sphi 0, %s87
    %s89 = sphi 0, %s87
    %s90 = sphi 0, %s89
    %s104 = sphi 0, %s90
    %s108 = sphi 0, %s108
    %s110 = sphi 0, %s108
    %s111 = sphi 0, %s110
    %s125 = sphi 0, %s111
    %s131 = sphi 0, %s133
    %s134 = sphi 0, %s131
    %s135 = sphi 0, %s134
    %s151 = sphi 0, %s135
  $region4: #{deconv_block_forward.1} parent=0 // loop_header_branch
    %14 = sbr.rel (%p12) target = $region8
  $region5: #{deconv_block_forward.1} parent=0 // loop_body
    %s16 = ssub.s32 %s11, 1
    %s17 = ssub.s32 %s11, 2
    %s18 = sadd.s32 %s11, 1
    %s19 = ssub.s32 %s11, %s18
    %p20 = scmp.eq.s32.totalorder %s19, 0
    %s22 = sadd.s32 %s21, 1
    %s23 = scalar_select %p20, %s21, %s22
    %p26 = pneg %p20
    %p27 = scmp.eq.s32.totalorder %s11, 1
    %p28 = por %p26, %p27
    %p29 = scmp.ne.s32.totalorder %s21, %s24
    %p30 = scmp.eq.s32.totalorder %s11, 0
    %p31 = por %p29, %p30
    %p32 = scmp.ne.s32.totalorder %s21, %s24
    %p33 = scmp.eq.s32.totalorder %s16, 1
    %p34 = por %p32, %p33
    %p35 = scmp.ne.s32.totalorder %s24, %s25
    %p36 = scmp.eq.s32.totalorder %s16, 0
    %p37 = por %p35, %p36
    %p38 = scmp.ne.s32.totalorder %s24, %s25
    %p39 = scmp.eq.s32.totalorder %s17, 1
    %p40 = por %p38, %p39
    %p42 = scmp.ne.s32.totalorder %s25, %s41
    %p43 = scmp.eq.s32.totalorder %s17, 0
    %p44 = por %p42, %p43
    %s46 = sadd.s32 %s45, 1
    %p49 = scmp.eq.s32.totalorder %s11, 1
    %p50 = scmp.ne.s32.totalorder %s45, %s47
    %p51 = scmp.eq.s32.totalorder %s11, 0
    %p52 = por %p50, %p51
    %p53 = scmp.ne.s32.totalorder %s45, %s47
    %p54 = scmp.eq.s32.totalorder %s16, 1
    %p55 = por %p53, %p54
    %p56 = scmp.ne.s32.totalorder %s47, %s48
    %p57 = scmp.eq.s32.totalorder %s16, 0
    %p58 = por %p56, %p57
    %p59 = scmp.ne.s32.totalorder %s47, %s48
    %p60 = scmp.eq.s32.totalorder %s17, 1
    %p61 = por %p59, %p60
    %p63 = scmp.ne.s32.totalorder %s48, %s62
    %p64 = scmp.eq.s32.totalorder %s17, 0
    %p65 = por %p63, %p64
    %s67 = sadd.s32 %s66, 1
    %p70 = scmp.eq.s32.totalorder %s11, 1
    %p71 = scmp.ne.s32.totalorder %s66, %s68
    %p72 = scmp.eq.s32.totalorder %s11, 0
    %p73 = por %p71, %p72
    %p74 = scmp.ne.s32.totalorder %s66, %s68
    %p75 = scmp.eq.s32.totalorder %s16, 1
    %p76 = por %p74, %p75
    %p77 = scmp.ne.s32.totalorder %s68, %s69
    %p78 = scmp.eq.s32.totalorder %s16, 0
    %p79 = por %p77, %p78
    %p80 = scmp.ne.s32.totalorder %s68, %s69
    %p81 = scmp.eq.s32.totalorder %s17, 1
    %p82 = por %p80, %p81
    %p84 = scmp.ne.s32.totalorder %s69, %s83
    %p85 = scmp.eq.s32.totalorder %s17, 0
    %p86 = por %p84, %p85
    %s88 = sadd.s32 %s87, 1
    %p91 = scmp.eq.s32.totalorder %s11, 1
    %p92 = scmp.ne.s32.totalorder %s87, %s89
    %p93 = scmp.eq.s32.totalorder %s11, 0
    %p94 = por %p92, %p93
    %p95 = scmp.ne.s32.totalorder %s87, %s89
    %p96 = scmp.eq.s32.totalorder %s16, 1
    %p97 = por %p95, %p96
    %p98 = scmp.ne.s32.totalorder %s89, %s90
    %p99 = scmp.eq.s32.totalorder %s16, 0
    %p100 = por %p98, %p99
    %p101 = scmp.ne.s32.totalorder %s89, %s90
    %p102 = scmp.eq.s32.totalorder %s17, 1
    %p103 = por %p101, %p102
    %p105 = scmp.ne.s32.totalorder %s90, %s104
    %p106 = scmp.eq.s32.totalorder %s17, 0
    %p107 = por %p105, %p106
    %s109 = sadd.s32 %s108, 1
    %p112 = scmp.eq.s32.totalorder %s11, 1
    %p113 = scmp.ne.s32.totalorder %s108, %s110
    %p114 = scmp.eq.s32.totalorder %s11, 0
    %p115 = por %p113, %p114
    %p116 = scmp.ne.s32.totalorder %s108, %s110
    %p117 = scmp.eq.s32.totalorder %s16, 1
    %p118 = por %p116, %p117
    %p119 = scmp.ne.s32.totalorder %s110, %s111
    %p120 = scmp.eq.s32.totalorder %s16, 0
    %p121 = por %p119, %p120
    %p122 = scmp.ne.s32.totalorder %s110, %s111
    %p123 = scmp.eq.s32.totalorder %s17, 1
    %p124 = por %p122, %p123
    %p126 = scmp.ne.s32.totalorder %s111, %s125
    %p127 = scmp.eq.s32.totalorder %s17, 0
    %p128 = por %p126, %p127
    %s129 = ssub.s32 %s11, %s18
    %p130 = scmp.eq.s32.totalorder %s129, 0
    %s132 = sadd.s32 %s131, 1
    %s133 = scalar_select %p130, %s131, %s132
    %p136 = pneg %p130
    %p137 = scmp.eq.s32.totalorder %s11, 1
    %p138 = por %p136, %p137
    %p139 = scmp.ne.s32.totalorder %s131, %s134
    %p140 = scmp.eq.s32.totalorder %s11, 0
    %p141 = por %p139, %p140
    %p142 = scmp.ne.s32.totalorder %s131, %s134
    %p143 = scmp.eq.s32.totalorder %s16, 1
    %p144 = por %p142, %p143
    %p145 = scmp.ne.s32.totalorder %s134, %s135
    %p146 = scmp.eq.s32.totalorder %s16, 0
    %p147 = por %p145, %p146
    %p148 = scmp.ne.s32.totalorder %s134, %s135
    %p149 = scmp.eq.s32.totalorder %s17, 1
    %p150 = por %p148, %p149
    %p152 = scmp.ne.s32.totalorder %s135, %s151
    %p153 = scmp.eq.s32.totalorder %s17, 0
    %p154 = por %p152, %p153
    %p155 = scmp.le.s32.totalorder 1, %s11
    %p156 = scmp.lt.s32.totalorder %s11, 3
    %p157 = pnand %p155, %p156
    %p158 = pneg %p157
    // Predicated region
    $region9: #{deconv_block_forward.1} parent=5 // pred_check
      _
    $region10: #{deconv_block_forward.1} parent=5 // pred_check_branch
      %160 = sbr.rel (%p157) target = $region12
    $region11: #{deconv_block_forward.1} parent=5 // pred_region
      %s161 = ssub.s32 %s11, 1
      // Predicated region
      $region13: #{deconv_block_forward.1} parent=11 // pred_check
        %p162 = pneg %p58
      $region14: #{deconv_block_forward.1} parent=11 // pred_check_branch
        %164 = sbr.rel (%p162) target = $region16
      $region15: #{deconv_block_forward.1} parent=11 // pred_region
        _
      $region16: #{deconv_block_forward.1} parent=11 // pred_fallthru
        _
      // Predicated region
      $region17: #{deconv_block_forward.1} parent=11 // pred_check
        %p165 = pneg %p79
      $region18: #{deconv_block_forward.1} parent=11 // pred_check_branch
        %167 = sbr.rel (%p165) target = $region20
      $region19: #{deconv_block_forward.1} parent=11 // pred_region
        _
      $region20: #{deconv_block_forward.1} parent=11 // pred_fallthru
        _
      // Predicated region
      $region21: #{deconv_block_forward.1} parent=11 // pred_check
        %p168 = pneg %p100
      $region22: #{deconv_block_forward.1} parent=11 // pred_check_branch
        %170 = sbr.rel (%p168) target = $region24
      $region23: #{deconv_block_forward.1} parent=11 // pred_region
        _
      $region24: #{deconv_block_forward.1} parent=11 // pred_fallthru
        _
      // Predicated region
      $region25: #{deconv_block_forward.1} parent=11 // pred_check
        %p171 = pneg %p121
      $region26: #{deconv_block_forward.1} parent=11 // pred_check_branch
        %173 = sbr.rel (%p171) target = $region28
      $region27: #{deconv_block_forward.1} parent=11 // pred_region
        _
      $region28: #{deconv_block_forward.1} parent=11 // pred_fallthru
        _
    $region12: #{deconv_block_forward.1} parent=5 // pred_fallthru
      _
    %p174 = scmp.lt.s32.totalorder %s11, 2
    // Predicated region
    $region29: #{deconv_block_forward.1} parent=5 // pred_check
      %p175 = pneg %p174
    $region30: #{deconv_block_forward.1} parent=5 // pred_check_branch
      %177 = sbr.rel (%p175) target = $region32
    $region31: #{deconv_block_forward.1} parent=5 // pred_region
      // Predicated region
      $region33: #{deconv_block_forward.1} parent=31 // pred_check
        %p178 = pneg %p31
      $region34: #{deconv_block_forward.1} parent=31 // pred_check_branch
        %180 = sbr.rel (%p178) target = $region36
      $region35: #{deconv_block_forward.1} parent=31 // pred_region
        %p181 = scmp.lt.s32.totalorder %s11, 1
        %s182 = scalar_select %p181, %s11, 1
        %s183 = smul.addr %s182, 54
        %s184 = smul.addr %s183, 4
        %s185 = scalar_lea.vmem %s0, %s184
      $region36: #{deconv_block_forward.1} parent=31 // pred_fallthru
        _
    $region32: #{deconv_block_forward.1} parent=5 // pred_fallthru
      _
    %p186 = scmp.le.s32.totalorder 1, %s11
    %p187 = scmp.lt.s32.totalorder %s11, 3
    %p188 = pnand %p186, %p187
    %p189 = pneg %p188
    // Predicated region
    $region37: #{deconv_block_forward.1} parent=5 // pred_check
      _
    $region38: #{deconv_block_forward.1} parent=5 // pred_check_branch
      %191 = sbr.rel (%p188) target = $region40
    $region39: #{deconv_block_forward.1} parent=5 // pred_region
      %s192 = ssub.s32 %s11, 1
      %p193 = scmp.lt.s32.totalorder %s16, 1
      %s194 = scalar_select %p193, %s16, 1
      %s195 = smul.addr %s194, 54
      %s196 = smul.addr %s195, 4
      %s197 = scalar_lea.vmem %s0, %s196
      %p198 = pneg %p37
      %p199 = pneg %p34
      %p200 = pneg %p58
      %p201 = pneg %p55
      %p202 = pneg %p79
      %p203 = pneg %p76
      %p204 = pneg %p100
      %p205 = pneg %p97
      %p206 = pneg %p121
      %p207 = pneg %p118
      %p208 = pneg %p147
      %p209 = pneg %p144
      %p210 = scmp.lt.s32.totalorder %s16, 1
      %s211 = scalar_select %p210, %s16, 1
      %s212 = smul.addr %s211, 2
      %s213 = smul.addr %s212, 4
      %s214 = scalar_lea.vmem %s5, %s213
      %p215 = scmp.lt.s32.totalorder %s16, 1
      %s216 = scalar_select %p215, %s16, 1
      %s217 = smul.addr %s216, 54
      %s218 = smul.addr %s217, 4
      %s219 = scalar_lea.vmem %s0, %s218
      %p220 = scmp.lt.s32.totalorder %s16, 1
      %s221 = scalar_select %p220, %s16, 1
      %s222 = smul.addr %s221, 2
      %s223 = smul.addr %s222, 4
      %s224 = scalar_lea.vmem %s5, %s223
      %v226 = vld [vmem:[%s2] sm:$0x1]
      %v228 = vlaneseq
      %v229 = vshrl.u32 %v228, 7
      %v230 = vsub.s32 0, %v229
      %v231 = vrot.slane %v226, %v230
      %v233 = vld [vmem:[%s219] sm:$0xf]
      %v234 = vld [vmem:[%s219 + $0x4] sm:$0xf]
      %v235 = vld [vmem:[%s219 + $0xc] sm:$0xf]
      %v236 = vld [vmem:[%s219 + $0x10] sm:$0xf]
      %v237 = vld [vmem:[%s219 + $0x18] sm:$0xf]
      %v238 = vld [vmem:[%s219 + $0x1c] sm:$0xf]
      %v239 = vld [vmem:[%s219 + $0x24] sm:$0xf]
      %v240 = vld [vmem:[%s219 + $0x28] sm:$0xf]
      %v241 = vld [vmem:[%s219 + $0x30] sm:$0xf]
      %v242 = vld [vmem:[%s219 + $0x34] sm:$0xf]
      %v243 = vld [vmem:[%s219 + $0x3c] sm:$0xf]
      %v244 = vld [vmem:[%s219 + $0x40] sm:$0xf]
      %v245 = vld [vmem:[%s219 + $0x48] sm:$0xf]
      %v246 = vld [vmem:[%s219 + $0x4c] sm:$0xf]
      %v247 = vld [vmem:[%s219 + $0x54] sm:$0xf]
      %v248 = vld [vmem:[%s219 + $0x58] sm:$0xf]
      %v249 = vld [vmem:[%s219 + $0x60] sm:$0xf]
      %v250 = vld [vmem:[%s219 + $0x64] sm:$0xf]
      %v251 = vld [vmem:[%s219 + $0x6c] sm:$0xf]
      %v252 = vld [vmem:[%s219 + $0x70] sm:$0xf]
      %v253 = vld [vmem:[%s219 + $0x78] sm:$0xf]
      %v254 = vld [vmem:[%s219 + $0x7c] sm:$0xf]
      %v255 = vld [vmem:[%s219 + $0x84] sm:$0xf]
      %v256 = vld [vmem:[%s219 + $0x88] sm:$0xf]
      %v257 = vld [vmem:[%s219 + $0x90] sm:$0xf]
      %v258 = vld [vmem:[%s219 + $0x94] sm:$0xf]
      %v259 = vld [vmem:[%s219 + $0x9c] sm:$0xf]
      %v260 = vld [vmem:[%s219 + $0xa0] sm:$0xf]
      %v261 = vld [vmem:[%s219 + $0xa8] sm:$0xf]
      %v262 = vld [vmem:[%s219 + $0xac] sm:$0xf]
      %v263 = vld [vmem:[%s219 + $0xb4] sm:$0xf]
      %v264 = vld [vmem:[%s219 + $0xb8] sm:$0xf]
      %v265 = vld [vmem:[%s219 + $0xc0] sm:$0xf]
      %v266 = vld [vmem:[%s219 + $0xc4] sm:$0xf]
      %v267 = vld [vmem:[%s219 + $0xcc] sm:$0xf]
      %v268 = vld [vmem:[%s219 + $0xd0] sm:$0xf]
      %v269 = vld [vmem:[%s1] sm:$0xf]
      %v302 = vunpack.c.l.b16 %v233
      %v303 = vunpack.c.l.b16 %v234
      %v304 = vunpack.c.l.b16 %v235
      %v305 = vunpack.c.l.b16 %v236
      %v306 = vunpack.c.l.b16 %v237
      %v307 = vunpack.c.l.b16 %v238
      %v308 = vunpack.c.l.b16 %v239
      %v309 = vunpack.c.l.b16 %v240
      %v310 = vunpack.c.l.b16 %v241
      %v311 = vunpack.c.l.b16 %v242
      %v312 = vunpack.c.l.b16 %v243
      %v313 = vunpack.c.l.b16 %v244
      %v314 = vunpack.c.l.b16 %v245
      %v315 = vunpack.c.l.b16 %v246
      %v316 = vunpack.c.l.b16 %v247
      %v317 = vunpack.c.l.b16 %v248
      %v318 = vunpack.c.l.b16 %v249
      %v319 = vunpack.c.l.b16 %v250
      %v320 = vunpack.c.l.b16 %v251
      %v321 = vunpack.c.l.b16 %v252
      %v322 = vunpack.c.l.b16 %v253
      %v323 = vunpack.c.l.b16 %v254
      %v324 = vunpack.c.l.b16 %v255
      %v325 = vunpack.c.l.b16 %v256
      %v326 = vunpack.c.l.b16 %v257
      %v327 = vunpack.c.l.b16 %v258
      %v328 = vunpack.c.l.b16 %v259
      %v329 = vunpack.c.l.b16 %v260
      %v330 = vunpack.c.l.b16 %v261
      %v331 = vunpack.c.l.b16 %v262
      %v332 = vunpack.c.l.b16 %v263
      %v333 = vunpack.c.l.b16 %v264
      %v334 = vpack.c.b16 %v303, %v302
      %v335 = vpack.c.b16 %v305, %v304
      %v336 = vpack.c.b16 %v307, %v306
      %v337 = vpack.c.b16 %v309, %v308
      %v338 = vpack.c.b16 %v311, %v310
      %v339 = vpack.c.b16 %v313, %v312
      %v340 = vpack.c.b16 %v315, %v314
      %v341 = vpack.c.b16 %v317, %v316
      %v342 = vpack.c.b16 %v319, %v318
      %v343 = vpack.c.b16 %v321, %v320
      %v344 = vpack.c.b16 %v323, %v322
      %v345 = vpack.c.b16 %v325, %v324
      %v346 = vpack.c.b16 %v327, %v326
      %v347 = vpack.c.b16 %v329, %v328
      %v348 = vpack.c.b16 %v331, %v330
      %v349 = vpack.c.b16 %v333, %v332
      %vm350 = vcmask 64512
      %v352 = vsel %vm350, %v334, 0
      %v355 = vsel %vm350, %v335, 0
      %v358 = vsel %vm350, %v336, 0
      %v361 = vsel %vm350, %v337, 0
      %v364 = vsel %vm350, %v338, 0
      %v367 = vsel %vm350, %v339, 0
      %v370 = vsel %vm350, %v340, 0
      %v373 = vsel %vm350, %v341, 0
      %v376 = vsel %vm350, %v342, 0
      %v379 = vsel %vm350, %v343, 0
      %v382 = vsel %vm350, %v344, 0
      %v385 = vsel %vm350, %v345, 0
      %v388 = vsel %vm350, %v346, 0
      %v391 = vsel %vm350, %v347, 0
      %v394 = vsel %vm350, %v348, 0
      %v397 = vsel %vm350, %v349, 0
      %vm399 = vcmask 1043456
      %v401 = vsel %vm399, %v269, 0
      %403 = vmatprep.subr.bf16.mxu0 0
      %404 = vmatpush1.bf16.msra.mxu0 0
      %405 = vmatprep.subr.bf16.mxu0 0
      %406 = vmatpush1.bf16.msra.mxu0 0
      %407 = vmatprep.subr.bf16.mxu0 0
      %408 = vmatpush1.bf16.msra.mxu0 0
      %409 = vmatprep.subr.bf16.mxu0 0
      %410 = vmatpush1.bf16.msra.mxu0 0
      %411 = vmatprep.subr.bf16.mxu0 0
      %412 = vmatpush1.bf16.msra.mxu0 0
      %413 = vmatprep.subr.bf16.mxu0 0
      %414 = vmatpush1.bf16.msra.mxu0 0
      %415 = vmatprep.subr.bf16.mxu0 0
      %416 = vmatpush1.bf16.msra.mxu0 0
      %417 = vmatprep.subr.bf16.mxu0 0
      %418 = vmatpush1.bf16.msra.mxu0 %v401
      %419 = vmatprep.subr.bf16.mxu0 0
      %420 = vmatpush2.bf16.msra.mxu0 0
      %421 = vmatprep.subr.bf16.mxu0 0
      %422 = vmatpush2.bf16.msra.mxu0 0
      %423 = vmatprep.subr.bf16.mxu0 0
      %424 = vmatpush2.bf16.msra.mxu0 0
      %425 = vmatprep.subr.bf16.mxu0 0
      %426 = vmatpush2.bf16.msra.mxu0 0
      %427 = vmatprep.subr.bf16.mxu0 0
      %428 = vmatpush2.bf16.msra.mxu0 0
      %429 = vmatprep.subr.bf16.mxu0 0
      %430 = vmatpush2.bf16.msra.mxu0 0
      %431 = vmatprep.subr.bf16.mxu0 0
      %432 = vmatpush2.bf16.msra.mxu0 0
      %433 = vmatprep.subr.bf16.mxu0 0
      %434 = vmatpush2.bf16.msra.mxu0 0
      %435 = vmatprep.mubr.bf16.mxu0 0
      %436 = vmatmul.mubr.bf16.gmra.mxu0 %v352
      %v437 = vpop.f32.mrf.mxu0
      %v438 = vadd.f32 0.0, %v437
      %v439 = vpop.f32.mrf.mxu0
      %v440 = vpop.f32.mrf.mxu0
      %v441 = vadd.f32 0.0, %v440
      %v442 = vpop.f32.mrf.mxu0
      %443 = vmatprep.mubr.bf16.mxu0 0
      %444 = vmatmul.mubr.bf16.gmra.mxu0 %v355
      %v445 = vpop.f32.mrf.mxu0
      %v446 = vadd.f32 0.0, %v445
      %v447 = vpop.f32.mrf.mxu0
      %v448 = vpop.f32.mrf.mxu0
      %v449 = vadd.f32 0.0, %v448
      %v450 = vpop.f32.mrf.mxu0
      %451 = vmatprep.mubr.bf16.mxu0 0
      %452 = vmatmul.mubr.bf16.gmra.mxu0 %v358
      %v453 = vpop.f32.mrf.mxu0
      %v454 = vadd.f32 0.0, %v453
      %v455 = vpop.f32.mrf.mxu0
      %v456 = vpop.f32.mrf.mxu0
      %v457 = vadd.f32 0.0, %v456
      %v458 = vpop.f32.mrf.mxu0
      %459 = vmatprep.mubr.bf16.mxu0 0
      %460 = vmatmul.mubr.bf16.gmra.mxu0 %v361
      %v461 = vpop.f32.mrf.mxu0
      %v462 = vadd.f32 0.0, %v461
      %v463 = vpop.f32.mrf.mxu0
      %v464 = vpop.f32.mrf.mxu0
      %v465 = vadd.f32 0.0, %v464
      %v466 = vpop.f32.mrf.mxu0
      %467 = vmatprep.mubr.bf16.mxu0 0
      %468 = vmatmul.mubr.bf16.gmra.mxu0 %v364
      %v469 = vpop.f32.mrf.mxu0
      %v470 = vadd.f32 0.0, %v469
      %v471 = vpop.f32.mrf.mxu0
      %v472 = vpop.f32.mrf.mxu0
      %v473 = vadd.f32 0.0, %v472
      %v474 = vpop.f32.mrf.mxu0
      %475 = vmatprep.mubr.bf16.mxu0 0
      %476 = vmatmul.mubr.bf16.gmra.mxu0 %v367
      %v477 = vpop.f32.mrf.mxu0
      %v478 = vadd.f32 0.0, %v477
      %v479 = vpop.f32.mrf.mxu0
      %v480 = vpop.f32.mrf.mxu0
      %v481 = vadd.f32 0.0, %v480
      %v482 = vpop.f32.mrf.mxu0
      %483 = vmatprep.mubr.bf16.mxu0 0
      %484 = vmatmul.mubr.bf16.gmra.mxu0 %v370
      %v485 = vpop.f32.mrf.mxu0
      %v486 = vadd.f32 0.0, %v485
      %v487 = vpop.f32.mrf.mxu0
      %v488 = vpop.f32.mrf.mxu0
      %v489 = vadd.f32 0.0, %v488
      %v490 = vpop.f32.mrf.mxu0
      %491 = vmatprep.mubr.bf16.mxu0 0
      %492 = vmatmul.mubr.bf16.gmra.mxu0 %v373
      %v493 = vpop.f32.mrf.mxu0
      %v494 = vadd.f32 0.0, %v493
      %v495 = vpop.f32.mrf.mxu0
      %v496 = vpop.f32.mrf.mxu0
      %v497 = vadd.f32 0.0, %v496
      %v498 = vpop.f32.mrf.mxu0
      %499 = vmatprep.mubr.bf16.mxu0 0
      %500 = vmatmul.mubr.bf16.gmra.mxu0 %v376
      %v501 = vpop.f32.mrf.mxu0
      %v502 = vadd.f32 0.0, %v501
      %v503 = vpop.f32.mrf.mxu0
      %v504 = vpop.f32.mrf.mxu0
      %v505 = vadd.f32 0.0, %v504
      %v506 = vpop.f32.mrf.mxu0
      %507 = vmatprep.mubr.bf16.mxu0 0
      %508 = vmatmul.mubr.bf16.gmra.mxu0 %v379
      %v509 = vpop.f32.mrf.mxu0
      %v510 = vadd.f32 0.0, %v509
      %v511 = vpop.f32.mrf.mxu0
      %v512 = vpop.f32.mrf.mxu0
      %v513 = vadd.f32 0.0, %v512
      %v514 = vpop.f32.mrf.mxu0
      %515 = vmatprep.mubr.bf16.mxu0 0
      %516 = vmatmul.mubr.bf16.gmra.mxu0 %v382
      %v517 = vpop.f32.mrf.mxu0
      %v518 = vadd.f32 0.0, %v517
      %v519 = vpop.f32.mrf.mxu0
      %v520 = vpop.f32.mrf.mxu0
      %v521 = vadd.f32 0.0, %v520
      %v522 = vpop.f32.mrf.mxu0
      %523 = vmatprep.mubr.bf16.mxu0 0
      %524 = vmatmul.mubr.bf16.gmra.mxu0 %v385
      %v525 = vpop.f32.mrf.mxu0
      %v526 = vadd.f32 0.0, %v525
      %v527 = vpop.f32.mrf.mxu0
      %v528 = vpop.f32.mrf.mxu0
      %v529 = vadd.f32 0.0, %v528
      %v530 = vpop.f32.mrf.mxu0
      %531 = vmatprep.mubr.bf16.mxu0 0
      %532 = vmatmul.mubr.bf16.gmra.mxu0 %v388
      %v533 = vpop.f32.mrf.mxu0
      %v534 = vadd.f32 0.0, %v533
      %v535 = vpop.f32.mrf.mxu0
      %v536 = vpop.f32.mrf.mxu0
      %v537 = vadd.f32 0.0, %v536
      %v538 = vpop.f32.mrf.mxu0
      %539 = vmatprep.mubr.bf16.mxu0 0
      %540 = vmatmul.mubr.bf16.gmra.mxu0 %v391
      %v541 = vpop.f32.mrf.mxu0
      %v542 = vadd.f32 0.0, %v541
      %v543 = vpop.f32.mrf.mxu0
      %v544 = vpop.f32.mrf.mxu0
      %v545 = vadd.f32 0.0, %v544
      %v546 = vpop.f32.mrf.mxu0
      %547 = vmatprep.mubr.bf16.mxu0 0
      %548 = vmatmul.mubr.bf16.gmra.mxu0 %v394
      %v549 = vpop.f32.mrf.mxu0
      %v550 = vadd.f32 0.0, %v549
      %v551 = vpop.f32.mrf.mxu0
      %v552 = vpop.f32.mrf.mxu0
      %v553 = vadd.f32 0.0, %v552
      %v554 = vpop.f32.mrf.mxu0
      %555 = vmatprep.mubr.bf16.mxu0 0
      %556 = vmatmul.mubr.bf16.gmra.mxu0 %v397
      %v557 = vpop.f32.mrf.mxu0
      %v558 = vadd.f32 0.0, %v557
      %v559 = vpop.f32.mrf.mxu0
      %v560 = vpop.f32.mrf.mxu0
      %v561 = vadd.f32 0.0, %v560
      %v562 = vpop.f32.mrf.mxu0
      %563 = vdwg.mxu0
      %v564 = vadd.f32 %v231, %v438
      %v565 = vadd.f32 %v231, %v441
      %v566 = vadd.f32 %v231, %v446
      %v567 = vadd.f32 %v231, %v449
      %v568 = vadd.f32 %v231, %v454
      %v569 = vadd.f32 %v231, %v457
      %v570 = vadd.f32 %v231, %v462
      %v571 = vadd.f32 %v231, %v465
      %v572 = vadd.f32 %v231, %v470
      %v573 = vadd.f32 %v231, %v473
      %v574 = vadd.f32 %v231, %v478
      %v575 = vadd.f32 %v231, %v481
      %v576 = vadd.f32 %v231, %v486
      %v577 = vadd.f32 %v231, %v489
      %v578 = vadd.f32 %v231, %v494
      %v579 = vadd.f32 %v231, %v497
      %v580 = vadd.f32 %v231, %v502
      %v581 = vadd.f32 %v231, %v505
      %v582 = vadd.f32 %v231, %v510
      %v583 = vadd.f32 %v231, %v513
      %v584 = vadd.f32 %v231, %v518
      %v585 = vadd.f32 %v231, %v521
      %v586 = vadd.f32 %v231, %v526
      %v587 = vadd.f32 %v231, %v529
      %v588 = vadd.f32 %v231, %v534
      %v589 = vadd.f32 %v231, %v537
      %v590 = vadd.f32 %v231, %v542
      %v591 = vadd.f32 %v231, %v545
      %v592 = vadd.f32 %v231, %v550
      %v593 = vadd.f32 %v231, %v553
      %v594 = vadd.f32 %v231, %v558
      %v595 = vadd.f32 %v231, %v561
      %s596 = scalar_lea.vmem %s1, 12
      %v597 = vld [vmem:[%s596] sm:$0xf]
      %v600 = vunpack.c.l.b16 %v265
      %v601 = vunpack.c.l.b16 %v266
      %v602 = vpack.c.b16 %v601, %v600
      %v604 = vsel %vm350, %v602, 0
      %v607 = vsel %vm399, %v597, 0
      %609 = vmatprep.subr.bf16.mxu0 0
      %610 = vmatpush1.bf16.msra.mxu0 0
      %611 = vmatprep.subr.bf16.mxu0 0
      %612 = vmatpush1.bf16.msra.mxu0 0
      %613 = vmatprep.subr.bf16.mxu0 0
      %614 = vmatpush1.bf16.msra.mxu0 0
      %615 = vmatprep.subr.bf16.mxu0 0
      %616 = vmatpush1.bf16.msra.mxu0 0
      %617 = vmatprep.subr.bf16.mxu0 0
      %618 = vmatpush1.bf16.msra.mxu0 0
      %619 = vmatprep.subr.bf16.mxu0 0
      %620 = vmatpush1.bf16.msra.mxu0 0
      %621 = vmatprep.subr.bf16.mxu0 0
      %622 = vmatpush1.bf16.msra.mxu0 0
      %623 = vmatprep.subr.bf16.mxu0 0
      %624 = vmatpush1.bf16.msra.mxu0 %v607
      %625 = vmatprep.subr.bf16.mxu0 0
      %626 = vmatpush2.bf16.msra.mxu0 0
      %627 = vmatprep.subr.bf16.mxu0 0
      %628 = vmatpush2.bf16.msra.mxu0 0
      %629 = vmatprep.subr.bf16.mxu0 0
      %630 = vmatpush2.bf16.msra.mxu0 0
      %631 = vmatprep.subr.bf16.mxu0 0
      %632 = vmatpush2.bf16.msra.mxu0 0
      %633 = vmatprep.subr.bf16.mxu0 0
      %634 = vmatpush2.bf16.msra.mxu0 0
      %635 = vmatprep.subr.bf16.mxu0 0
      %636 = vmatpush2.bf16.msra.mxu0 0
      %637 = vmatprep.subr.bf16.mxu0 0
      %638 = vmatpush2.bf16.msra.mxu0 0
      %639 = vmatprep.subr.bf16.mxu0 0
      %640 = vmatpush2.bf16.msra.mxu0 0
      %641 = vmatprep.mubr.bf16.mxu0 0
      %642 = vmatmul.mubr.bf16.gmra.mxu0 %v355
      %v643 = vpop.f32.mrf.mxu0
      %v644 = vadd.f32 0.0, %v643
      %v645 = vpop.f32.mrf.mxu0
      %v646 = vpop.f32.mrf.mxu0
      %v647 = vadd.f32 0.0, %v646
      %v648 = vpop.f32.mrf.mxu0
      %649 = vmatprep.mubr.bf16.mxu0 0
      %650 = vmatmul.mubr.bf16.gmra.mxu0 %v358
      %v651 = vpop.f32.mrf.mxu0
      %v652 = vadd.f32 0.0, %v651
      %v653 = vpop.f32.mrf.mxu0
      %v654 = vpop.f32.mrf.mxu0
      %v655 = vadd.f32 0.0, %v654
      %v656 = vpop.f32.mrf.mxu0
      %657 = vmatprep.mubr.bf16.mxu0 0
      %658 = vmatmul.mubr.bf16.gmra.mxu0 %v361
      %v659 = vpop.f32.mrf.mxu0
      %v660 = vadd.f32 0.0, %v659
      %v661 = vpop.f32.mrf.mxu0
      %v662 = vpop.f32.mrf.mxu0
      %v663 = vadd.f32 0.0, %v662
      %v664 = vpop.f32.mrf.mxu0
      %665 = vmatprep.mubr.bf16.mxu0 0
      %666 = vmatmul.mubr.bf16.gmra.mxu0 %v364
      %v667 = vpop.f32.mrf.mxu0
      %v668 = vadd.f32 0.0, %v667
      %v669 = vpop.f32.mrf.mxu0
      %v670 = vpop.f32.mrf.mxu0
      %v671 = vadd.f32 0.0, %v670
      %v672 = vpop.f32.mrf.mxu0
      %673 = vmatprep.mubr.bf16.mxu0 0
      %674 = vmatmul.mubr.bf16.gmra.mxu0 %v367
      %v675 = vpop.f32.mrf.mxu0
      %v676 = vadd.f32 0.0, %v675
      %v677 = vpop.f32.mrf.mxu0
      %v678 = vpop.f32.mrf.mxu0
      %v679 = vadd.f32 0.0, %v678
      %v680 = vpop.f32.mrf.mxu0
      %681 = vmatprep.mubr.bf16.mxu0 0
      %682 = vmatmul.mubr.bf16.gmra.mxu0 %v370
      %v683 = vpop.f32.mrf.mxu0
      %v684 = vadd.f32 0.0, %v683
      %v685 = vpop.f32.mrf.mxu0
      %v686 = vpop.f32.mrf.mxu0
      %v687 = vadd.f32 0.0, %v686
      %v688 = vpop.f32.mrf.mxu0
      %689 = vmatprep.mubr.bf16.mxu0 0
      %690 = vmatmul.mubr.bf16.gmra.mxu0 %v373
      %v691 = vpop.f32.mrf.mxu0
      %v692 = vadd.f32 0.0, %v691
      %v693 = vpop.f32.mrf.mxu0
      %v694 = vpop.f32.mrf.mxu0
      %v695 = vadd.f32 0.0, %v694
      %v696 = vpop.f32.mrf.mxu0
      %697 = vmatprep.mubr.bf16.mxu0 0
      %698 = vmatmul.mubr.bf16.gmra.mxu0 %v376
      %v699 = vpop.f32.mrf.mxu0
      %v700 = vadd.f32 0.0, %v699
      %v701 = vpop.f32.mrf.mxu0
      %v702 = vpop.f32.mrf.mxu0
      %v703 = vadd.f32 0.0, %v702
      %v704 = vpop.f32.mrf.mxu0
      %705 = vmatprep.mubr.bf16.mxu0 0
      %706 = vmatmul.mubr.bf16.gmra.mxu0 %v379
      %v707 = vpop.f32.mrf.mxu0
      %v708 = vadd.f32 0.0, %v707
      %v709 = vpop.f32.mrf.mxu0
      %v710 = vpop.f32.mrf.mxu0
      %v711 = vadd.f32 0.0, %v710
      %v712 = vpop.f32.mrf.mxu0
      %713 = vmatprep.mubr.bf16.mxu0 0
      %714 = vmatmul.mubr.bf16.gmra.mxu0 %v382
      %v715 = vpop.f32.mrf.mxu0
      %v716 = vadd.f32 0.0, %v715
      %v717 = vpop.f32.mrf.mxu0
      %v718 = vpop.f32.mrf.mxu0
      %v719 = vadd.f32 0.0, %v718
      %v720 = vpop.f32.mrf.mxu0
      %721 = vmatprep.mubr.bf16.mxu0 0
      %722 = vmatmul.mubr.bf16.gmra.mxu0 %v385
      %v723 = vpop.f32.mrf.mxu0
      %v724 = vadd.f32 0.0, %v723
      %v725 = vpop.f32.mrf.mxu0
      %v726 = vpop.f32.mrf.mxu0
      %v727 = vadd.f32 0.0, %v726
      %v728 = vpop.f32.mrf.mxu0
      %729 = vmatprep.mubr.bf16.mxu0 0
      %730 = vmatmul.mubr.bf16.gmra.mxu0 %v388
      %v731 = vpop.f32.mrf.mxu0
      %v732 = vadd.f32 0.0, %v731
      %v733 = vpop.f32.mrf.mxu0
      %v734 = vpop.f32.mrf.mxu0
      %v735 = vadd.f32 0.0, %v734
      %v736 = vpop.f32.mrf.mxu0
      %737 = vmatprep.mubr.bf16.mxu0 0
      %738 = vmatmul.mubr.bf16.gmra.mxu0 %v391
      %v739 = vpop.f32.mrf.mxu0
      %v740 = vadd.f32 0.0, %v739
      %v741 = vpop.f32.mrf.mxu0
      %v742 = vpop.f32.mrf.mxu0
      %v743 = vadd.f32 0.0, %v742
      %v744 = vpop.f32.mrf.mxu0
      %745 = vmatprep.mubr.bf16.mxu0 0
      %746 = vmatmul.mubr.bf16.gmra.mxu0 %v394
      %v747 = vpop.f32.mrf.mxu0
      %v748 = vadd.f32 0.0, %v747
      %v749 = vpop.f32.mrf.mxu0
      %v750 = vpop.f32.mrf.mxu0
      %v751 = vadd.f32 0.0, %v750
      %v752 = vpop.f32.mrf.mxu0
      %753 = vmatprep.mubr.bf16.mxu0 0
      %754 = vmatmul.mubr.bf16.gmra.mxu0 %v397
      %v755 = vpop.f32.mrf.mxu0
      %v756 = vadd.f32 0.0, %v755
      %v757 = vpop.f32.mrf.mxu0
      %v758 = vpop.f32.mrf.mxu0
      %v759 = vadd.f32 0.0, %v758
      %v760 = vpop.f32.mrf.mxu0
      %761 = vmatprep.mubr.bf16.mxu0 0
      %762 = vmatmul.mubr.bf16.gmra.mxu0 %v604
      %v763 = vpop.f32.mrf.mxu0
      %v764 = vadd.f32 0.0, %v763
      %v765 = vpop.f32.mrf.mxu0
      %v766 = vpop.f32.mrf.mxu0
      %v767 = vadd.f32 0.0, %v766
      %v768 = vpop.f32.mrf.mxu0
      %769 = vdwg.mxu0
      %v770 = vadd.f32 %v564, %v644
      %v771 = vadd.f32 %v565, %v647
      %v772 = vadd.f32 %v566, %v652
      %v773 = vadd.f32 %v567, %v655
      %v774 = vadd.f32 %v568, %v660
      %v775 = vadd.f32 %v569, %v663
      %v776 = vadd.f32 %v570, %v668
      %v777 = vadd.f32 %v571, %v671
      %v778 = vadd.f32 %v572, %v676
      %v779 = vadd.f32 %v573, %v679
      %v780 = vadd.f32 %v574, %v684
      %v781 = vadd.f32 %v575, %v687
      %v782 = vadd.f32 %v576, %v692
      %v783 = vadd.f32 %v577, %v695
      %v784 = vadd.f32 %v578, %v700
      %v785 = vadd.f32 %v579, %v703
      %v786 = vadd.f32 %v580, %v708
      %v787 = vadd.f32 %v581, %v711
      %v788 = vadd.f32 %v582, %v716
      %v789 = vadd.f32 %v583, %v719
      %v790 = vadd.f32 %v584, %v724
      %v791 = vadd.f32 %v585, %v727
      %v792 = vadd.f32 %v586, %v732
      %v793 = vadd.f32 %v587, %v735
      %v794 = vadd.f32 %v588, %v740
      %v795 = vadd.f32 %v589, %v743
      %v796 = vadd.f32 %v590, %v748
      %v797 = vadd.f32 %v591, %v751
      %v798 = vadd.f32 %v592, %v756
      %v799 = vadd.f32 %v593, %v759
      %v800 = vadd.f32 %v594, %v764
      %v801 = vadd.f32 %v595, %v767
      %s802 = scalar_lea.vmem %s1, 24
      %v803 = vld [vmem:[%s802] sm:$0xf]
      %v806 = vunpack.c.l.b16 %v267
      %v807 = vunpack.c.l.b16 %v268
      %v808 = vpack.c.b16 %v807, %v806
      %v810 = vsel %vm350, %v808, 0
      %v813 = vsel %vm399, %v803, 0
      %815 = vmatprep.subr.bf16.mxu0 0
      %816 = vmatpush1.bf16.msra.mxu0 0
      %817 = vmatprep.subr.bf16.mxu0 0
      %818 = vmatpush1.bf16.msra.mxu0 0
      %819 = vmatprep.subr.bf16.mxu0 0
      %820 = vmatpush1.bf16.msra.mxu0 0
      %821 = vmatprep.subr.bf16.mxu0 0
      %822 = vmatpush1.bf16.msra.mxu0 0
      %823 = vmatprep.subr.bf16.mxu0 0
      %824 = vmatpush1.bf16.msra.mxu0 0
      %825 = vmatprep.subr.bf16.mxu0 0
      %826 = vmatpush1.bf16.msra.mxu0 0
      %827 = vmatprep.subr.bf16.mxu0 0
      %828 = vmatpush1.bf16.msra.mxu0 0
      %829 = vmatprep.subr.bf16.mxu0 0
      %830 = vmatpush1.bf16.msra.mxu0 %v813
      %831 = vmatprep.subr.bf16.mxu0 0
      %832 = vmatpush2.bf16.msra.mxu0 0
      %833 = vmatprep.subr.bf16.mxu0 0
      %834 = vmatpush2.bf16.msra.mxu0 0
      %835 = vmatprep.subr.bf16.mxu0 0
      %836 = vmatpush2.bf16.msra.mxu0 0
      %837 = vmatprep.subr.bf16.mxu0 0
      %838 = vmatpush2.bf16.msra.mxu0 0
      %839 = vmatprep.subr.bf16.mxu0 0
      %840 = vmatpush2.bf16.msra.mxu0 0
      %841 = vmatprep.subr.bf16.mxu0 0
      %842 = vmatpush2.bf16.msra.mxu0 0
      %843 = vmatprep.subr.bf16.mxu0 0
      %844 = vmatpush2.bf16.msra.mxu0 0
      %845 = vmatprep.subr.bf16.mxu0 0
      %846 = vmatpush2.bf16.msra.mxu0 0
      %847 = vmatprep.mubr.bf16.mxu0 0
      %848 = vmatmul.mubr.bf16.gmra.mxu0 %v358
      %v849 = vpop.f32.mrf.mxu0
      %v850 = vadd.f32 0.0, %v849
      %v851 = vpop.f32.mrf.mxu0
      %v852 = vpop.f32.mrf.mxu0
      %v853 = vadd.f32 0.0, %v852
      %v854 = vpop.f32.mrf.mxu0
      %855 = vmatprep.mubr.bf16.mxu0 0
      %856 = vmatmul.mubr.bf16.gmra.mxu0 %v361
      %v857 = vpop.f32.mrf.mxu0
      %v858 = vadd.f32 0.0, %v857
      %v859 = vpop.f32.mrf.mxu0
      %v860 = vpop.f32.mrf.mxu0
      %v861 = vadd.f32 0.0, %v860
      %v862 = vpop.f32.mrf.mxu0
      %863 = vmatprep.mubr.bf16.mxu0 0
      %864 = vmatmul.mubr.bf16.gmra.mxu0 %v364
      %v865 = vpop.f32.mrf.mxu0
      %v866 = vadd.f32 0.0, %v865
      %v867 = vpop.f32.mrf.mxu0
      %v868 = vpop.f32.mrf.mxu0
      %v869 = vadd.f32 0.0, %v868
      %v870 = vpop.f32.mrf.mxu0
      %871 = vmatprep.mubr.bf16.mxu0 0
      %872 = vmatmul.mubr.bf16.gmra.mxu0 %v367
      %v873 = vpop.f32.mrf.mxu0
      %v874 = vadd.f32 0.0, %v873
      %v875 = vpop.f32.mrf.mxu0
      %v876 = vpop.f32.mrf.mxu0
      %v877 = vadd.f32 0.0, %v876
      %v878 = vpop.f32.mrf.mxu0
      %879 = vmatprep.mubr.bf16.mxu0 0
      %880 = vmatmul.mubr.bf16.gmra.mxu0 %v370
      %v881 = vpop.f32.mrf.mxu0
      %v882 = vadd.f32 0.0, %v881
      %v883 = vpop.f32.mrf.mxu0
      %v884 = vpop.f32.mrf.mxu0
      %v885 = vadd.f32 0.0, %v884
      %v886 = vpop.f32.mrf.mxu0
      %887 = vmatprep.mubr.bf16.mxu0 0
      %888 = vmatmul.mubr.bf16.gmra.mxu0 %v373
      %v889 = vpop.f32.mrf.mxu0
      %v890 = vadd.f32 0.0, %v889
      %v891 = vpop.f32.mrf.mxu0
      %v892 = vpop.f32.mrf.mxu0
      %v893 = vadd.f32 0.0, %v892
      %v894 = vpop.f32.mrf.mxu0
      %895 = vmatprep.mubr.bf16.mxu0 0
      %896 = vmatmul.mubr.bf16.gmra.mxu0 %v376
      %v897 = vpop.f32.mrf.mxu0
      %v898 = vadd.f32 0.0, %v897
      %v899 = vpop.f32.mrf.mxu0
      %v900 = vpop.f32.mrf.mxu0
      %v901 = vadd.f32 0.0, %v900
      %v902 = vpop.f32.mrf.mxu0
      %903 = vmatprep.mubr.bf16.mxu0 0
      %904 = vmatmul.mubr.bf16.gmra.mxu0 %v379
      %v905 = vpop.f32.mrf.mxu0
      %v906 = vadd.f32 0.0, %v905
      %v907 = vpop.f32.mrf.mxu0
      %v908 = vpop.f32.mrf.mxu0
      %v909 = vadd.f32 0.0, %v908
      %v910 = vpop.f32.mrf.mxu0
      %911 = vmatprep.mubr.bf16.mxu0 0
      %912 = vmatmul.mubr.bf16.gmra.mxu0 %v382
      %v913 = vpop.f32.mrf.mxu0
      %v914 = vadd.f32 0.0, %v913
      %v915 = vpop.f32.mrf.mxu0
      %v916 = vpop.f32.mrf.mxu0
      %v917 = vadd.f32 0.0, %v916
      %v918 = vpop.f32.mrf.mxu0
      %919 = vmatprep.mubr.bf16.mxu0 0
      %920 = vmatmul.mubr.bf16.gmra.mxu0 %v385
      %v921 = vpop.f32.mrf.mxu0
      %v922 = vadd.f32 0.0, %v921
      %v923 = vpop.f32.mrf.mxu0
      %v924 = vpop.f32.mrf.mxu0
      %v925 = vadd.f32 0.0, %v924
      %v926 = vpop.f32.mrf.mxu0
      %927 = vmatprep.mubr.bf16.mxu0 0
      %928 = vmatmul.mubr.bf16.gmra.mxu0 %v388
      %v929 = vpop.f32.mrf.mxu0
      %v930 = vadd.f32 0.0, %v929
      %v931 = vpop.f32.mrf.mxu0
      %v932 = vpop.f32.mrf.mxu0
      %v933 = vadd.f32 0.0, %v932
      %v934 = vpop.f32.mrf.mxu0
      %935 = vmatprep.mubr.bf16.mxu0 0
      %936 = vmatmul.mubr.bf16.gmra.mxu0 %v391
      %v937 = vpop.f32.mrf.mxu0
      %v938 = vadd.f32 0.0, %v937
      %v939 = vpop.f32.mrf.mxu0
      %v940 = vpop.f32.mrf.mxu0
      %v941 = vadd.f32 0.0, %v940
      %v942 = vpop.f32.mrf.mxu0
      %943 = vmatprep.mubr.bf16.mxu0 0
      %944 = vmatmul.mubr.bf16.gmra.mxu0 %v394
      %v945 = vpop.f32.mrf.mxu0
      %v946 = vadd.f32 0.0, %v945
      %v947 = vpop.f32.mrf.mxu0
      %v948 = vpop.f32.mrf.mxu0
      %v949 = vadd.f32 0.0, %v948
      %v950 = vpop.f32.mrf.mxu0
      %951 = vmatprep.mubr.bf16.mxu0 0
      %952 = vmatmul.mubr.bf16.gmra.mxu0 %v397
      %v953 = vpop.f32.mrf.mxu0
      %v954 = vadd.f32 0.0, %v953
      %v955 = vpop.f32.mrf.mxu0
      %v956 = vpop.f32.mrf.mxu0
      %v957 = vadd.f32 0.0, %v956
      %v958 = vpop.f32.mrf.mxu0
      %959 = vmatprep.mubr.bf16.mxu0 0
      %960 = vmatmul.mubr.bf16.gmra.mxu0 %v604
      %v961 = vpop.f32.mrf.mxu0
      %v962 = vadd.f32 0.0, %v961
      %v963 = vpop.f32.mrf.mxu0
      %v964 = vpop.f32.mrf.mxu0
      %v965 = vadd.f32 0.0, %v964
      %v966 = vpop.f32.mrf.mxu0
      %967 = vmatprep.mubr.bf16.mxu0 0
      %968 = vmatmul.mubr.bf16.gmra.mxu0 %v810
      %v969 = vpop.f32.mrf.mxu0
      %v970 = vadd.f32 0.0, %v969
      %v971 = vpop.f32.mrf.mxu0
      %v972 = vpop.f32.mrf.mxu0
      %v973 = vadd.f32 0.0, %v972
      %v974 = vpop.f32.mrf.mxu0
      %975 = vdwg.mxu0
      %v976 = vadd.f32 %v770, %v850
      %v977 = vadd.f32 %v771, %v853
      %v978 = vadd.f32 %v772, %v858
      %v979 = vadd.f32 %v773, %v861
      %v980 = vadd.f32 %v774, %v866
      %v981 = vadd.f32 %v775, %v869
      %v982 = vadd.f32 %v776, %v874
      %v983 = vadd.f32 %v777, %v877
      %v984 = vadd.f32 %v778, %v882
      %v985 = vadd.f32 %v779, %v885
      %v986 = vadd.f32 %v780, %v890
      %v987 = vadd.f32 %v781, %v893
      %v988 = vadd.f32 %v782, %v898
      %v989 = vadd.f32 %v783, %v901
      %v990 = vadd.f32 %v784, %v906
      %v991 = vadd.f32 %v785, %v909
      %v992 = vadd.f32 %v786, %v914
      %v993 = vadd.f32 %v787, %v917
      %v994 = vadd.f32 %v788, %v922
      %v995 = vadd.f32 %v789, %v925
      %v996 = vadd.f32 %v790, %v930
      %v997 = vadd.f32 %v791, %v933
      %v998 = vadd.f32 %v792, %v938
      %v999 = vadd.f32 %v793, %v941
      %v1000 = vadd.f32 %v794, %v946
      %v1001 = vadd.f32 %v795, %v949
      %v1002 = vadd.f32 %v796, %v954
      %v1003 = vadd.f32 %v797, %v957
      %v1004 = vadd.f32 %v798, %v962
      %v1005 = vadd.f32 %v799, %v965
      %v1006 = vadd.f32 %v800, %v970
      %v1007 = vadd.f32 %v801, %v973
      %v1008 = vld [vmem:[%s219] sm:$0xf]
      %v1009 = vld [vmem:[%s219 + $0x4] sm:$0xf]
      %v1010 = vld [vmem:[%s219 + $0x8] sm:$0x1]
      %v1011 = vld [vmem:[%s219 + $0xc] sm:$0xf]
      %v1012 = vld [vmem:[%s219 + $0x10] sm:$0xf]
      %v1013 = vld [vmem:[%s219 + $0x14] sm:$0x1]
      %v1014 = vld [vmem:[%s219 + $0x18] sm:$0xf]
      %v1015 = vld [vmem:[%s219 + $0x1c] sm:$0xf]
      %v1016 = vld [vmem:[%s219 + $0x20] sm:$0x1]
      %v1017 = vld [vmem:[%s219 + $0x24] sm:$0xf]
      %v1018 = vld [vmem:[%s219 + $0x28] sm:$0xf]
      %v1019 = vld [vmem:[%s219 + $0x2c] sm:$0x1]
      %v1020 = vld [vmem:[%s219 + $0x30] sm:$0xf]
      %v1021 = vld [vmem:[%s219 + $0x34] sm:$0xf]
      %v1022 = vld [vmem:[%s219 + $0x38] sm:$0x1]
      %v1023 = vld [vmem:[%s219 + $0x3c] sm:$0xf]
      %v1024 = vld [vmem:[%s219 + $0x40] sm:$0xf]
      %v1025 = vld [vmem:[%s219 + $0x44] sm:$0x1]
      %v1026 = vld [vmem:[%s219 + $0x48] sm:$0xf]
      %v1027 = vld [vmem:[%s219 + $0x4c] sm:$0xf]
      %v1028 = vld [vmem:[%s219 + $0x50] sm:$0x1]
      %v1029 = vld [vmem:[%s219 + $0x54] sm:$0xf]
      %v1030 = vld [vmem:[%s219 + $0x58] sm:$0xf]
      %v1031 = vld [vmem:[%s219 + $0x5c] sm:$0x1]
      %v1032 = vld [vmem:[%s219 + $0x60] sm:$0xf]
      %v1033 = vld [vmem:[%s219 + $0x64] sm:$0xf]
      %v1034 = vld [vmem:[%s219 + $0x68] sm:$0x1]
      %v1035 = vld [vmem:[%s219 + $0x6c] sm:$0xf]
      %v1036 = vld [vmem:[%s219 + $0x70] sm:$0xf]
      %v1037 = vld [vmem:[%s219 + $0x74] sm:$0x1]
      %v1038 = vld [vmem:[%s219 + $0x78] sm:$0xf]
      %v1039 = vld [vmem:[%s219 + $0x7c] sm:$0xf]
      %v1040 = vld [vmem:[%s219 + $0x80] sm:$0x1]
      %v1041 = vld [vmem:[%s219 + $0x84] sm:$0xf]
      %v1042 = vld [vmem:[%s219 + $0x88] sm:$0xf]
      %v1043 = vld [vmem:[%s219 + $0x8c] sm:$0x1]
      %v1044 = vld [vmem:[%s219 + $0x90] sm:$0xf]
      %v1045 = vld [vmem:[%s219 + $0x94] sm:$0xf]
      %v1046 = vld [vmem:[%s219 + $0x98] sm:$0x1]
      %v1047 = vld [vmem:[%s219 + $0x9c] sm:$0xf]
      %v1048 = vld [vmem:[%s219 + $0xa0] sm:$0xf]
      %v1049 = vld [vmem:[%s219 + $0xa4] sm:$0x1]
      %v1050 = vld [vmem:[%s219 + $0xa8] sm:$0xf]
      %v1051 = vld [vmem:[%s219 + $0xac] sm:$0xf]
      %v1052 = vld [vmem:[%s219 + $0xb0] sm:$0x1]
      %v1053 = vld [vmem:[%s219 + $0xb4] sm:$0xf]
      %v1054 = vld [vmem:[%s219 + $0xb8] sm:$0xf]
      %v1055 = vld [vmem:[%s219 + $0xbc] sm:$0x1]
      %v1056 = vld [vmem:[%s219 + $0xc0] sm:$0xf]
      %v1057 = vld [vmem:[%s219 + $0xc4] sm:$0xf]
      %v1058 = vld [vmem:[%s219 + $0xc8] sm:$0x1]
      %v1059 = vld [vmem:[%s219 + $0xcc] sm:$0xf]
      %v1060 = vld [vmem:[%s219 + $0xd0] sm:$0xf]
      %v1061 = vld [vmem:[%s219 + $0xd4] sm:$0x1]
      %vm1062 = vsmask.f32 3328
      %vm1063 = vsmask.f32 7440
      %vm1064 = vmor %vm1062, %vm1063
      %v1066 = vshrl.u32 %v1008, 16
      %v1068 = vrot.slane %v1066, 4
      %v1069 = vshll.u32 %v1008, 16
      %v1071 = vrot.slane %v1069, 5
      %v1072 = vor.u32 %v1068, %v1071
      %v1073 = vrot.slane %v1072, 4
      %v1075 = vshll.u32 %v1009, 16
      %v1077 = vrot.slane %v1075, 5
      %v1078 = vsel %vm1064, %v1073, %v1077
      %v1079 = vshrl.u32 %v1009, 16
      %v1081 = vrot.slane %v1079, 4
      %v1082 = vor.u32 %v1081, %v1077
      %v1083 = vrot.slane %v1082, 4
      %v1085 = vshll.u32 %v1010, 16
      %v1087 = vrot.slane %v1085, 5
      %v1088 = vsel %vm1064, %v1083, %v1087
      %v1090 = vshrl.u32 %v1011, 16
      %v1092 = vrot.slane %v1090, 4
      %v1093 = vshll.u32 %v1011, 16
      %v1095 = vrot.slane %v1093, 5
      %v1096 = vor.u32 %v1092, %v1095
      %v1097 = vrot.slane %v1096, 4
      %v1099 = vshll.u32 %v1012, 16
      %v1101 = vrot.slane %v1099, 5
      %v1102 = vsel %vm1064, %v1097, %v1101
      %v1103 = vshrl.u32 %v1012, 16
      %v1105 = vrot.slane %v1103, 4
      %v1106 = vor.u32 %v1105, %v1101
      %v1107 = vrot.slane %v1106, 4
      %v1109 = vshll.u32 %v1013, 16
      %v1111 = vrot.slane %v1109, 5
      %v1112 = vsel %vm1064, %v1107, %v1111
      %v1114 = vshrl.u32 %v1014, 16
      %v1116 = vrot.slane %v1114, 4
      %v1117 = vshll.u32 %v1014, 16
      %v1119 = vrot.slane %v1117, 5
      %v1120 = vor.u32 %v1116, %v1119
      %v1121 = vrot.slane %v1120, 4
      %v1123 = vshll.u32 %v1015, 16
      %v1125 = vrot.slane %v1123, 5
      %v1126 = vsel %vm1064, %v1121, %v1125
      %v1127 = vshrl.u32 %v1015, 16
      %v1129 = vrot.slane %v1127, 4
      %v1130 = vor.u32 %v1129, %v1125
      %v1131 = vrot.slane %v1130, 4
      %v1133 = vshll.u32 %v1016, 16
      %v1135 = vrot.slane %v1133, 5
      %v1136 = vsel %vm1064, %v1131, %v1135
      %v1138 = vshrl.u32 %v1017, 16
      %v1140 = vrot.slane %v1138, 4
      %v1141 = vshll.u32 %v1017, 16
      %v1143 = vrot.slane %v1141, 5
      %v1144 = vor.u32 %v1140, %v1143
      %v1145 = vrot.slane %v1144, 4
      %v1147 = vshll.u32 %v1018, 16
      %v1149 = vrot.slane %v1147, 5
      %v1150 = vsel %vm1064, %v1145, %v1149
      %v1151 = vshrl.u32 %v1018, 16
      %v1153 = vrot.slane %v1151, 4
      %v1154 = vor.u32 %v1153, %v1149
      %v1155 = vrot.slane %v1154, 4
      %v1157 = vshll.u32 %v1019, 16
      %v1159 = vrot.slane %v1157, 5
      %v1160 = vsel %vm1064, %v1155, %v1159
      %v1162 = vshrl.u32 %v1020, 16
      %v1164 = vrot.slane %v1162, 4
      %v1165 = vshll.u32 %v1020, 16
      %v1167 = vrot.slane %v1165, 5
      %v1168 = vor.u32 %v1164, %v1167
      %v1169 = vrot.slane %v1168, 4
      %v1171 = vshll.u32 %v1021, 16
      %v1173 = vrot.slane %v1171, 5
      %v1174 = vsel %vm1064, %v1169, %v1173
      %v1175 = vshrl.u32 %v1021, 16
      %v1177 = vrot.slane %v1175, 4
      %v1178 = vor.u32 %v1177, %v1173
      %v1179 = vrot.slane %v1178, 4
      %v1181 = vshll.u32 %v1022, 16
      %v1183 = vrot.slane %v1181, 5
      %v1184 = vsel %vm1064, %v1179, %v1183
      %v1186 = vshrl.u32 %v1023, 16
      %v1188 = vrot.slane %v1186, 4
      %v1189 = vshll.u32 %v1023, 16
      %v1191 = vrot.slane %v1189, 5
      %v1192 = vor.u32 %v1188, %v1191
      %v1193 = vrot.slane %v1192, 4
      %v1195 = vshll.u32 %v1024, 16
      %v1197 = vrot.slane %v1195, 5
      %v1198 = vsel %vm1064, %v1193, %v1197
      %v1199 = vshrl.u32 %v1024, 16
      %v1201 = vrot.slane %v1199, 4
      %v1202 = vor.u32 %v1201, %v1197
      %v1203 = vrot.slane %v1202, 4
      %v1205 = vshll.u32 %v1025, 16
      %v1207 = vrot.slane %v1205, 5
      %v1208 = vsel %vm1064, %v1203, %v1207
      %v1210 = vshrl.u32 %v1026, 16
      %v1212 = vrot.slane %v1210, 4
      %v1213 = vshll.u32 %v1026, 16
      %v1215 = vrot.slane %v1213, 5
      %v1216 = vor.u32 %v1212, %v1215
      %v1217 = vrot.slane %v1216, 4
      %v1219 = vshll.u32 %v1027, 16
      %v1221 = vrot.slane %v1219, 5
      %v1222 = vsel %vm1064, %v1217, %v1221
      %v1223 = vshrl.u32 %v1027, 16
      %v1225 = vrot.slane %v1223, 4
      %v1226 = vor.u32 %v1225, %v1221
      %v1227 = vrot.slane %v1226, 4
      %v1229 = vshll.u32 %v1028, 16
      %v1231 = vrot.slane %v1229, 5
      %v1232 = vsel %vm1064, %v1227, %v1231
      %v1234 = vshrl.u32 %v1029, 16
      %v1236 = vrot.slane %v1234, 4
      %v1237 = vshll.u32 %v1029, 16
      %v1239 = vrot.slane %v1237, 5
      %v1240 = vor.u32 %v1236, %v1239
      %v1241 = vrot.slane %v1240, 4
      %v1243 = vshll.u32 %v1030, 16
      %v1245 = vrot.slane %v1243, 5
      %v1246 = vsel %vm1064, %v1241, %v1245
      %v1247 = vshrl.u32 %v1030, 16
      %v1249 = vrot.slane %v1247, 4
      %v1250 = vor.u32 %v1249, %v1245
      %v1251 = vrot.slane %v1250, 4
      %v1253 = vshll.u32 %v1031, 16
      %v1255 = vrot.slane %v1253, 5
      %v1256 = vsel %vm1064, %v1251, %v1255
      %v1258 = vshrl.u32 %v1032, 16
      %v1260 = vrot.slane %v1258, 4
      %v1261 = vshll.u32 %v1032, 16
      %v1263 = vrot.slane %v1261, 5
      %v1264 = vor.u32 %v1260, %v1263
      %v1265 = vrot.slane %v1264, 4
      %v1267 = vshll.u32 %v1033, 16
      %v1269 = vrot.slane %v1267, 5
      %v1270 = vsel %vm1064, %v1265, %v1269
      %v1271 = vshrl.u32 %v1033, 16
      %v1273 = vrot.slane %v1271, 4
      %v1274 = vor.u32 %v1273, %v1269
      %v1275 = vrot.slane %v1274, 4
      %v1277 = vshll.u32 %v1034, 16
      %v1279 = vrot.slane %v1277, 5
      %v1280 = vsel %vm1064, %v1275, %v1279
      %v1282 = vshrl.u32 %v1035, 16
      %v1284 = vrot.slane %v1282, 4
      %v1285 = vshll.u32 %v1035, 16
      %v1287 = vrot.slane %v1285, 5
      %v1288 = vor.u32 %v1284, %v1287
      %v1289 = vrot.slane %v1288, 4
      %v1291 = vshll.u32 %v1036, 16
      %v1293 = vrot.slane %v1291, 5
      %v1294 = vsel %vm1064, %v1289, %v1293
      %v1295 = vshrl.u32 %v1036, 16
      %v1297 = vrot.slane %v1295, 4
      %v1298 = vor.u32 %v1297, %v1293
      %v1299 = vrot.slane %v1298, 4
      %v1301 = vshll.u32 %v1037, 16
      %v1303 = vrot.slane %v1301, 5
      %v1304 = vsel %vm1064, %v1299, %v1303
      %v1306 = vshrl.u32 %v1038, 16
      %v1308 = vrot.slane %v1306, 4
      %v1309 = vshll.u32 %v1038, 16
      %v1311 = vrot.slane %v1309, 5
      %v1312 = vor.u32 %v1308, %v1311
      %v1313 = vrot.slane %v1312, 4
      %v1315 = vshll.u32 %v1039, 16
      %v1317 = vrot.slane %v1315, 5
      %v1318 = vsel %vm1064, %v1313, %v1317
      %v1319 = vshrl.u32 %v1039, 16
      %v1321 = vrot.slane %v1319, 4
      %v1322 = vor.u32 %v1321, %v1317
      %v1323 = vrot.slane %v1322, 4
      %v1325 = vshll.u32 %v1040, 16
      %v1327 = vrot.slane %v1325, 5
      %v1328 = vsel %vm1064, %v1323, %v1327
      %v1330 = vshrl.u32 %v1041, 16
      %v1332 = vrot.slane %v1330, 4
      %v1333 = vshll.u32 %v1041, 16
      %v1335 = vrot.slane %v1333, 5
      %v1336 = vor.u32 %v1332, %v1335
      %v1337 = vrot.slane %v1336, 4
      %v1339 = vshll.u32 %v1042, 16
      %v1341 = vrot.slane %v1339, 5
      %v1342 = vsel %vm1064, %v1337, %v1341
      %v1343 = vshrl.u32 %v1042, 16
      %v1345 = vrot.slane %v1343, 4
      %v1346 = vor.u32 %v1345, %v1341
      %v1347 = vrot.slane %v1346, 4
      %v1349 = vshll.u32 %v1043, 16
      %v1351 = vrot.slane %v1349, 5
      %v1352 = vsel %vm1064, %v1347, %v1351
      %v1354 = vshrl.u32 %v1044, 16
      %v1356 = vrot.slane %v1354, 4
      %v1357 = vshll.u32 %v1044, 16
      %v1359 = vrot.slane %v1357, 5
      %v1360 = vor.u32 %v1356, %v1359
      %v1361 = vrot.slane %v1360, 4
      %v1363 = vshll.u32 %v1045, 16
      %v1365 = vrot.slane %v1363, 5
      %v1366 = vsel %vm1064, %v1361, %v1365
      %v1367 = vshrl.u32 %v1045, 16
      %v1369 = vrot.slane %v1367, 4
      %v1370 = vor.u32 %v1369, %v1365
      %v1371 = vrot.slane %v1370, 4
      %v1373 = vshll.u32 %v1046, 16
      %v1375 = vrot.slane %v1373, 5
      %v1376 = vsel %vm1064, %v1371, %v1375
      %v1378 = vshrl.u32 %v1047, 16
      %v1380 = vrot.slane %v1378, 4
      %v1381 = vshll.u32 %v1047, 16
      %v1383 = vrot.slane %v1381, 5
      %v1384 = vor.u32 %v1380, %v1383
      %v1385 = vrot.slane %v1384, 4
      %v1387 = vshll.u32 %v1048, 16
      %v1389 = vrot.slane %v1387, 5
      %v1390 = vsel %vm1064, %v1385, %v1389
      %v1391 = vshrl.u32 %v1048, 16
      %v1393 = vrot.slane %v1391, 4
      %v1394 = vor.u32 %v1393, %v1389
      %v1395 = vrot.slane %v1394, 4
      %v1397 = vshll.u32 %v1049, 16
      %v1399 = vrot.slane %v1397, 5
      %v1400 = vsel %vm1064, %v1395, %v1399
      %v1402 = vshrl.u32 %v1050, 16
      %v1404 = vrot.slane %v1402, 4
      %v1405 = vshll.u32 %v1050, 16
      %v1407 = vrot.slane %v1405, 5
      %v1408 = vor.u32 %v1404, %v1407
      %v1409 = vrot.slane %v1408, 4
      %v1411 = vshll.u32 %v1051, 16
      %v1413 = vrot.slane %v1411, 5
      %v1414 = vsel %vm1064, %v1409, %v1413
      %v1415 = vshrl.u32 %v1051, 16
      %v1417 = vrot.slane %v1415, 4
      %v1418 = vor.u32 %v1417, %v1413
      %v1419 = vrot.slane %v1418, 4
      %v1421 = vshll.u32 %v1052, 16
      %v1423 = vrot.slane %v1421, 5
      %v1424 = vsel %vm1064, %v1419, %v1423
      %v1426 = vshrl.u32 %v1053, 16
      %v1428 = vrot.slane %v1426, 4
      %v1429 = vshll.u32 %v1053, 16
      %v1431 = vrot.slane %v1429, 5
      %v1432 = vor.u32 %v1428, %v1431
      %v1433 = vrot.slane %v1432, 4
      %v1435 = vshll.u32 %v1054, 16
      %v1437 = vrot.slane %v1435, 5
      %v1438 = vsel %vm1064, %v1433, %v1437
      %v1439 = vshrl.u32 %v1054, 16
      %v1441 = vrot.slane %v1439, 4
      %v1442 = vor.u32 %v1441, %v1437
      %v1443 = vrot.slane %v1442, 4
      %v1445 = vshll.u32 %v1055, 16
      %v1447 = vrot.slane %v1445, 5
      %v1448 = vsel %vm1064, %v1443, %v1447
      %s1449 = scalar_lea.vmem %s1, 4
      %v1450 = vld [vmem:[%s1449] sm:$0xf]
      %v1451 = vunpack.c.l.b16 %v1078
      %v1452 = vunpack.c.l.b16 %v1088
      %v1453 = vunpack.c.l.b16 %v1102
      %v1454 = vunpack.c.l.b16 %v1112
      %v1455 = vunpack.c.l.b16 %v1126
      %v1456 = vunpack.c.l.b16 %v1136
      %v1457 = vunpack.c.l.b16 %v1150
      %v1458 = vunpack.c.l.b16 %v1160
      %v1459 = vunpack.c.l.b16 %v1174
      %v1460 = vunpack.c.l.b16 %v1184
      %v1461 = vunpack.c.l.b16 %v1198
      %v1462 = vunpack.c.l.b16 %v1208
      %v1463 = vunpack.c.l.b16 %v1222
      %v1464 = vunpack.c.l.b16 %v1232
      %v1465 = vunpack.c.l.b16 %v1246
      %v1466 = vunpack.c.l.b16 %v1256
      %v1467 = vunpack.c.l.b16 %v1270
      %v1468 = vunpack.c.l.b16 %v1280
      %v1469 = vunpack.c.l.b16 %v1294
      %v1470 = vunpack.c.l.b16 %v1304
      %v1471 = vunpack.c.l.b16 %v1318
      %v1472 = vunpack.c.l.b16 %v1328
      %v1473 = vunpack.c.l.b16 %v1342
      %v1474 = vunpack.c.l.b16 %v1352
      %v1475 = vunpack.c.l.b16 %v1366
      %v1476 = vunpack.c.l.b16 %v1376
      %v1477 = vunpack.c.l.b16 %v1390
      %v1478 = vunpack.c.l.b16 %v1400
      %v1479 = vunpack.c.l.b16 %v1414
      %v1480 = vunpack.c.l.b16 %v1424
      %v1481 = vunpack.c.l.b16 %v1438
      %v1482 = vunpack.c.l.b16 %v1448
      %v1483 = vpack.c.b16 %v1452, %v1451
      %v1484 = vpack.c.b16 %v1454, %v1453
      %v1485 = vpack.c.b16 %v1456, %v1455
      %v1486 = vpack.c.b16 %v1458, %v1457
      %v1487 = vpack.c.b16 %v1460, %v1459
      %v1488 = vpack.c.b16 %v1462, %v1461
      %v1489 = vpack.c.b16 %v1464, %v1463
      %v1490 = vpack.c.b16 %v1466, %v1465
      %v1491 = vpack.c.b16 %v1468, %v1467
      %v1492 = vpack.c.b16 %v1470, %v1469
      %v1493 = vpack.c.b16 %v1472, %v1471
      %v1494 = vpack.c.b16 %v1474, %v1473
      %v1495 = vpack.c.b16 %v1476, %v1475
      %v1496 = vpack.c.b16 %v1478, %v1477
      %v1497 = vpack.c.b16 %v1480, %v1479
      %v1498 = vpack.c.b16 %v1482, %v1481
      %v1500 = vsel %vm350, %v1483, 0
      %v1503 = vsel %vm350, %v1484, 0
      %v1506 = vsel %vm350, %v1485, 0
      %v1509 = vsel %vm350, %v1486, 0
      %v1512 = vsel %vm350, %v1487, 0
      %v1515 = vsel %vm350, %v1488, 0
      %v1518 = vsel %vm350, %v1489, 0
      %v1521 = vsel %vm350, %v1490, 0
      %v1524 = vsel %vm350, %v1491, 0
      %v1527 = vsel %vm350, %v1492, 0
      %v1530 = vsel %vm350, %v1493, 0
      %v1533 = vsel %vm350, %v1494, 0
      %v1536 = vsel %vm350, %v1495, 0
      %v1539 = vsel %vm350, %v1496, 0
      %v1542 = vsel %vm350, %v1497, 0
      %v1545 = vsel %vm350, %v1498, 0
      %v1548 = vsel %vm399, %v1450, 0
      %1550 = vmatprep.subr.bf16.mxu0 0
      %1551 = vmatpush1.bf16.msra.mxu0 0
      %1552 = vmatprep.subr.bf16.mxu0 0
      %1553 = vmatpush1.bf16.msra.mxu0 0
      %1554 = vmatprep.subr.bf16.mxu0 0
      %1555 = vmatpush1.bf16.msra.mxu0 0
      %1556 = vmatprep.subr.bf16.mxu0 0
      %1557 = vmatpush1.bf16.msra.mxu0 0
      %1558 = vmatprep.subr.bf16.mxu0 0
      %1559 = vmatpush1.bf16.msra.mxu0 0
      %1560 = vmatprep.subr.bf16.mxu0 0
      %1561 = vmatpush1.bf16.msra.mxu0 0
      %1562 = vmatprep.subr.bf16.mxu0 0
      %1563 = vmatpush1.bf16.msra.mxu0 0
      %1564 = vmatprep.subr.bf16.mxu0 0
      %1565 = vmatpush1.bf16.msra.mxu0 %v1548
      %1566 = vmatprep.subr.bf16.mxu0 0
      %1567 = vmatpush2.bf16.msra.mxu0 0
      %1568 = vmatprep.subr.bf16.mxu0 0
      %1569 = vmatpush2.bf16.msra.mxu0 0
      %1570 = vmatprep.subr.bf16.mxu0 0
      %1571 = vmatpush2.bf16.msra.mxu0 0
      %1572 = vmatprep.subr.bf16.mxu0 0
      %1573 = vmatpush2.bf16.msra.mxu0 0
      %1574 = vmatprep.subr.bf16.mxu0 0
      %1575 = vmatpush2.bf16.msra.mxu0 0
      %1576 = vmatprep.subr.bf16.mxu0 0
      %1577 = vmatpush2.bf16.msra.mxu0 0
      %1578 = vmatprep.subr.bf16.mxu0 0
      %1579 = vmatpush2.bf16.msra.mxu0 0
      %1580 = vmatprep.subr.bf16.mxu0 0
      %1581 = vmatpush2.bf16.msra.mxu0 0
      %1582 = vmatprep.mubr.bf16.mxu0 0
      %1583 = vmatmul.mubr.bf16.gmra.mxu0 %v1500
      %v1584 = vpop.f32.mrf.mxu0
      %v1585 = vadd.f32 0.0, %v1584
      %v1586 = vpop.f32.mrf.mxu0
      %v1587 = vpop.f32.mrf.mxu0
      %v1588 = vadd.f32 0.0, %v1587
      %v1589 = vpop.f32.mrf.mxu0
      %1590 = vmatprep.mubr.bf16.mxu0 0
      %1591 = vmatmul.mubr.bf16.gmra.mxu0 %v1503
      %v1592 = vpop.f32.mrf.mxu0
      %v1593 = vadd.f32 0.0, %v1592
      %v1594 = vpop.f32.mrf.mxu0
      %v1595 = vpop.f32.mrf.mxu0
      %v1596 = vadd.f32 0.0, %v1595
      %v1597 = vpop.f32.mrf.mxu0
      %1598 = vmatprep.mubr.bf16.mxu0 0
      %1599 = vmatmul.mubr.bf16.gmra.mxu0 %v1506
      %v1600 = vpop.f32.mrf.mxu0
      %v1601 = vadd.f32 0.0, %v1600
      %v1602 = vpop.f32.mrf.mxu0
      %v1603 = vpop.f32.mrf.mxu0
      %v1604 = vadd.f32 0.0, %v1603
      %v1605 = vpop.f32.mrf.mxu0
      %1606 = vmatprep.mubr.bf16.mxu0 0
      %1607 = vmatmul.mubr.bf16.gmra.mxu0 %v1509
      %v1608 = vpop.f32.mrf.mxu0
      %v1609 = vadd.f32 0.0, %v1608
      %v1610 = vpop.f32.mrf.mxu0
      %v1611 = vpop.f32.mrf.mxu0
      %v1612 = vadd.f32 0.0, %v1611
      %v1613 = vpop.f32.mrf.mxu0
      %1614 = vmatprep.mubr.bf16.mxu0 0
      %1615 = vmatmul.mubr.bf16.gmra.mxu0 %v1512
      %v1616 = vpop.f32.mrf.mxu0
      %v1617 = vadd.f32 0.0, %v1616
      %v1618 = vpop.f32.mrf.mxu0
      %v1619 = vpop.f32.mrf.mxu0
      %v1620 = vadd.f32 0.0, %v1619
      %v1621 = vpop.f32.mrf.mxu0
      %1622 = vmatprep.mubr.bf16.mxu0 0
      %1623 = vmatmul.mubr.bf16.gmra.mxu0 %v1515
      %v1624 = vpop.f32.mrf.mxu0
      %v1625 = vadd.f32 0.0, %v1624
      %v1626 = vpop.f32.mrf.mxu0
      %v1627 = vpop.f32.mrf.mxu0
      %v1628 = vadd.f32 0.0, %v1627
      %v1629 = vpop.f32.mrf.mxu0
      %1630 = vmatprep.mubr.bf16.mxu0 0
      %1631 = vmatmul.mubr.bf16.gmra.mxu0 %v1518
      %v1632 = vpop.f32.mrf.mxu0
      %v1633 = vadd.f32 0.0, %v1632
      %v1634 = vpop.f32.mrf.mxu0
      %v1635 = vpop.f32.mrf.mxu0
      %v1636 = vadd.f32 0.0, %v1635
      %v1637 = vpop.f32.mrf.mxu0
      %1638 = vmatprep.mubr.bf16.mxu0 0
      %1639 = vmatmul.mubr.bf16.gmra.mxu0 %v1521
      %v1640 = vpop.f32.mrf.mxu0
      %v1641 = vadd.f32 0.0, %v1640
      %v1642 = vpop.f32.mrf.mxu0
      %v1643 = vpop.f32.mrf.mxu0
      %v1644 = vadd.f32 0.0, %v1643
      %v1645 = vpop.f32.mrf.mxu0
      %1646 = vmatprep.mubr.bf16.mxu0 0
      %1647 = vmatmul.mubr.bf16.gmra.mxu0 %v1524
      %v1648 = vpop.f32.mrf.mxu0
      %v1649 = vadd.f32 0.0, %v1648
      %v1650 = vpop.f32.mrf.mxu0
      %v1651 = vpop.f32.mrf.mxu0
      %v1652 = vadd.f32 0.0, %v1651
      %v1653 = vpop.f32.mrf.mxu0
      %1654 = vmatprep.mubr.bf16.mxu0 0
      %1655 = vmatmul.mubr.bf16.gmra.mxu0 %v1527
      %v1656 = vpop.f32.mrf.mxu0
      %v1657 = vadd.f32 0.0, %v1656
      %v1658 = vpop.f32.mrf.mxu0
      %v1659 = vpop.f32.mrf.mxu0
      %v1660 = vadd.f32 0.0, %v1659
      %v1661 = vpop.f32.mrf.mxu0
      %1662 = vmatprep.mubr.bf16.mxu0 0
      %1663 = vmatmul.mubr.bf16.gmra.mxu0 %v1530
      %v1664 = vpop.f32.mrf.mxu0
      %v1665 = vadd.f32 0.0, %v1664
      %v1666 = vpop.f32.mrf.mxu0
      %v1667 = vpop.f32.mrf.mxu0
      %v1668 = vadd.f32 0.0, %v1667
      %v1669 = vpop.f32.mrf.mxu0
      %1670 = vmatprep.mubr.bf16.mxu0 0
      %1671 = vmatmul.mubr.bf16.gmra.mxu0 %v1533
      %v1672 = vpop.f32.mrf.mxu0
      %v1673 = vadd.f32 0.0, %v1672
      %v1674 = vpop.f32.mrf.mxu0
      %v1675 = vpop.f32.mrf.mxu0
      %v1676 = vadd.f32 0.0, %v1675
      %v1677 = vpop.f32.mrf.mxu0
      %1678 = vmatprep.mubr.bf16.mxu0 0
      %1679 = vmatmul.mubr.bf16.gmra.mxu0 %v1536
      %v1680 = vpop.f32.mrf.mxu0
      %v1681 = vadd.f32 0.0, %v1680
      %v1682 = vpop.f32.mrf.mxu0
      %v1683 = vpop.f32.mrf.mxu0
      %v1684 = vadd.f32 0.0, %v1683
      %v1685 = vpop.f32.mrf.mxu0
      %1686 = vmatprep.mubr.bf16.mxu0 0
      %1687 = vmatmul.mubr.bf16.gmra.mxu0 %v1539
      %v1688 = vpop.f32.mrf.mxu0
      %v1689 = vadd.f32 0.0, %v1688
      %v1690 = vpop.f32.mrf.mxu0
      %v1691 = vpop.f32.mrf.mxu0
      %v1692 = vadd.f32 0.0, %v1691
      %v1693 = vpop.f32.mrf.mxu0
      %1694 = vmatprep.mubr.bf16.mxu0 0
      %1695 = vmatmul.mubr.bf16.gmra.mxu0 %v1542
      %v1696 = vpop.f32.mrf.mxu0
      %v1697 = vadd.f32 0.0, %v1696
      %v1698 = vpop.f32.mrf.mxu0
      %v1699 = vpop.f32.mrf.mxu0
      %v1700 = vadd.f32 0.0, %v1699
      %v1701 = vpop.f32.mrf.mxu0
      %1702 = vmatprep.mubr.bf16.mxu0 0
      %1703 = vmatmul.mubr.bf16.gmra.mxu0 %v1545
      %v1704 = vpop.f32.mrf.mxu0
      %v1705 = vadd.f32 0.0, %v1704
      %v1706 = vpop.f32.mrf.mxu0
      %v1707 = vpop.f32.mrf.mxu0
      %v1708 = vadd.f32 0.0, %v1707
      %v1709 = vpop.f32.mrf.mxu0
      %1710 = vdwg.mxu0
      %v1711 = vadd.f32 %v976, %v1585
      %v1712 = vadd.f32 %v977, %v1588
      %v1713 = vadd.f32 %v978, %v1593
      %v1714 = vadd.f32 %v979, %v1596
      %v1715 = vadd.f32 %v980, %v1601
      %v1716 = vadd.f32 %v981, %v1604
      %v1717 = vadd.f32 %v982, %v1609
      %v1718 = vadd.f32 %v983, %v1612
      %v1719 = vadd.f32 %v984, %v1617
      %v1720 = vadd.f32 %v985, %v1620
      %v1721 = vadd.f32 %v986, %v1625
      %v1722 = vadd.f32 %v987, %v1628
      %v1723 = vadd.f32 %v988, %v1633
      %v1724 = vadd.f32 %v989, %v1636
      %v1725 = vadd.f32 %v990, %v1641
      %v1726 = vadd.f32 %v991, %v1644
      %v1727 = vadd.f32 %v992, %v1649
      %v1728 = vadd.f32 %v993, %v1652
      %v1729 = vadd.f32 %v994, %v1657
      %v1730 = vadd.f32 %v995, %v1660
      %v1731 = vadd.f32 %v996, %v1665
      %v1732 = vadd.f32 %v997, %v1668
      %v1733 = vadd.f32 %v998, %v1673
      %v1734 = vadd.f32 %v999, %v1676
      %v1735 = vadd.f32 %v1000, %v1681
      %v1736 = vadd.f32 %v1001, %v1684
      %v1737 = vadd.f32 %v1002, %v1689
      %v1738 = vadd.f32 %v1003, %v1692
      %v1739 = vadd.f32 %v1004, %v1697
      %v1740 = vadd.f32 %v1005, %v1700
      %v1741 = vadd.f32 %v1006, %v1705
      %v1742 = vadd.f32 %v1007, %v1708
      %v1744 = vshrl.u32 %v1056, 16
      %v1746 = vrot.slane %v1744, 4
      %v1747 = vshll.u32 %v1056, 16
      %v1749 = vrot.slane %v1747, 5
      %v1750 = vor.u32 %v1746, %v1749
      %v1751 = vrot.slane %v1750, 4
      %v1753 = vshll.u32 %v1057, 16
      %v1755 = vrot.slane %v1753, 5
      %v1756 = vsel %vm1064, %v1751, %v1755
      %v1757 = vshrl.u32 %v1057, 16
      %v1759 = vrot.slane %v1757, 4
      %v1760 = vor.u32 %v1759, %v1755
      %v1761 = vrot.slane %v1760, 4
      %v1763 = vshll.u32 %v1058, 16
      %v1765 = vrot.slane %v1763, 5
      %v1766 = vsel %vm1064, %v1761, %v1765
      %s1767 = scalar_lea.vmem %s1, 16
      %v1768 = vld [vmem:[%s1767] sm:$0xf]
      %v1769 = vunpack.c.l.b16 %v1756
      %v1770 = vunpack.c.l.b16 %v1766
      %v1771 = vpack.c.b16 %v1770, %v1769
      %v1773 = vsel %vm350, %v1771, 0
      %v1776 = vsel %vm399, %v1768, 0
      %1778 = vmatprep.subr.bf16.mxu0 0
      %1779 = vmatpush1.bf16.msra.mxu0 0
      %1780 = vmatprep.subr.bf16.mxu0 0
      %1781 = vmatpush1.bf16.msra.mxu0 0
      %1782 = vmatprep.subr.bf16.mxu0 0
      %1783 = vmatpush1.bf16.msra.mxu0 0
      %1784 = vmatprep.subr.bf16.mxu0 0
      %1785 = vmatpush1.bf16.msra.mxu0 0
      %1786 = vmatprep.subr.bf16.mxu0 0
      %1787 = vmatpush1.bf16.msra.mxu0 0
      %1788 = vmatprep.subr.bf16.mxu0 0
      %1789 = vmatpush1.bf16.msra.mxu0 0
      %1790 = vmatprep.subr.bf16.mxu0 0
      %1791 = vmatpush1.bf16.msra.mxu0 0
      %1792 = vmatprep.subr.bf16.mxu0 0
      %1793 = vmatpush1.bf16.msra.mxu0 %v1776
      %1794 = vmatprep.subr.bf16.mxu0 0
      %1795 = vmatpush2.bf16.msra.mxu0 0
      %1796 = vmatprep.subr.bf16.mxu0 0
      %1797 = vmatpush2.bf16.msra.mxu0 0
      %1798 = vmatprep.subr.bf16.mxu0 0
      %1799 = vmatpush2.bf16.msra.mxu0 0
      %1800 = vmatprep.subr.bf16.mxu0 0
      %1801 = vmatpush2.bf16.msra.mxu0 0
      %1802 = vmatprep.subr.bf16.mxu0 0
      %1803 = vmatpush2.bf16.msra.mxu0 0
      %1804 = vmatprep.subr.bf16.mxu0 0
      %1805 = vmatpush2.bf16.msra.mxu0 0
      %1806 = vmatprep.subr.bf16.mxu0 0
      %1807 = vmatpush2.bf16.msra.mxu0 0
      %1808 = vmatprep.subr.bf16.mxu0 0
      %1809 = vmatpush2.bf16.msra.mxu0 0
      %1810 = vmatprep.mubr.bf16.mxu0 0
      %1811 = vmatmul.mubr.bf16.gmra.mxu0 %v1503
      %v1812 = vpop.f32.mrf.mxu0
      %v1813 = vadd.f32 0.0, %v1812
      %v1814 = vpop.f32.mrf.mxu0
      %v1815 = vpop.f32.mrf.mxu0
      %v1816 = vadd.f32 0.0, %v1815
      %v1817 = vpop.f32.mrf.mxu0
      %1818 = vmatprep.mubr.bf16.mxu0 0
      %1819 = vmatmul.mubr.bf16.gmra.mxu0 %v1506
      %v1820 = vpop.f32.mrf.mxu0
      %v1821 = vadd.f32 0.0, %v1820
      %v1822 = vpop.f32.mrf.mxu0
      %v1823 = vpop.f32.mrf.mxu0
      %v1824 = vadd.f32 0.0, %v1823
      %v1825 = vpop.f32.mrf.mxu0
      %1826 = vmatprep.mubr.bf16.mxu0 0
      %1827 = vmatmul.mubr.bf16.gmra.mxu0 %v1509
      %v1828 = vpop.f32.mrf.mxu0
      %v1829 = vadd.f32 0.0, %v1828
      %v1830 = vpop.f32.mrf.mxu0
      %v1831 = vpop.f32.mrf.mxu0
      %v1832 = vadd.f32 0.0, %v1831
      %v1833 = vpop.f32.mrf.mxu0
      %1834 = vmatprep.mubr.bf16.mxu0 0
      %1835 = vmatmul.mubr.bf16.gmra.mxu0 %v1512
      %v1836 = vpop.f32.mrf.mxu0
      %v1837 = vadd.f32 0.0, %v1836
      %v1838 = vpop.f32.mrf.mxu0
      %v1839 = vpop.f32.mrf.mxu0
      %v1840 = vadd.f32 0.0, %v1839
      %v1841 = vpop.f32.mrf.mxu0
      %1842 = vmatprep.mubr.bf16.mxu0 0
      %1843 = vmatmul.mubr.bf16.gmra.mxu0 %v1515
      %v1844 = vpop.f32.mrf.mxu0
      %v1845 = vadd.f32 0.0, %v1844
      %v1846 = vpop.f32.mrf.mxu0
      %v1847 = vpop.f32.mrf.mxu0
      %v1848 = vadd.f32 0.0, %v1847
      %v1849 = vpop.f32.mrf.mxu0
      %1850 = vmatprep.mubr.bf16.mxu0 0
      %1851 = vmatmul.mubr.bf16.gmra.mxu0 %v1518
      %v1852 = vpop.f32.mrf.mxu0
      %v1853 = vadd.f32 0.0, %v1852
      %v1854 = vpop.f32.mrf.mxu0
      %v1855 = vpop.f32.mrf.mxu0
      %v1856 = vadd.f32 0.0, %v1855
      %v1857 = vpop.f32.mrf.mxu0
      %1858 = vmatprep.mubr.bf16.mxu0 0
      %1859 = vmatmul.mubr.bf16.gmra.mxu0 %v1521
      %v1860 = vpop.f32.mrf.mxu0
      %v1861 = vadd.f32 0.0, %v1860
      %v1862 = vpop.f32.mrf.mxu0
      %v1863 = vpop.f32.mrf.mxu0
      %v1864 = vadd.f32 0.0, %v1863
      %v1865 = vpop.f32.mrf.mxu0
      %1866 = vmatprep.mubr.bf16.mxu0 0
      %1867 = vmatmul.mubr.bf16.gmra.mxu0 %v1524
      %v1868 = vpop.f32.mrf.mxu0
      %v1869 = vadd.f32 0.0, %v1868
      %v1870 = vpop.f32.mrf.mxu0
      %v1871 = vpop.f32.mrf.mxu0
      %v1872 = vadd.f32 0.0, %v1871
      %v1873 = vpop.f32.mrf.mxu0
      %1874 = vmatprep.mubr.bf16.mxu0 0
      %1875 = vmatmul.mubr.bf16.gmra.mxu0 %v1527
      %v1876 = vpop.f32.mrf.mxu0
      %v1877 = vadd.f32 0.0, %v1876
      %v1878 = vpop.f32.mrf.mxu0
      %v1879 = vpop.f32.mrf.mxu0
      %v1880 = vadd.f32 0.0, %v1879
      %v1881 = vpop.f32.mrf.mxu0
      %1882 = vmatprep.mubr.bf16.mxu0 0
      %1883 = vmatmul.mubr.bf16.gmra.mxu0 %v1530
      %v1884 = vpop.f32.mrf.mxu0
      %v1885 = vadd.f32 0.0, %v1884
      %v1886 = vpop.f32.mrf.mxu0
      %v1887 = vpop.f32.mrf.mxu0
      %v1888 = vadd.f32 0.0, %v1887
      %v1889 = vpop.f32.mrf.mxu0
      %1890 = vmatprep.mubr.bf16.mxu0 0
      %1891 = vmatmul.mubr.bf16.gmra.mxu0 %v1533
      %v1892 = vpop.f32.mrf.mxu0
      %v1893 = vadd.f32 0.0, %v1892
      %v1894 = vpop.f32.mrf.mxu0
      %v1895 = vpop.f32.mrf.mxu0
      %v1896 = vadd.f32 0.0, %v1895
      %v1897 = vpop.f32.mrf.mxu0
      %1898 = vmatprep.mubr.bf16.mxu0 0
      %1899 = vmatmul.mubr.bf16.gmra.mxu0 %v1536
      %v1900 = vpop.f32.mrf.mxu0
      %v1901 = vadd.f32 0.0, %v1900
      %v1902 = vpop.f32.mrf.mxu0
      %v1903 = vpop.f32.mrf.mxu0
      %v1904 = vadd.f32 0.0, %v1903
      %v1905 = vpop.f32.mrf.mxu0
      %1906 = vmatprep.mubr.bf16.mxu0 0
      %1907 = vmatmul.mubr.bf16.gmra.mxu0 %v1539
      %v1908 = vpop.f32.mrf.mxu0
      %v1909 = vadd.f32 0.0, %v1908
      %v1910 = vpop.f32.mrf.mxu0
      %v1911 = vpop.f32.mrf.mxu0
      %v1912 = vadd.f32 0.0, %v1911
      %v1913 = vpop.f32.mrf.mxu0
      %1914 = vmatprep.mubr.bf16.mxu0 0
      %1915 = vmatmul.mubr.bf16.gmra.mxu0 %v1542
      %v1916 = vpop.f32.mrf.mxu0
      %v1917 = vadd.f32 0.0, %v1916
      %v1918 = vpop.f32.mrf.mxu0
      %v1919 = vpop.f32.mrf.mxu0
      %v1920 = vadd.f32 0.0, %v1919
      %v1921 = vpop.f32.mrf.mxu0
      %1922 = vmatprep.mubr.bf16.mxu0 0
      %1923 = vmatmul.mubr.bf16.gmra.mxu0 %v1545
      %v1924 = vpop.f32.mrf.mxu0
      %v1925 = vadd.f32 0.0, %v1924
      %v1926 = vpop.f32.mrf.mxu0
      %v1927 = vpop.f32.mrf.mxu0
      %v1928 = vadd.f32 0.0, %v1927
      %v1929 = vpop.f32.mrf.mxu0
      %1930 = vmatprep.mubr.bf16.mxu0 0
      %1931 = vmatmul.mubr.bf16.gmra.mxu0 %v1773
      %v1932 = vpop.f32.mrf.mxu0
      %v1933 = vadd.f32 0.0, %v1932
      %v1934 = vpop.f32.mrf.mxu0
      %v1935 = vpop.f32.mrf.mxu0
      %v1936 = vadd.f32 0.0, %v1935
      %v1937 = vpop.f32.mrf.mxu0
      %1938 = vdwg.mxu0
      %v1939 = vadd.f32 %v1711, %v1813
      %v1940 = vadd.f32 %v1712, %v1816
      %v1941 = vadd.f32 %v1713, %v1821
      %v1942 = vadd.f32 %v1714, %v1824
      %v1943 = vadd.f32 %v1715, %v1829
      %v1944 = vadd.f32 %v1716, %v1832
      %v1945 = vadd.f32 %v1717, %v1837
      %v1946 = vadd.f32 %v1718, %v1840
      %v1947 = vadd.f32 %v1719, %v1845
      %v1948 = vadd.f32 %v1720, %v1848
      %v1949 = vadd.f32 %v1721, %v1853
      %v1950 = vadd.f32 %v1722, %v1856
      %v1951 = vadd.f32 %v1723, %v1861
      %v1952 = vadd.f32 %v1724, %v1864
      %v1953 = vadd.f32 %v1725, %v1869
      %v1954 = vadd.f32 %v1726, %v1872
      %v1955 = vadd.f32 %v1727, %v1877
      %v1956 = vadd.f32 %v1728, %v1880
      %v1957 = vadd.f32 %v1729, %v1885
      %v1958 = vadd.f32 %v1730, %v1888
      %v1959 = vadd.f32 %v1731, %v1893
      %v1960 = vadd.f32 %v1732, %v1896
      %v1961 = vadd.f32 %v1733, %v1901
      %v1962 = vadd.f32 %v1734, %v1904
      %v1963 = vadd.f32 %v1735, %v1909
      %v1964 = vadd.f32 %v1736, %v1912
      %v1965 = vadd.f32 %v1737, %v1917
      %v1966 = vadd.f32 %v1738, %v1920
      %v1967 = vadd.f32 %v1739, %v1925
      %v1968 = vadd.f32 %v1740, %v1928
      %v1969 = vadd.f32 %v1741, %v1933
      %v1970 = vadd.f32 %v1742, %v1936
      %v1972 = vshrl.u32 %v1059, 16
      %v1974 = vrot.slane %v1972, 4
      %v1975 = vshll.u32 %v1059, 16
      %v1977 = vrot.slane %v1975, 5
      %v1978 = vor.u32 %v1974, %v1977
      %v1979 = vrot.slane %v1978, 4
      %v1981 = vshll.u32 %v1060, 16
      %v1983 = vrot.slane %v1981, 5
      %v1984 = vsel %vm1064, %v1979, %v1983
      %v1985 = vshrl.u32 %v1060, 16
      %v1987 = vrot.slane %v1985, 4
      %v1988 = vor.u32 %v1987, %v1983
      %v1989 = vrot.slane %v1988, 4
      %v1991 = vshll.u32 %v1061, 16
      %v1993 = vrot.slane %v1991, 5
      %v1994 = vsel %vm1064, %v1989, %v1993
      %s1995 = scalar_lea.vmem %s1, 28
      %v1996 = vld [vmem:[%s1995] sm:$0xf]
      %v1997 = vunpack.c.l.b16 %v1984
      %v1998 = vunpack.c.l.b16 %v1994
      %v1999 = vpack.c.b16 %v1998, %v1997
      %v2001 = vsel %vm350, %v1999, 0
      %v2004 = vsel %vm399, %v1996, 0
      %2006 = vmatprep.subr.bf16.mxu0 0
      %2007 = vmatpush1.bf16.msra.mxu0 0
      %2008 = vmatprep.subr.bf16.mxu0 0
      %2009 = vmatpush1.bf16.msra.mxu0 0
      %2010 = vmatprep.subr.bf16.mxu0 0
      %2011 = vmatpush1.bf16.msra.mxu0 0
      %2012 = vmatprep.subr.bf16.mxu0 0
      %2013 = vmatpush1.bf16.msra.mxu0 0
      %2014 = vmatprep.subr.bf16.mxu0 0
      %2015 = vmatpush1.bf16.msra.mxu0 0
      %2016 = vmatprep.subr.bf16.mxu0 0
      %2017 = vmatpush1.bf16.msra.mxu0 0
      %2018 = vmatprep.subr.bf16.mxu0 0
      %2019 = vmatpush1.bf16.msra.mxu0 0
      %2020 = vmatprep.subr.bf16.mxu0 0
      %2021 = vmatpush1.bf16.msra.mxu0 %v2004
      %2022 = vmatprep.subr.bf16.mxu0 0
      %2023 = vmatpush2.bf16.msra.mxu0 0
      %2024 = vmatprep.subr.bf16.mxu0 0
      %2025 = vmatpush2.bf16.msra.mxu0 0
      %2026 = vmatprep.subr.bf16.mxu0 0
      %2027 = vmatpush2.bf16.msra.mxu0 0
      %2028 = vmatprep.subr.bf16.mxu0 0
      %2029 = vmatpush2.bf16.msra.mxu0 0
      %2030 = vmatprep.subr.bf16.mxu0 0
      %2031 = vmatpush2.bf16.msra.mxu0 0
      %2032 = vmatprep.subr.bf16.mxu0 0
      %2033 = vmatpush2.bf16.msra.mxu0 0
      %2034 = vmatprep.subr.bf16.mxu0 0
      %2035 = vmatpush2.bf16.msra.mxu0 0
      %2036 = vmatprep.subr.bf16.mxu0 0
      %2037 = vmatpush2.bf16.msra.mxu0 0
      %2038 = vmatprep.mubr.bf16.mxu0 0
      %2039 = vmatmul.mubr.bf16.gmra.mxu0 %v1506
      %v2040 = vpop.f32.mrf.mxu0
      %v2041 = vadd.f32 0.0, %v2040
      %v2042 = vpop.f32.mrf.mxu0
      %v2043 = vpop.f32.mrf.mxu0
      %v2044 = vadd.f32 0.0, %v2043
      %v2045 = vpop.f32.mrf.mxu0
      %2046 = vmatprep.mubr.bf16.mxu0 0
      %2047 = vmatmul.mubr.bf16.gmra.mxu0 %v1509
      %v2048 = vpop.f32.mrf.mxu0
      %v2049 = vadd.f32 0.0, %v2048
      %v2050 = vpop.f32.mrf.mxu0
      %v2051 = vpop.f32.mrf.mxu0
      %v2052 = vadd.f32 0.0, %v2051
      %v2053 = vpop.f32.mrf.mxu0
      %2054 = vmatprep.mubr.bf16.mxu0 0
      %2055 = vmatmul.mubr.bf16.gmra.mxu0 %v1512
      %v2056 = vpop.f32.mrf.mxu0
      %v2057 = vadd.f32 0.0, %v2056
      %v2058 = vpop.f32.mrf.mxu0
      %v2059 = vpop.f32.mrf.mxu0
      %v2060 = vadd.f32 0.0, %v2059
      %v2061 = vpop.f32.mrf.mxu0
      %2062 = vmatprep.mubr.bf16.mxu0 0
      %2063 = vmatmul.mubr.bf16.gmra.mxu0 %v1515
      %v2064 = vpop.f32.mrf.mxu0
      %v2065 = vadd.f32 0.0, %v2064
      %v2066 = vpop.f32.mrf.mxu0
      %v2067 = vpop.f32.mrf.mxu0
      %v2068 = vadd.f32 0.0, %v2067
      %v2069 = vpop.f32.mrf.mxu0
      %2070 = vmatprep.mubr.bf16.mxu0 0
      %2071 = vmatmul.mubr.bf16.gmra.mxu0 %v1518
      %v2072 = vpop.f32.mrf.mxu0
      %v2073 = vadd.f32 0.0, %v2072
      %v2074 = vpop.f32.mrf.mxu0
      %v2075 = vpop.f32.mrf.mxu0
      %v2076 = vadd.f32 0.0, %v2075
      %v2077 = vpop.f32.mrf.mxu0
      %2078 = vmatprep.mubr.bf16.mxu0 0
      %2079 = vmatmul.mubr.bf16.gmra.mxu0 %v1521
      %v2080 = vpop.f32.mrf.mxu0
      %v2081 = vadd.f32 0.0, %v2080
      %v2082 = vpop.f32.mrf.mxu0
      %v2083 = vpop.f32.mrf.mxu0
      %v2084 = vadd.f32 0.0, %v2083
      %v2085 = vpop.f32.mrf.mxu0
      %2086 = vmatprep.mubr.bf16.mxu0 0
      %2087 = vmatmul.mubr.bf16.gmra.mxu0 %v1524
      %v2088 = vpop.f32.mrf.mxu0
      %v2089 = vadd.f32 0.0, %v2088
      %v2090 = vpop.f32.mrf.mxu0
      %v2091 = vpop.f32.mrf.mxu0
      %v2092 = vadd.f32 0.0, %v2091
      %v2093 = vpop.f32.mrf.mxu0
      %2094 = vmatprep.mubr.bf16.mxu0 0
      %2095 = vmatmul.mubr.bf16.gmra.mxu0 %v1527
      %v2096 = vpop.f32.mrf.mxu0
      %v2097 = vadd.f32 0.0, %v2096
      %v2098 = vpop.f32.mrf.mxu0
      %v2099 = vpop.f32.mrf.mxu0
      %v2100 = vadd.f32 0.0, %v2099
      %v2101 = vpop.f32.mrf.mxu0
      %2102 = vmatprep.mubr.bf16.mxu0 0
      %2103 = vmatmul.mubr.bf16.gmra.mxu0 %v1530
      %v2104 = vpop.f32.mrf.mxu0
      %v2105 = vadd.f32 0.0, %v2104
      %v2106 = vpop.f32.mrf.mxu0
      %v2107 = vpop.f32.mrf.mxu0
      %v2108 = vadd.f32 0.0, %v2107
      %v2109 = vpop.f32.mrf.mxu0
      %2110 = vmatprep.mubr.bf16.mxu0 0
      %2111 = vmatmul.mubr.bf16.gmra.mxu0 %v1533
      %v2112 = vpop.f32.mrf.mxu0
      %v2113 = vadd.f32 0.0, %v2112
      %v2114 = vpop.f32.mrf.mxu0
      %v2115 = vpop.f32.mrf.mxu0
      %v2116 = vadd.f32 0.0, %v2115
      %v2117 = vpop.f32.mrf.mxu0
      %2118 = vmatprep.mubr.bf16.mxu0 0
      %2119 = vmatmul.mubr.bf16.gmra.mxu0 %v1536
      %v2120 = vpop.f32.mrf.mxu0
      %v2121 = vadd.f32 0.0, %v2120
      %v2122 = vpop.f32.mrf.mxu0
      %v2123 = vpop.f32.mrf.mxu0
      %v2124 = vadd.f32 0.0, %v2123
      %v2125 = vpop.f32.mrf.mxu0
      %2126 = vmatprep.mubr.bf16.mxu0 0
      %2127 = vmatmul.mubr.bf16.gmra.mxu0 %v1539
      %v2128 = vpop.f32.mrf.mxu0
      %v2129 = vadd.f32 0.0, %v2128
      %v2130 = vpop.f32.mrf.mxu0
      %v2131 = vpop.f32.mrf.mxu0
      %v2132 = vadd.f32 0.0, %v2131
      %v2133 = vpop.f32.mrf.mxu0
      %2134 = vmatprep.mubr.bf16.mxu0 0
      %2135 = vmatmul.mubr.bf16.gmra.mxu0 %v1542
      %v2136 = vpop.f32.mrf.mxu0
      %v2137 = vadd.f32 0.0, %v2136
      %v2138 = vpop.f32.mrf.mxu0
      %v2139 = vpop.f32.mrf.mxu0
      %v2140 = vadd.f32 0.0, %v2139
      %v2141 = vpop.f32.mrf.mxu0
      %2142 = vmatprep.mubr.bf16.mxu0 0
      %2143 = vmatmul.mubr.bf16.gmra.mxu0 %v1545
      %v2144 = vpop.f32.mrf.mxu0
      %v2145 = vadd.f32 0.0, %v2144
      %v2146 = vpop.f32.mrf.mxu0
      %v2147 = vpop.f32.mrf.mxu0
      %v2148 = vadd.f32 0.0, %v2147
      %v2149 = vpop.f32.mrf.mxu0
      %2150 = vmatprep.mubr.bf16.mxu0 0
      %2151 = vmatmul.mubr.bf16.gmra.mxu0 %v1773
      %v2152 = vpop.f32.mrf.mxu0
      %v2153 = vadd.f32 0.0, %v2152
      %v2154 = vpop.f32.mrf.mxu0
      %v2155 = vpop.f32.mrf.mxu0
      %v2156 = vadd.f32 0.0, %v2155
      %v2157 = vpop.f32.mrf.mxu0
      %2158 = vmatprep.mubr.bf16.mxu0 0
      %2159 = vmatmul.mubr.bf16.gmra.mxu0 %v2001
      %v2160 = vpop.f32.mrf.mxu0
      %v2161 = vadd.f32 0.0, %v2160
      %v2162 = vpop.f32.mrf.mxu0
      %v2163 = vpop.f32.mrf.mxu0
      %v2164 = vadd.f32 0.0, %v2163
      %v2165 = vpop.f32.mrf.mxu0
      %2166 = vdwg.mxu0
      %v2167 = vadd.f32 %v1939, %v2041
      %v2168 = vadd.f32 %v1940, %v2044
      %v2169 = vadd.f32 %v1941, %v2049
      %v2170 = vadd.f32 %v1942, %v2052
      %v2171 = vadd.f32 %v1943, %v2057
      %v2172 = vadd.f32 %v1944, %v2060
      %v2173 = vadd.f32 %v1945, %v2065
      %v2174 = vadd.f32 %v1946, %v2068
      %v2175 = vadd.f32 %v1947, %v2073
      %v2176 = vadd.f32 %v1948, %v2076
      %v2177 = vadd.f32 %v1949, %v2081
      %v2178 = vadd.f32 %v1950, %v2084
      %v2179 = vadd.f32 %v1951, %v2089
      %v2180 = vadd.f32 %v1952, %v2092
      %v2181 = vadd.f32 %v1953, %v2097
      %v2182 = vadd.f32 %v1954, %v2100
      %v2183 = vadd.f32 %v1955, %v2105
      %v2184 = vadd.f32 %v1956, %v2108
      %v2185 = vadd.f32 %v1957, %v2113
      %v2186 = vadd.f32 %v1958, %v2116
      %v2187 = vadd.f32 %v1959, %v2121
      %v2188 = vadd.f32 %v1960, %v2124
      %v2189 = vadd.f32 %v1961, %v2129
      %v2190 = vadd.f32 %v1962, %v2132
      %v2191 = vadd.f32 %v1963, %v2137
      %v2192 = vadd.f32 %v1964, %v2140
      %v2193 = vadd.f32 %v1965, %v2145
      %v2194 = vadd.f32 %v1966, %v2148
      %v2195 = vadd.f32 %v1967, %v2153
      %v2196 = vadd.f32 %v1968, %v2156
      %v2197 = vadd.f32 %v1969, %v2161
      %v2198 = vadd.f32 %v1970, %v2164
      %v2199 = vld [vmem:[%s219] sm:$0xe]
      %v2200 = vld [vmem:[%s219 + $0xc] sm:$0xe]
      %v2201 = vld [vmem:[%s219 + $0x18] sm:$0xe]
      %v2202 = vld [vmem:[%s219 + $0x24] sm:$0xe]
      %v2203 = vld [vmem:[%s219 + $0x30] sm:$0xe]
      %v2204 = vld [vmem:[%s219 + $0x3c] sm:$0xe]
      %v2205 = vld [vmem:[%s219 + $0x48] sm:$0xe]
      %v2206 = vld [vmem:[%s219 + $0x54] sm:$0xe]
      %v2207 = vld [vmem:[%s219 + $0x60] sm:$0xe]
      %v2208 = vld [vmem:[%s219 + $0x6c] sm:$0xe]
      %v2209 = vld [vmem:[%s219 + $0x78] sm:$0xe]
      %v2210 = vld [vmem:[%s219 + $0x84] sm:$0xe]
      %v2211 = vld [vmem:[%s219 + $0x90] sm:$0xe]
      %v2212 = vld [vmem:[%s219 + $0x9c] sm:$0xe]
      %v2213 = vld [vmem:[%s219 + $0xa8] sm:$0xe]
      %v2214 = vld [vmem:[%s219 + $0xb4] sm:$0xe]
      %v2215 = vld [vmem:[%s219 + $0xc0] sm:$0xe]
      %v2216 = vld [vmem:[%s219 + $0xcc] sm:$0xe]
      %vm2265 = vcmask 1042432
      %vm2266 = vcmask 1046532
      %vm2267 = vmor %vm2265, %vm2266
      %v2268 = vrot.slane %v2199, 5
      %v2269 = vrot.slane %v2268, 4
      %v2270 = vrot.slane %v1009, 5
      %v2271 = vsel %vm2267, %v2269, %v2270
      %v2272 = vrot.slane %v2270, 4
      %v2273 = vrot.slane %v1010, 5
      %v2274 = vsel %vm2267, %v2272, %v2273
      %v2275 = vrot.slane %v2200, 5
      %v2276 = vrot.slane %v2275, 4
      %v2277 = vrot.slane %v1012, 5
      %v2278 = vsel %vm2267, %v2276, %v2277
      %v2279 = vrot.slane %v2277, 4
      %v2280 = vrot.slane %v1013, 5
      %v2281 = vsel %vm2267, %v2279, %v2280
      %v2282 = vrot.slane %v2201, 5
      %v2283 = vrot.slane %v2282, 4
      %v2284 = vrot.slane %v1015, 5
      %v2285 = vsel %vm2267, %v2283, %v2284
      %v2286 = vrot.slane %v2284, 4
      %v2287 = vrot.slane %v1016, 5
      %v2288 = vsel %vm2267, %v2286, %v2287
      %v2289 = vrot.slane %v2202, 5
      %v2290 = vrot.slane %v2289, 4
      %v2291 = vrot.slane %v1018, 5
      %v2292 = vsel %vm2267, %v2290, %v2291
      %v2293 = vrot.slane %v2291, 4
      %v2294 = vrot.slane %v1019, 5
      %v2295 = vsel %vm2267, %v2293, %v2294
      %v2296 = vrot.slane %v2203, 5
      %v2297 = vrot.slane %v2296, 4
      %v2298 = vrot.slane %v1021, 5
      %v2299 = vsel %vm2267, %v2297, %v2298
      %v2300 = vrot.slane %v2298, 4
      %v2301 = vrot.slane %v1022, 5
      %v2302 = vsel %vm2267, %v2300, %v2301
      %v2303 = vrot.slane %v2204, 5
      %v2304 = vrot.slane %v2303, 4
      %v2305 = vrot.slane %v1024, 5
      %v2306 = vsel %vm2267, %v2304, %v2305
      %v2307 = vrot.slane %v2305, 4
      %v2308 = vrot.slane %v1025, 5
      %v2309 = vsel %vm2267, %v2307, %v2308
      %v2310 = vrot.slane %v2205, 5
      %v2311 = vrot.slane %v2310, 4
      %v2312 = vrot.slane %v1027, 5
      %v2313 = vsel %vm2267, %v2311, %v2312
      %v2314 = vrot.slane %v2312, 4
      %v2315 = vrot.slane %v1028, 5
      %v2316 = vsel %vm2267, %v2314, %v2315
      %v2317 = vrot.slane %v2206, 5
      %v2318 = vrot.slane %v2317, 4
      %v2319 = vrot.slane %v1030, 5
      %v2320 = vsel %vm2267, %v2318, %v2319
      %v2321 = vrot.slane %v2319, 4
      %v2322 = vrot.slane %v1031, 5
      %v2323 = vsel %vm2267, %v2321, %v2322
      %v2324 = vrot.slane %v2207, 5
      %v2325 = vrot.slane %v2324, 4
      %v2326 = vrot.slane %v1033, 5
      %v2327 = vsel %vm2267, %v2325, %v2326
      %v2328 = vrot.slane %v2326, 4
      %v2329 = vrot.slane %v1034, 5
      %v2330 = vsel %vm2267, %v2328, %v2329
      %v2331 = vrot.slane %v2208, 5
      %v2332 = vrot.slane %v2331, 4
      %v2333 = vrot.slane %v1036, 5
      %v2334 = vsel %vm2267, %v2332, %v2333
      %v2335 = vrot.slane %v2333, 4
      %v2336 = vrot.slane %v1037, 5
      %v2337 = vsel %vm2267, %v2335, %v2336
      %v2338 = vrot.slane %v2209, 5
      %v2339 = vrot.slane %v2338, 4
      %v2340 = vrot.slane %v1039, 5
      %v2341 = vsel %vm2267, %v2339, %v2340
      %v2342 = vrot.slane %v2340, 4
      %v2343 = vrot.slane %v1040, 5
      %v2344 = vsel %vm2267, %v2342, %v2343
      %v2345 = vrot.slane %v2210, 5
      %v2346 = vrot.slane %v2345, 4
      %v2347 = vrot.slane %v1042, 5
      %v2348 = vsel %vm2267, %v2346, %v2347
      %v2349 = vrot.slane %v2347, 4
      %v2350 = vrot.slane %v1043, 5
      %v2351 = vsel %vm2267, %v2349, %v2350
      %v2352 = vrot.slane %v2211, 5
      %v2353 = vrot.slane %v2352, 4
      %v2354 = vrot.slane %v1045, 5
      %v2355 = vsel %vm2267, %v2353, %v2354
      %v2356 = vrot.slane %v2354, 4
      %v2357 = vrot.slane %v1046, 5
      %v2358 = vsel %vm2267, %v2356, %v2357
      %v2359 = vrot.slane %v2212, 5
      %v2360 = vrot.slane %v2359, 4
      %v2361 = vrot.slane %v1048, 5
      %v2362 = vsel %vm2267, %v2360, %v2361
      %v2363 = vrot.slane %v2361, 4
      %v2364 = vrot.slane %v1049, 5
      %v2365 = vsel %vm2267, %v2363, %v2364
      %v2366 = vrot.slane %v2213, 5
      %v2367 = vrot.slane %v2366, 4
      %v2368 = vrot.slane %v1051, 5
      %v2369 = vsel %vm2267, %v2367, %v2368
      %v2370 = vrot.slane %v2368, 4
      %v2371 = vrot.slane %v1052, 5
      %v2372 = vsel %vm2267, %v2370, %v2371
      %v2373 = vrot.slane %v2214, 5
      %v2374 = vrot.slane %v2373, 4
      %v2375 = vrot.slane %v1054, 5
      %v2376 = vsel %vm2267, %v2374, %v2375
      %v2377 = vrot.slane %v2375, 4
      %v2378 = vrot.slane %v1055, 5
      %v2379 = vsel %vm2267, %v2377, %v2378
      %s2380 = scalar_lea.vmem %s1, 8
      %v2381 = vld [vmem:[%s2380] sm:$0xf]
      %v2382 = vunpack.c.l.b16 %v2271
      %v2383 = vunpack.c.l.b16 %v2274
      %v2384 = vunpack.c.l.b16 %v2278
      %v2385 = vunpack.c.l.b16 %v2281
      %v2386 = vunpack.c.l.b16 %v2285
      %v2387 = vunpack.c.l.b16 %v2288
      %v2388 = vunpack.c.l.b16 %v2292
      %v2389 = vunpack.c.l.b16 %v2295
      %v2390 = vunpack.c.l.b16 %v2299
      %v2391 = vunpack.c.l.b16 %v2302
      %v2392 = vunpack.c.l.b16 %v2306
      %v2393 = vunpack.c.l.b16 %v2309
      %v2394 = vunpack.c.l.b16 %v2313
      %v2395 = vunpack.c.l.b16 %v2316
      %v2396 = vunpack.c.l.b16 %v2320
      %v2397 = vunpack.c.l.b16 %v2323
      %v2398 = vunpack.c.l.b16 %v2327
      %v2399 = vunpack.c.l.b16 %v2330
      %v2400 = vunpack.c.l.b16 %v2334
      %v2401 = vunpack.c.l.b16 %v2337
      %v2402 = vunpack.c.l.b16 %v2341
      %v2403 = vunpack.c.l.b16 %v2344
      %v2404 = vunpack.c.l.b16 %v2348
      %v2405 = vunpack.c.l.b16 %v2351
      %v2406 = vunpack.c.l.b16 %v2355
      %v2407 = vunpack.c.l.b16 %v2358
      %v2408 = vunpack.c.l.b16 %v2362
      %v2409 = vunpack.c.l.b16 %v2365
      %v2410 = vunpack.c.l.b16 %v2369
      %v2411 = vunpack.c.l.b16 %v2372
      %v2412 = vunpack.c.l.b16 %v2376
      %v2413 = vunpack.c.l.b16 %v2379
      %v2414 = vpack.c.b16 %v2383, %v2382
      %v2415 = vpack.c.b16 %v2385, %v2384
      %v2416 = vpack.c.b16 %v2387, %v2386
      %v2417 = vpack.c.b16 %v2389, %v2388
      %v2418 = vpack.c.b16 %v2391, %v2390
      %v2419 = vpack.c.b16 %v2393, %v2392
      %v2420 = vpack.c.b16 %v2395, %v2394
      %v2421 = vpack.c.b16 %v2397, %v2396
      %v2422 = vpack.c.b16 %v2399, %v2398
      %v2423 = vpack.c.b16 %v2401, %v2400
      %v2424 = vpack.c.b16 %v2403, %v2402
      %v2425 = vpack.c.b16 %v2405, %v2404
      %v2426 = vpack.c.b16 %v2407, %v2406
      %v2427 = vpack.c.b16 %v2409, %v2408
      %v2428 = vpack.c.b16 %v2411, %v2410
      %v2429 = vpack.c.b16 %v2413, %v2412
      %v2431 = vsel %vm350, %v2414, 0
      %v2434 = vsel %vm350, %v2415, 0
      %v2437 = vsel %vm350, %v2416, 0
      %v2440 = vsel %vm350, %v2417, 0
      %v2443 = vsel %vm350, %v2418, 0
      %v2446 = vsel %vm350, %v2419, 0
      %v2449 = vsel %vm350, %v2420, 0
      %v2452 = vsel %vm350, %v2421, 0
      %v2455 = vsel %vm350, %v2422, 0
      %v2458 = vsel %vm350, %v2423, 0
      %v2461 = vsel %vm350, %v2424, 0
      %v2464 = vsel %vm350, %v2425, 0
      %v2467 = vsel %vm350, %v2426, 0
      %v2470 = vsel %vm350, %v2427, 0
      %v2473 = vsel %vm350, %v2428, 0
      %v2476 = vsel %vm350, %v2429, 0
      %v2479 = vsel %vm399, %v2381, 0
      %2481 = vmatprep.subr.bf16.mxu0 0
      %2482 = vmatpush1.bf16.msra.mxu0 0
      %2483 = vmatprep.subr.bf16.mxu0 0
      %2484 = vmatpush1.bf16.msra.mxu0 0
      %2485 = vmatprep.subr.bf16.mxu0 0
      %2486 = vmatpush1.bf16.msra.mxu0 0
      %2487 = vmatprep.subr.bf16.mxu0 0
      %2488 = vmatpush1.bf16.msra.mxu0 0
      %2489 = vmatprep.subr.bf16.mxu0 0
      %2490 = vmatpush1.bf16.msra.mxu0 0
      %2491 = vmatprep.subr.bf16.mxu0 0
      %2492 = vmatpush1.bf16.msra.mxu0 0
      %2493 = vmatprep.subr.bf16.mxu0 0
      %2494 = vmatpush1.bf16.msra.mxu0 0
      %2495 = vmatprep.subr.bf16.mxu0 0
      %2496 = vmatpush1.bf16.msra.mxu0 %v2479
      %2497 = vmatprep.subr.bf16.mxu0 0
      %2498 = vmatpush2.bf16.msra.mxu0 0
      %2499 = vmatprep.subr.bf16.mxu0 0
      %2500 = vmatpush2.bf16.msra.mxu0 0
      %2501 = vmatprep.subr.bf16.mxu0 0
      %2502 = vmatpush2.bf16.msra.mxu0 0
      %2503 = vmatprep.subr.bf16.mxu0 0
      %2504 = vmatpush2.bf16.msra.mxu0 0
      %2505 = vmatprep.subr.bf16.mxu0 0
      %2506 = vmatpush2.bf16.msra.mxu0 0
      %2507 = vmatprep.subr.bf16.mxu0 0
      %2508 = vmatpush2.bf16.msra.mxu0 0
      %2509 = vmatprep.subr.bf16.mxu0 0
      %2510 = vmatpush2.bf16.msra.mxu0 0
      %2511 = vmatprep.subr.bf16.mxu0 0
      %2512 = vmatpush2.bf16.msra.mxu0 0
      %2513 = vmatprep.mubr.bf16.mxu0 0
      %2514 = vmatmul.mubr.bf16.gmra.mxu0 %v2431
      %v2515 = vpop.f32.mrf.mxu0
      %v2516 = vadd.f32 0.0, %v2515
      %v2517 = vpop.f32.mrf.mxu0
      %v2518 = vpop.f32.mrf.mxu0
      %v2519 = vadd.f32 0.0, %v2518
      %v2520 = vpop.f32.mrf.mxu0
      %2521 = vmatprep.mubr.bf16.mxu0 0
      %2522 = vmatmul.mubr.bf16.gmra.mxu0 %v2434
      %v2523 = vpop.f32.mrf.mxu0
      %v2524 = vadd.f32 0.0, %v2523
      %v2525 = vpop.f32.mrf.mxu0
      %v2526 = vpop.f32.mrf.mxu0
      %v2527 = vadd.f32 0.0, %v2526
      %v2528 = vpop.f32.mrf.mxu0
      %2529 = vmatprep.mubr.bf16.mxu0 0
      %2530 = vmatmul.mubr.bf16.gmra.mxu0 %v2437
      %v2531 = vpop.f32.mrf.mxu0
      %v2532 = vadd.f32 0.0, %v2531
      %v2533 = vpop.f32.mrf.mxu0
      %v2534 = vpop.f32.mrf.mxu0
      %v2535 = vadd.f32 0.0, %v2534
      %v2536 = vpop.f32.mrf.mxu0
      %2537 = vmatprep.mubr.bf16.mxu0 0
      %2538 = vmatmul.mubr.bf16.gmra.mxu0 %v2440
      %v2539 = vpop.f32.mrf.mxu0
      %v2540 = vadd.f32 0.0, %v2539
      %v2541 = vpop.f32.mrf.mxu0
      %v2542 = vpop.f32.mrf.mxu0
      %v2543 = vadd.f32 0.0, %v2542
      %v2544 = vpop.f32.mrf.mxu0
      %2545 = vmatprep.mubr.bf16.mxu0 0
      %2546 = vmatmul.mubr.bf16.gmra.mxu0 %v2443
      %v2547 = vpop.f32.mrf.mxu0
      %v2548 = vadd.f32 0.0, %v2547
      %v2549 = vpop.f32.mrf.mxu0
      %v2550 = vpop.f32.mrf.mxu0
      %v2551 = vadd.f32 0.0, %v2550
      %v2552 = vpop.f32.mrf.mxu0
      %2553 = vmatprep.mubr.bf16.mxu0 0
      %2554 = vmatmul.mubr.bf16.gmra.mxu0 %v2446
      %v2555 = vpop.f32.mrf.mxu0
      %v2556 = vadd.f32 0.0, %v2555
      %v2557 = vpop.f32.mrf.mxu0
      %v2558 = vpop.f32.mrf.mxu0
      %v2559 = vadd.f32 0.0, %v2558
      %v2560 = vpop.f32.mrf.mxu0
      %2561 = vmatprep.mubr.bf16.mxu0 0
      %2562 = vmatmul.mubr.bf16.gmra.mxu0 %v2449
      %v2563 = vpop.f32.mrf.mxu0
      %v2564 = vadd.f32 0.0, %v2563
      %v2565 = vpop.f32.mrf.mxu0
      %v2566 = vpop.f32.mrf.mxu0
      %v2567 = vadd.f32 0.0, %v2566
      %v2568 = vpop.f32.mrf.mxu0
      %2569 = vmatprep.mubr.bf16.mxu0 0
      %2570 = vmatmul.mubr.bf16.gmra.mxu0 %v2452
      %v2571 = vpop.f32.mrf.mxu0
      %v2572 = vadd.f32 0.0, %v2571
      %v2573 = vpop.f32.mrf.mxu0
      %v2574 = vpop.f32.mrf.mxu0
      %v2575 = vadd.f32 0.0, %v2574
      %v2576 = vpop.f32.mrf.mxu0
      %2577 = vmatprep.mubr.bf16.mxu0 0
      %2578 = vmatmul.mubr.bf16.gmra.mxu0 %v2455
      %v2579 = vpop.f32.mrf.mxu0
      %v2580 = vadd.f32 0.0, %v2579
      %v2581 = vpop.f32.mrf.mxu0
      %v2582 = vpop.f32.mrf.mxu0
      %v2583 = vadd.f32 0.0, %v2582
      %v2584 = vpop.f32.mrf.mxu0
      %2585 = vmatprep.mubr.bf16.mxu0 0
      %2586 = vmatmul.mubr.bf16.gmra.mxu0 %v2458
      %v2587 = vpop.f32.mrf.mxu0
      %v2588 = vadd.f32 0.0, %v2587
      %v2589 = vpop.f32.mrf.mxu0
      %v2590 = vpop.f32.mrf.mxu0
      %v2591 = vadd.f32 0.0, %v2590
      %v2592 = vpop.f32.mrf.mxu0
      %2593 = vmatprep.mubr.bf16.mxu0 0
      %2594 = vmatmul.mubr.bf16.gmra.mxu0 %v2461
      %v2595 = vpop.f32.mrf.mxu0
      %v2596 = vadd.f32 0.0, %v2595
      %v2597 = vpop.f32.mrf.mxu0
      %v2598 = vpop.f32.mrf.mxu0
      %v2599 = vadd.f32 0.0, %v2598
      %v2600 = vpop.f32.mrf.mxu0
      %2601 = vmatprep.mubr.bf16.mxu0 0
      %2602 = vmatmul.mubr.bf16.gmra.mxu0 %v2464
      %v2603 = vpop.f32.mrf.mxu0
      %v2604 = vadd.f32 0.0, %v2603
      %v2605 = vpop.f32.mrf.mxu0
      %v2606 = vpop.f32.mrf.mxu0
      %v2607 = vadd.f32 0.0, %v2606
      %v2608 = vpop.f32.mrf.mxu0
      %2609 = vmatprep.mubr.bf16.mxu0 0
      %2610 = vmatmul.mubr.bf16.gmra.mxu0 %v2467
      %v2611 = vpop.f32.mrf.mxu0
      %v2612 = vadd.f32 0.0, %v2611
      %v2613 = vpop.f32.mrf.mxu0
      %v2614 = vpop.f32.mrf.mxu0
      %v2615 = vadd.f32 0.0, %v2614
      %v2616 = vpop.f32.mrf.mxu0
      %2617 = vmatprep.mubr.bf16.mxu0 0
      %2618 = vmatmul.mubr.bf16.gmra.mxu0 %v2470
      %v2619 = vpop.f32.mrf.mxu0
      %v2620 = vadd.f32 0.0, %v2619
      %v2621 = vpop.f32.mrf.mxu0
      %v2622 = vpop.f32.mrf.mxu0
      %v2623 = vadd.f32 0.0, %v2622
      %v2624 = vpop.f32.mrf.mxu0
      %2625 = vmatprep.mubr.bf16.mxu0 0
      %2626 = vmatmul.mubr.bf16.gmra.mxu0 %v2473
      %v2627 = vpop.f32.mrf.mxu0
      %v2628 = vadd.f32 0.0, %v2627
      %v2629 = vpop.f32.mrf.mxu0
      %v2630 = vpop.f32.mrf.mxu0
      %v2631 = vadd.f32 0.0, %v2630
      %v2632 = vpop.f32.mrf.mxu0
      %2633 = vmatprep.mubr.bf16.mxu0 0
      %2634 = vmatmul.mubr.bf16.gmra.mxu0 %v2476
      %v2635 = vpop.f32.mrf.mxu0
      %v2636 = vadd.f32 0.0, %v2635
      %v2637 = vpop.f32.mrf.mxu0
      %v2638 = vpop.f32.mrf.mxu0
      %v2639 = vadd.f32 0.0, %v2638
      %v2640 = vpop.f32.mrf.mxu0
      %2641 = vdwg.mxu0
      %v2642 = vadd.f32 %v2167, %v2516
      %v2643 = vadd.f32 %v2168, %v2519
      %v2644 = vadd.f32 %v2169, %v2524
      %v2645 = vadd.f32 %v2170, %v2527
      %v2646 = vadd.f32 %v2171, %v2532
      %v2647 = vadd.f32 %v2172, %v2535
      %v2648 = vadd.f32 %v2173, %v2540
      %v2649 = vadd.f32 %v2174, %v2543
      %v2650 = vadd.f32 %v2175, %v2548
      %v2651 = vadd.f32 %v2176, %v2551
      %v2652 = vadd.f32 %v2177, %v2556
      %v2653 = vadd.f32 %v2178, %v2559
      %v2654 = vadd.f32 %v2179, %v2564
      %v2655 = vadd.f32 %v2180, %v2567
      %v2656 = vadd.f32 %v2181, %v2572
      %v2657 = vadd.f32 %v2182, %v2575
      %v2658 = vadd.f32 %v2183, %v2580
      %v2659 = vadd.f32 %v2184, %v2583
      %v2660 = vadd.f32 %v2185, %v2588
      %v2661 = vadd.f32 %v2186, %v2591
      %v2662 = vadd.f32 %v2187, %v2596
      %v2663 = vadd.f32 %v2188, %v2599
      %v2664 = vadd.f32 %v2189, %v2604
      %v2665 = vadd.f32 %v2190, %v2607
      %v2666 = vadd.f32 %v2191, %v2612
      %v2667 = vadd.f32 %v2192, %v2615
      %v2668 = vadd.f32 %v2193, %v2620
      %v2669 = vadd.f32 %v2194, %v2623
      %v2670 = vadd.f32 %v2195, %v2628
      %v2671 = vadd.f32 %v2196, %v2631
      %v2672 = vadd.f32 %v2197, %v2636
      %v2673 = vadd.f32 %v2198, %v2639
      %v2677 = vrot.slane %v2215, 5
      %v2678 = vrot.slane %v2677, 4
      %v2679 = vrot.slane %v1057, 5
      %v2680 = vsel %vm2267, %v2678, %v2679
      %v2681 = vrot.slane %v2679, 4
      %v2682 = vrot.slane %v1058, 5
      %v2683 = vsel %vm2267, %v2681, %v2682
      %s2684 = scalar_lea.vmem %s1, 20
      %v2685 = vld [vmem:[%s2684] sm:$0xf]
      %v2686 = vunpack.c.l.b16 %v2680
      %v2687 = vunpack.c.l.b16 %v2683
      %v2688 = vpack.c.b16 %v2687, %v2686
      %v2690 = vsel %vm350, %v2688, 0
      %v2693 = vsel %vm399, %v2685, 0
      %2695 = vmatprep.subr.bf16.mxu0 0
      %2696 = vmatpush1.bf16.msra.mxu0 0
      %2697 = vmatprep.subr.bf16.mxu0 0
      %2698 = vmatpush1.bf16.msra.mxu0 0
      %2699 = vmatprep.subr.bf16.mxu0 0
      %2700 = vmatpush1.bf16.msra.mxu0 0
      %2701 = vmatprep.subr.bf16.mxu0 0
      %2702 = vmatpush1.bf16.msra.mxu0 0
      %2703 = vmatprep.subr.bf16.mxu0 0
      %2704 = vmatpush1.bf16.msra.mxu0 0
      %2705 = vmatprep.subr.bf16.mxu0 0
      %2706 = vmatpush1.bf16.msra.mxu0 0
      %2707 = vmatprep.subr.bf16.mxu0 0
      %2708 = vmatpush1.bf16.msra.mxu0 0
      %2709 = vmatprep.subr.bf16.mxu0 0
      %2710 = vmatpush1.bf16.msra.mxu0 %v2693
      %2711 = vmatprep.subr.bf16.mxu0 0
      %2712 = vmatpush2.bf16.msra.mxu0 0
      %2713 = vmatprep.subr.bf16.mxu0 0
      %2714 = vmatpush2.bf16.msra.mxu0 0
      %2715 = vmatprep.subr.bf16.mxu0 0
      %2716 = vmatpush2.bf16.msra.mxu0 0
      %2717 = vmatprep.subr.bf16.mxu0 0
      %2718 = vmatpush2.bf16.msra.mxu0 0
      %2719 = vmatprep.subr.bf16.mxu0 0
      %2720 = vmatpush2.bf16.msra.mxu0 0
      %2721 = vmatprep.subr.bf16.mxu0 0
      %2722 = vmatpush2.bf16.msra.mxu0 0
      %2723 = vmatprep.subr.bf16.mxu0 0
      %2724 = vmatpush2.bf16.msra.mxu0 0
      %2725 = vmatprep.subr.bf16.mxu0 0
      %2726 = vmatpush2.bf16.msra.mxu0 0
      %2727 = vmatprep.mubr.bf16.mxu0 0
      %2728 = vmatmul.mubr.bf16.gmra.mxu0 %v2434
      %v2729 = vpop.f32.mrf.mxu0
      %v2730 = vadd.f32 0.0, %v2729
      %v2731 = vpop.f32.mrf.mxu0
      %v2732 = vpop.f32.mrf.mxu0
      %v2733 = vadd.f32 0.0, %v2732
      %v2734 = vpop.f32.mrf.mxu0
      %2735 = vmatprep.mubr.bf16.mxu0 0
      %2736 = vmatmul.mubr.bf16.gmra.mxu0 %v2437
      %v2737 = vpop.f32.mrf.mxu0
      %v2738 = vadd.f32 0.0, %v2737
      %v2739 = vpop.f32.mrf.mxu0
      %v2740 = vpop.f32.mrf.mxu0
      %v2741 = vadd.f32 0.0, %v2740
      %v2742 = vpop.f32.mrf.mxu0
      %2743 = vmatprep.mubr.bf16.mxu0 0
      %2744 = vmatmul.mubr.bf16.gmra.mxu0 %v2440
      %v2745 = vpop.f32.mrf.mxu0
      %v2746 = vadd.f32 0.0, %v2745
      %v2747 = vpop.f32.mrf.mxu0
      %v2748 = vpop.f32.mrf.mxu0
      %v2749 = vadd.f32 0.0, %v2748
      %v2750 = vpop.f32.mrf.mxu0
      %2751 = vmatprep.mubr.bf16.mxu0 0
      %2752 = vmatmul.mubr.bf16.gmra.mxu0 %v2443
      %v2753 = vpop.f32.mrf.mxu0
      %v2754 = vadd.f32 0.0, %v2753
      %v2755 = vpop.f32.mrf.mxu0
      %v2756 = vpop.f32.mrf.mxu0
      %v2757 = vadd.f32 0.0, %v2756
      %v2758 = vpop.f32.mrf.mxu0
      %2759 = vmatprep.mubr.bf16.mxu0 0
      %2760 = vmatmul.mubr.bf16.gmra.mxu0 %v2446
      %v2761 = vpop.f32.mrf.mxu0
      %v2762 = vadd.f32 0.0, %v2761
      %v2763 = vpop.f32.mrf.mxu0
      %v2764 = vpop.f32.mrf.mxu0
      %v2765 = vadd.f32 0.0, %v2764
      %v2766 = vpop.f32.mrf.mxu0
      %2767 = vmatprep.mubr.bf16.mxu0 0
      %2768 = vmatmul.mubr.bf16.gmra.mxu0 %v2449
      %v2769 = vpop.f32.mrf.mxu0
      %v2770 = vadd.f32 0.0, %v2769
      %v2771 = vpop.f32.mrf.mxu0
      %v2772 = vpop.f32.mrf.mxu0
      %v2773 = vadd.f32 0.0, %v2772
      %v2774 = vpop.f32.mrf.mxu0
      %2775 = vmatprep.mubr.bf16.mxu0 0
      %2776 = vmatmul.mubr.bf16.gmra.mxu0 %v2452
      %v2777 = vpop.f32.mrf.mxu0
      %v2778 = vadd.f32 0.0, %v2777
      %v2779 = vpop.f32.mrf.mxu0
      %v2780 = vpop.f32.mrf.mxu0
      %v2781 = vadd.f32 0.0, %v2780
      %v2782 = vpop.f32.mrf.mxu0
      %2783 = vmatprep.mubr.bf16.mxu0 0
      %2784 = vmatmul.mubr.bf16.gmra.mxu0 %v2455
      %v2785 = vpop.f32.mrf.mxu0
      %v2786 = vadd.f32 0.0, %v2785
      %v2787 = vpop.f32.mrf.mxu0
      %v2788 = vpop.f32.mrf.mxu0
      %v2789 = vadd.f32 0.0, %v2788
      %v2790 = vpop.f32.mrf.mxu0
      %2791 = vmatprep.mubr.bf16.mxu0 0
      %2792 = vmatmul.mubr.bf16.gmra.mxu0 %v2458
      %v2793 = vpop.f32.mrf.mxu0
      %v2794 = vadd.f32 0.0, %v2793
      %v2795 = vpop.f32.mrf.mxu0
      %v2796 = vpop.f32.mrf.mxu0
      %v2797 = vadd.f32 0.0, %v2796
      %v2798 = vpop.f32.mrf.mxu0
      %2799 = vmatprep.mubr.bf16.mxu0 0
      %2800 = vmatmul.mubr.bf16.gmra.mxu0 %v2461
      %v2801 = vpop.f32.mrf.mxu0
      %v2802 = vadd.f32 0.0, %v2801
      %v2803 = vpop.f32.mrf.mxu0
      %v2804 = vpop.f32.mrf.mxu0
      %v2805 = vadd.f32 0.0, %v2804
      %v2806 = vpop.f32.mrf.mxu0
      %2807 = vmatprep.mubr.bf16.mxu0 0
      %2808 = vmatmul.mubr.bf16.gmra.mxu0 %v2464
      %v2809 = vpop.f32.mrf.mxu0
      %v2810 = vadd.f32 0.0, %v2809
      %v2811 = vpop.f32.mrf.mxu0
      %v2812 = vpop.f32.mrf.mxu0
      %v2813 = vadd.f32 0.0, %v2812
      %v2814 = vpop.f32.mrf.mxu0
      %2815 = vmatprep.mubr.bf16.mxu0 0
      %2816 = vmatmul.mubr.bf16.gmra.mxu0 %v2467
      %v2817 = vpop.f32.mrf.mxu0
      %v2818 = vadd.f32 0.0, %v2817
      %v2819 = vpop.f32.mrf.mxu0
      %v2820 = vpop.f32.mrf.mxu0
      %v2821 = vadd.f32 0.0, %v2820
      %v2822 = vpop.f32.mrf.mxu0
      %2823 = vmatprep.mubr.bf16.mxu0 0
      %2824 = vmatmul.mubr.bf16.gmra.mxu0 %v2470
      %v2825 = vpop.f32.mrf.mxu0
      %v2826 = vadd.f32 0.0, %v2825
      %v2827 = vpop.f32.mrf.mxu0
      %v2828 = vpop.f32.mrf.mxu0
      %v2829 = vadd.f32 0.0, %v2828
      %v2830 = vpop.f32.mrf.mxu0
      %2831 = vmatprep.mubr.bf16.mxu0 0
      %2832 = vmatmul.mubr.bf16.gmra.mxu0 %v2473
      %v2833 = vpop.f32.mrf.mxu0
      %v2834 = vadd.f32 0.0, %v2833
      %v2835 = vpop.f32.mrf.mxu0
      %v2836 = vpop.f32.mrf.mxu0
      %v2837 = vadd.f32 0.0, %v2836
      %v2838 = vpop.f32.mrf.mxu0
      %2839 = vmatprep.mubr.bf16.mxu0 0
      %2840 = vmatmul.mubr.bf16.gmra.mxu0 %v2476
      %v2841 = vpop.f32.mrf.mxu0
      %v2842 = vadd.f32 0.0, %v2841
      %v2843 = vpop.f32.mrf.mxu0
      %v2844 = vpop.f32.mrf.mxu0
      %v2845 = vadd.f32 0.0, %v2844
      %v2846 = vpop.f32.mrf.mxu0
      %2847 = vmatprep.mubr.bf16.mxu0 0
      %2848 = vmatmul.mubr.bf16.gmra.mxu0 %v2690
      %v2849 = vpop.f32.mrf.mxu0
      %v2850 = vadd.f32 0.0, %v2849
      %v2851 = vpop.f32.mrf.mxu0
      %v2852 = vpop.f32.mrf.mxu0
      %v2853 = vadd.f32 0.0, %v2852
      %v2854 = vpop.f32.mrf.mxu0
      %2855 = vdwg.mxu0
      %v2856 = vadd.f32 %v2642, %v2730
      %v2857 = vadd.f32 %v2643, %v2733
      %v2858 = vadd.f32 %v2644, %v2738
      %v2859 = vadd.f32 %v2645, %v2741
      %v2860 = vadd.f32 %v2646, %v2746
      %v2861 = vadd.f32 %v2647, %v2749
      %v2862 = vadd.f32 %v2648, %v2754
      %v2863 = vadd.f32 %v2649, %v2757
      %v2864 = vadd.f32 %v2650, %v2762
      %v2865 = vadd.f32 %v2651, %v2765
      %v2866 = vadd.f32 %v2652, %v2770
      %v2867 = vadd.f32 %v2653, %v2773
      %v2868 = vadd.f32 %v2654, %v2778
      %v2869 = vadd.f32 %v2655, %v2781
      %v2870 = vadd.f32 %v2656, %v2786
      %v2871 = vadd.f32 %v2657, %v2789
      %v2872 = vadd.f32 %v2658, %v2794
      %v2873 = vadd.f32 %v2659, %v2797
      %v2874 = vadd.f32 %v2660, %v2802
      %v2875 = vadd.f32 %v2661, %v2805
      %v2876 = vadd.f32 %v2662, %v2810
      %v2877 = vadd.f32 %v2663, %v2813
      %v2878 = vadd.f32 %v2664, %v2818
      %v2879 = vadd.f32 %v2665, %v2821
      %v2880 = vadd.f32 %v2666, %v2826
      %v2881 = vadd.f32 %v2667, %v2829
      %v2882 = vadd.f32 %v2668, %v2834
      %v2883 = vadd.f32 %v2669, %v2837
      %v2884 = vadd.f32 %v2670, %v2842
      %v2885 = vadd.f32 %v2671, %v2845
      %v2886 = vadd.f32 %v2672, %v2850
      %v2887 = vadd.f32 %v2673, %v2853
      %v2891 = vrot.slane %v2216, 5
      %v2892 = vrot.slane %v2891, 4
      %v2893 = vrot.slane %v1060, 5
      %v2894 = vsel %vm2267, %v2892, %v2893
      %v2895 = vrot.slane %v2893, 4
      %v2896 = vrot.slane %v1061, 5
      %v2897 = vsel %vm2267, %v2895, %v2896
      %s2898 = scalar_lea.vmem %s1, 32
      %v2899 = vld [vmem:[%s2898] sm:$0xf]
      %v2900 = vunpack.c.l.b16 %v2894
      %v2901 = vunpack.c.l.b16 %v2897
      %v2902 = vpack.c.b16 %v2901, %v2900
      %v2904 = vsel %vm350, %v2902, 0
      %v2907 = vsel %vm399, %v2899, 0
      %2909 = vmatprep.subr.bf16.mxu0 0
      %2910 = vmatpush1.bf16.msra.mxu0 0
      %2911 = vmatprep.subr.bf16.mxu0 0
      %2912 = vmatpush1.bf16.msra.mxu0 0
      %2913 = vmatprep.subr.bf16.mxu0 0
      %2914 = vmatpush1.bf16.msra.mxu0 0
      %2915 = vmatprep.subr.bf16.mxu0 0
      %2916 = vmatpush1.bf16.msra.mxu0 0
      %2917 = vmatprep.subr.bf16.mxu0 0
      %2918 = vmatpush1.bf16.msra.mxu0 0
      %2919 = vmatprep.subr.bf16.mxu0 0
      %2920 = vmatpush1.bf16.msra.mxu0 0
      %2921 = vmatprep.subr.bf16.mxu0 0
      %2922 = vmatpush1.bf16.msra.mxu0 0
      %2923 = vmatprep.subr.bf16.mxu0 0
      %2924 = vmatpush1.bf16.msra.mxu0 %v2907
      %2925 = vmatprep.subr.bf16.mxu0 0
      %2926 = vmatpush2.bf16.msra.mxu0 0
      %2927 = vmatprep.subr.bf16.mxu0 0
      %2928 = vmatpush2.bf16.msra.mxu0 0
      %2929 = vmatprep.subr.bf16.mxu0 0
      %2930 = vmatpush2.bf16.msra.mxu0 0
      %2931 = vmatprep.subr.bf16.mxu0 0
      %2932 = vmatpush2.bf16.msra.mxu0 0
      %2933 = vmatprep.subr.bf16.mxu0 0
      %2934 = vmatpush2.bf16.msra.mxu0 0
      %2935 = vmatprep.subr.bf16.mxu0 0
      %2936 = vmatpush2.bf16.msra.mxu0 0
      %2937 = vmatprep.subr.bf16.mxu0 0
      %2938 = vmatpush2.bf16.msra.mxu0 0
      %2939 = vmatprep.subr.bf16.mxu0 0
      %2940 = vmatpush2.bf16.msra.mxu0 0
      %2941 = vmatprep.mubr.bf16.mxu0 0
      %2942 = vmatmul.mubr.bf16.gmra.mxu0 %v2437
      %v2943 = vpop.f32.mrf.mxu0
      %v2944 = vadd.f32 0.0, %v2943
      %v2945 = vpop.f32.mrf.mxu0
      %v2946 = vpop.f32.mrf.mxu0
      %v2947 = vadd.f32 0.0, %v2946
      %v2948 = vpop.f32.mrf.mxu0
      %2949 = vmatprep.mubr.bf16.mxu0 0
      %2950 = vmatmul.mubr.bf16.gmra.mxu0 %v2440
      %v2951 = vpop.f32.mrf.mxu0
      %v2952 = vadd.f32 0.0, %v2951
      %v2953 = vpop.f32.mrf.mxu0
      %v2954 = vpop.f32.mrf.mxu0
      %v2955 = vadd.f32 0.0, %v2954
      %v2956 = vpop.f32.mrf.mxu0
      %2957 = vmatprep.mubr.bf16.mxu0 0
      %2958 = vmatmul.mubr.bf16.gmra.mxu0 %v2443
      %v2959 = vpop.f32.mrf.mxu0
      %v2960 = vadd.f32 0.0, %v2959
      %v2961 = vpop.f32.mrf.mxu0
      %v2962 = vpop.f32.mrf.mxu0
      %v2963 = vadd.f32 0.0, %v2962
      %v2964 = vpop.f32.mrf.mxu0
      %2965 = vmatprep.mubr.bf16.mxu0 0
      %2966 = vmatmul.mubr.bf16.gmra.mxu0 %v2446
      %v2967 = vpop.f32.mrf.mxu0
      %v2968 = vadd.f32 0.0, %v2967
      %v2969 = vpop.f32.mrf.mxu0
      %v2970 = vpop.f32.mrf.mxu0
      %v2971 = vadd.f32 0.0, %v2970
      %v2972 = vpop.f32.mrf.mxu0
      %2973 = vmatprep.mubr.bf16.mxu0 0
      %2974 = vmatmul.mubr.bf16.gmra.mxu0 %v2449
      %v2975 = vpop.f32.mrf.mxu0
      %v2976 = vadd.f32 0.0, %v2975
      %v2977 = vpop.f32.mrf.mxu0
      %v2978 = vpop.f32.mrf.mxu0
      %v2979 = vadd.f32 0.0, %v2978
      %v2980 = vpop.f32.mrf.mxu0
      %2981 = vmatprep.mubr.bf16.mxu0 0
      %2982 = vmatmul.mubr.bf16.gmra.mxu0 %v2452
      %v2983 = vpop.f32.mrf.mxu0
      %v2984 = vadd.f32 0.0, %v2983
      %v2985 = vpop.f32.mrf.mxu0
      %v2986 = vpop.f32.mrf.mxu0
      %v2987 = vadd.f32 0.0, %v2986
      %v2988 = vpop.f32.mrf.mxu0
      %2989 = vmatprep.mubr.bf16.mxu0 0
      %2990 = vmatmul.mubr.bf16.gmra.mxu0 %v2455
      %v2991 = vpop.f32.mrf.mxu0
      %v2992 = vadd.f32 0.0, %v2991
      %v2993 = vpop.f32.mrf.mxu0
      %v2994 = vpop.f32.mrf.mxu0
      %v2995 = vadd.f32 0.0, %v2994
      %v2996 = vpop.f32.mrf.mxu0
      %2997 = vmatprep.mubr.bf16.mxu0 0
      %2998 = vmatmul.mubr.bf16.gmra.mxu0 %v2458
      %v2999 = vpop.f32.mrf.mxu0
      %v3000 = vadd.f32 0.0, %v2999
      %v3001 = vpop.f32.mrf.mxu0
      %v3002 = vpop.f32.mrf.mxu0
      %v3003 = vadd.f32 0.0, %v3002
      %v3004 = vpop.f32.mrf.mxu0
      %3005 = vmatprep.mubr.bf16.mxu0 0
      %3006 = vmatmul.mubr.bf16.gmra.mxu0 %v2461
      %v3007 = vpop.f32.mrf.mxu0
      %v3008 = vadd.f32 0.0, %v3007
      %v3009 = vpop.f32.mrf.mxu0
      %v3010 = vpop.f32.mrf.mxu0
      %v3011 = vadd.f32 0.0, %v3010
      %v3012 = vpop.f32.mrf.mxu0
      %3013 = vmatprep.mubr.bf16.mxu0 0
      %3014 = vmatmul.mubr.bf16.gmra.mxu0 %v2464
      %v3015 = vpop.f32.mrf.mxu0
      %v3016 = vadd.f32 0.0, %v3015
      %v3017 = vpop.f32.mrf.mxu0
      %v3018 = vpop.f32.mrf.mxu0
      %v3019 = vadd.f32 0.0, %v3018
      %v3020 = vpop.f32.mrf.mxu0
      %3021 = vmatprep.mubr.bf16.mxu0 0
      %3022 = vmatmul.mubr.bf16.gmra.mxu0 %v2467
      %v3023 = vpop.f32.mrf.mxu0
      %v3024 = vadd.f32 0.0, %v3023
      %v3025 = vpop.f32.mrf.mxu0
      %v3026 = vpop.f32.mrf.mxu0
      %v3027 = vadd.f32 0.0, %v3026
      %v3028 = vpop.f32.mrf.mxu0
      %3029 = vmatprep.mubr.bf16.mxu0 0
      %3030 = vmatmul.mubr.bf16.gmra.mxu0 %v2470
      %v3031 = vpop.f32.mrf.mxu0
      %v3032 = vadd.f32 0.0, %v3031
      %v3033 = vpop.f32.mrf.mxu0
      %v3034 = vpop.f32.mrf.mxu0
      %v3035 = vadd.f32 0.0, %v3034
      %v3036 = vpop.f32.mrf.mxu0
      %3037 = vmatprep.mubr.bf16.mxu0 0
      %3038 = vmatmul.mubr.bf16.gmra.mxu0 %v2473
      %v3039 = vpop.f32.mrf.mxu0
      %v3040 = vadd.f32 0.0, %v3039
      %v3041 = vpop.f32.mrf.mxu0
      %v3042 = vpop.f32.mrf.mxu0
      %v3043 = vadd.f32 0.0, %v3042
      %v3044 = vpop.f32.mrf.mxu0
      %3045 = vmatprep.mubr.bf16.mxu0 0
      %3046 = vmatmul.mubr.bf16.gmra.mxu0 %v2476
      %v3047 = vpop.f32.mrf.mxu0
      %v3048 = vadd.f32 0.0, %v3047
      %v3049 = vpop.f32.mrf.mxu0
      %v3050 = vpop.f32.mrf.mxu0
      %v3051 = vadd.f32 0.0, %v3050
      %v3052 = vpop.f32.mrf.mxu0
      %3053 = vmatprep.mubr.bf16.mxu0 0
      %3054 = vmatmul.mubr.bf16.gmra.mxu0 %v2690
      %v3055 = vpop.f32.mrf.mxu0
      %v3056 = vadd.f32 0.0, %v3055
      %v3057 = vpop.f32.mrf.mxu0
      %v3058 = vpop.f32.mrf.mxu0
      %v3059 = vadd.f32 0.0, %v3058
      %v3060 = vpop.f32.mrf.mxu0
      %3061 = vmatprep.mubr.bf16.mxu0 0
      %3062 = vmatmul.mubr.bf16.gmra.mxu0 %v2904
      %v3063 = vpop.f32.mrf.mxu0
      %v3064 = vadd.f32 0.0, %v3063
      %v3065 = vpop.f32.mrf.mxu0
      %v3066 = vpop.f32.mrf.mxu0
      %v3067 = vadd.f32 0.0, %v3066
      %v3068 = vpop.f32.mrf.mxu0
      %3069 = vdwg.mxu0
      %v3070 = vadd.f32 %v2856, %v2944
      %v3071 = vadd.f32 %v2857, %v2947
      %v3072 = vadd.f32 %v2858, %v2952
      %v3073 = vadd.f32 %v2859, %v2955
      %v3074 = vadd.f32 %v2860, %v2960
      %v3075 = vadd.f32 %v2861, %v2963
      %v3076 = vadd.f32 %v2862, %v2968
      %v3077 = vadd.f32 %v2863, %v2971
      %v3078 = vadd.f32 %v2864, %v2976
      %v3079 = vadd.f32 %v2865, %v2979
      %v3080 = vadd.f32 %v2866, %v2984
      %v3081 = vadd.f32 %v2867, %v2987
      %v3082 = vadd.f32 %v2868, %v2992
      %v3083 = vadd.f32 %v2869, %v2995
      %v3084 = vadd.f32 %v2870, %v3000
      %v3085 = vadd.f32 %v2871, %v3003
      %v3086 = vadd.f32 %v2872, %v3008
      %v3087 = vadd.f32 %v2873, %v3011
      %v3088 = vadd.f32 %v2874, %v3016
      %v3089 = vadd.f32 %v2875, %v3019
      %v3090 = vadd.f32 %v2876, %v3024
      %v3091 = vadd.f32 %v2877, %v3027
      %v3092 = vadd.f32 %v2878, %v3032
      %v3093 = vadd.f32 %v2879, %v3035
      %v3094 = vadd.f32 %v2880, %v3040
      %v3095 = vadd.f32 %v2881, %v3043
      %v3096 = vadd.f32 %v2882, %v3048
      %v3097 = vadd.f32 %v2883, %v3051
      %v3098 = vadd.f32 %v2884, %v3056
      %v3099 = vadd.f32 %v2885, %v3059
      %v3100 = vadd.f32 %v2886, %v3064
      %v3101 = vadd.f32 %v2887, %v3067
      %v3102 = vmax.f32 %v3070, 0.0
      %v3103 = vmax.f32 %v3071, 0.0
      %v3104 = vmax.f32 %v3072, 0.0
      %v3105 = vmax.f32 %v3073, 0.0
      %v3106 = vmax.f32 %v3074, 0.0
      %v3107 = vmax.f32 %v3075, 0.0
      %v3108 = vmax.f32 %v3076, 0.0
      %v3109 = vmax.f32 %v3077, 0.0
      %v3110 = vmax.f32 %v3078, 0.0
      %v3111 = vmax.f32 %v3079, 0.0
      %v3112 = vmax.f32 %v3080, 0.0
      %v3113 = vmax.f32 %v3081, 0.0
      %v3114 = vmax.f32 %v3082, 0.0
      %v3115 = vmax.f32 %v3083, 0.0
      %v3116 = vmax.f32 %v3084, 0.0
      %v3117 = vmax.f32 %v3085, 0.0
      %v3118 = vmax.f32 %v3086, 0.0
      %v3119 = vmax.f32 %v3087, 0.0
      %v3120 = vmax.f32 %v3088, 0.0
      %v3121 = vmax.f32 %v3089, 0.0
      %v3122 = vmax.f32 %v3090, 0.0
      %v3123 = vmax.f32 %v3091, 0.0
      %v3124 = vmax.f32 %v3092, 0.0
      %v3125 = vmax.f32 %v3093, 0.0
      %v3126 = vmax.f32 %v3094, 0.0
      %v3127 = vmax.f32 %v3095, 0.0
      %v3128 = vmax.f32 %v3096, 0.0
      %v3129 = vmax.f32 %v3097, 0.0
      %v3130 = vmax.f32 %v3098, 0.0
      %v3131 = vmax.f32 %v3099, 0.0
      %v3132 = vmax.f32 %v3100, 0.0
      %v3133 = vmax.f32 %v3101, 0.0
      %vm3134 = vcmask 31744
      %3135 = vst.msk [vmem:[#allocation2] sm:$0xff] %vm3134, 0.0
      %3136 = vst.msk [vmem:[#allocation2 + $0x8] sm:$0xff] %vm3134, 0.0
      %vm3137 = vcmask 25600
      %3138 = vst.msk [vmem:[#allocation2 + $0x10] sm:$0x3] %vm3137, 0.0
      %3139 = vst.msk [vmem:[#allocation2 + $0x18] sm:$0xff] %vm3134, 0.0
      %3140 = vst.msk [vmem:[#allocation2 + $0x20] sm:$0xff] %vm3134, 0.0
      %3141 = vst.msk [vmem:[#allocation2 + $0x28] sm:$0x3] %vm3137, 0.0
      %3142 = vst.msk [vmem:[#allocation2 + $0x30] sm:$0xff] %vm3134, 0.0
      %3143 = vst.msk [vmem:[#allocation2 + $0x38] sm:$0xff] %vm3134, 0.0
      %3144 = vst.msk [vmem:[#allocation2 + $0x40] sm:$0x3] %vm3137, 0.0
      %3145 = vst.msk [vmem:[#allocation2 + $0x48] sm:$0xff] %vm3134, 0.0
      %3146 = vst.msk [vmem:[#allocation2 + $0x50] sm:$0xff] %vm3134, 0.0
      %3147 = vst.msk [vmem:[#allocation2 + $0x58] sm:$0x3] %vm3137, 0.0
      %3148 = vst.msk [vmem:[#allocation2 + $0x60] sm:$0xff] %vm3134, 0.0
      %3149 = vst.msk [vmem:[#allocation2 + $0x68] sm:$0xff] %vm3134, 0.0
      %3150 = vst.msk [vmem:[#allocation2 + $0x70] sm:$0x3] %vm3137, 0.0
      %3151 = vst.msk [vmem:[#allocation2 + $0x78] sm:$0xff] %vm3134, 0.0
      %3152 = vst.msk [vmem:[#allocation2 + $0x80] sm:$0xff] %vm3134, 0.0
      %3153 = vst.msk [vmem:[#allocation2 + $0x88] sm:$0x3] %vm3137, 0.0
      %3154 = vst.msk [vmem:[#allocation2 + $0x90] sm:$0xff] %vm3134, 0.0
      %3155 = vst.msk [vmem:[#allocation2 + $0x98] sm:$0xff] %vm3134, 0.0
      %3156 = vst.msk [vmem:[#allocation2 + $0xa0] sm:$0x3] %vm3137, 0.0
      %3157 = vst.msk [vmem:[#allocation2 + $0xa8] sm:$0xff] %vm3134, 0.0
      %3158 = vst.msk [vmem:[#allocation2 + $0xb0] sm:$0xff] %vm3134, 0.0
      %3159 = vst.msk [vmem:[#allocation2 + $0xb8] sm:$0x3] %vm3137, 0.0
      %3160 = vst.msk [vmem:[#allocation2 + $0xc0] sm:$0xff] %vm3134, 0.0
      %3161 = vst.msk [vmem:[#allocation2 + $0xc8] sm:$0xff] %vm3134, 0.0
      %3162 = vst.msk [vmem:[#allocation2 + $0xd0] sm:$0x3] %vm3137, 0.0
      %3163 = vst.msk [vmem:[#allocation2 + $0xd8] sm:$0xff] %vm3134, 0.0
      %3164 = vst.msk [vmem:[#allocation2 + $0xe0] sm:$0xff] %vm3134, 0.0
      %3165 = vst.msk [vmem:[#allocation2 + $0xe8] sm:$0x3] %vm3137, 0.0
      %3166 = vst.msk [vmem:[#allocation2 + $0xf0] sm:$0xff] %vm3134, 0.0
      %3167 = vst.msk [vmem:[#allocation2 + $0xf8] sm:$0xff] %vm3134, 0.0
      %3168 = vst.msk [vmem:[#allocation2 + $0x100] sm:$0x3] %vm3137, 0.0
      %3169 = vst.msk [vmem:[#allocation2 + $0x108] sm:$0xff] %vm3134, 0.0
      %3170 = vst.msk [vmem:[#allocation2 + $0x110] sm:$0xff] %vm3134, 0.0
      %3171 = vst.msk [vmem:[#allocation2 + $0x118] sm:$0x3] %vm3137, 0.0
      %3172 = vst.msk [vmem:[#allocation2 + $0x120] sm:$0xff] %vm3134, 0.0
      %3173 = vst.msk [vmem:[#allocation2 + $0x128] sm:$0xff] %vm3134, 0.0
      %3174 = vst.msk [vmem:[#allocation2 + $0x130] sm:$0x3] %vm3137, 0.0
      %3175 = vst.msk [vmem:[#allocation2 + $0x138] sm:$0xff] %vm3134, 0.0
      %3176 = vst.msk [vmem:[#allocation2 + $0x140] sm:$0xff] %vm3134, 0.0
      %3177 = vst.msk [vmem:[#allocation2 + $0x148] sm:$0x3] %vm3137, 0.0
      %3178 = vst.msk [vmem:[#allocation2 + $0x150] sm:$0xff] %vm3134, 0.0
      %3179 = vst.msk [vmem:[#allocation2 + $0x158] sm:$0xff] %vm3134, 0.0
      %3180 = vst.msk [vmem:[#allocation2 + $0x160] sm:$0x3] %vm3137, 0.0
      %3181 = vst.msk [vmem:[#allocation2 + $0x168] sm:$0xff] %vm3134, 0.0
      %3182 = vst.msk [vmem:[#allocation2 + $0x170] sm:$0xff] %vm3134, 0.0
      %3183 = vst.msk [vmem:[#allocation2 + $0x178] sm:$0x3] %vm3137, 0.0
      %3184 = vst.msk [vmem:[#allocation2 + $0x180] sm:$0xff] %vm3134, 0.0
      %3185 = vst.msk [vmem:[#allocation2 + $0x188] sm:$0xff] %vm3134, 0.0
      %3186 = vst.msk [vmem:[#allocation2 + $0x190] sm:$0x3] %vm3137, 0.0
      %3187 = vst.msk [vmem:[#allocation2 + $0x198] sm:$0xff] %vm3134, 0.0
      %3188 = vst.msk [vmem:[#allocation2 + $0x1a0] sm:$0xff] %vm3134, 0.0
      %3189 = vst.msk [vmem:[#allocation2 + $0x1a8] sm:$0x3] %vm3137, 0.0
      %s3190 = scalar_lea.vmem [#allocation2], 24
      %3191 = vst.msk [vmem:[%s3190 + $0x1] sm:$0xff] %vm3134, %v3102
      %3192 = vst.msk [vmem:[%s3190 + $0x9] sm:$0xff] %vm3134, %v3103
      %3193 = vst.msk [vmem:[%s3190 + $0x19] sm:$0xff] %vm3134, %v3104
      %3194 = vst.msk [vmem:[%s3190 + $0x21] sm:$0xff] %vm3134, %v3105
      %3195 = vst.msk [vmem:[%s3190 + $0x31] sm:$0xff] %vm3134, %v3106
      %3196 = vst.msk [vmem:[%s3190 + $0x39] sm:$0xff] %vm3134, %v3107
      %3197 = vst.msk [vmem:[%s3190 + $0x49] sm:$0xff] %vm3134, %v3108
      %3198 = vst.msk [vmem:[%s3190 + $0x51] sm:$0xff] %vm3134, %v3109
      %3199 = vst.msk [vmem:[%s3190 + $0x61] sm:$0xff] %vm3134, %v3110
      %3200 = vst.msk [vmem:[%s3190 + $0x69] sm:$0xff] %vm3134, %v3111
      %3201 = vst.msk [vmem:[%s3190 + $0x79] sm:$0xff] %vm3134, %v3112
      %3202 = vst.msk [vmem:[%s3190 + $0x81] sm:$0xff] %vm3134, %v3113
      %3203 = vst.msk [vmem:[%s3190 + $0x91] sm:$0xff] %vm3134, %v3114
      %3204 = vst.msk [vmem:[%s3190 + $0x99] sm:$0xff] %vm3134, %v3115
      %3205 = vst.msk [vmem:[%s3190 + $0xa9] sm:$0xff] %vm3134, %v3116
      %3206 = vst.msk [vmem:[%s3190 + $0xb1] sm:$0xff] %vm3134, %v3117
      %3207 = vst.msk [vmem:[%s3190 + $0xc1] sm:$0xff] %vm3134, %v3118
      %3208 = vst.msk [vmem:[%s3190 + $0xc9] sm:$0xff] %vm3134, %v3119
      %3209 = vst.msk [vmem:[%s3190 + $0xd9] sm:$0xff] %vm3134, %v3120
      %3210 = vst.msk [vmem:[%s3190 + $0xe1] sm:$0xff] %vm3134, %v3121
      %3211 = vst.msk [vmem:[%s3190 + $0xf1] sm:$0xff] %vm3134, %v3122
      %3212 = vst.msk [vmem:[%s3190 + $0xf9] sm:$0xff] %vm3134, %v3123
      %3213 = vst.msk [vmem:[%s3190 + $0x109] sm:$0xff] %vm3134, %v3124
      %3214 = vst.msk [vmem:[%s3190 + $0x111] sm:$0xff] %vm3134, %v3125
      %3215 = vst.msk [vmem:[%s3190 + $0x121] sm:$0xff] %vm3134, %v3126
      %3216 = vst.msk [vmem:[%s3190 + $0x129] sm:$0xff] %vm3134, %v3127
      %3217 = vst.msk [vmem:[%s3190 + $0x139] sm:$0xff] %vm3134, %v3128
      %3218 = vst.msk [vmem:[%s3190 + $0x141] sm:$0xff] %vm3134, %v3129
      %3219 = vst.msk [vmem:[%s3190 + $0x151] sm:$0xff] %vm3134, %v3130
      %3220 = vst.msk [vmem:[%s3190 + $0x159] sm:$0xff] %vm3134, %v3131
      %3221 = vst.msk [vmem:[%s3190 + $0x169] sm:$0xff] %vm3134, %v3132
      %3222 = vst.msk [vmem:[%s3190 + $0x171] sm:$0xff] %vm3134, %v3133
      %v3223 = vld [vmem:[%s4] sm:$0xf]
      %3225 = vset.pattern.permute.xlu0 0
      %3226 = vperm.xlu0 %3225, %v3223
      %v3227 = vpop.permute.xlu0 %3226
      %v3229 = vld [vmem:[#allocation2] sm:$0xff]
      %v3230 = vld [vmem:[#allocation2 + $0x8] sm:$0xff]
      %v3231 = vld [vmem:[#allocation2 + $0x18] sm:$0xff]
      %v3232 = vld [vmem:[#allocation2 + $0x20] sm:$0xff]
      %v3233 = vld [vmem:[#allocation2 + $0x30] sm:$0xff]
      %v3234 = vld [vmem:[#allocation2 + $0x38] sm:$0xff]
      %v3235 = vld [vmem:[#allocation2 + $0x48] sm:$0xff]
      %v3236 = vld [vmem:[#allocation2 + $0x50] sm:$0xff]
      %v3237 = vld [vmem:[#allocation2 + $0x60] sm:$0xff]
      %v3238 = vld [vmem:[#allocation2 + $0x68] sm:$0xff]
      %v3239 = vld [vmem:[#allocation2 + $0x78] sm:$0xff]
      %v3240 = vld [vmem:[#allocation2 + $0x80] sm:$0xff]
      %v3241 = vld [vmem:[#allocation2 + $0x90] sm:$0xff]
      %v3242 = vld [vmem:[#allocation2 + $0x98] sm:$0xff]
      %v3243 = vld [vmem:[#allocation2 + $0xa8] sm:$0xff]
      %v3244 = vld [vmem:[#allocation2 + $0xb0] sm:$0xff]
      %v3245 = vld [vmem:[#allocation2 + $0xc0] sm:$0xff]
      %v3246 = vld [vmem:[#allocation2 + $0xc8] sm:$0xff]
      %v3247 = vld [vmem:[#allocation2 + $0xd8] sm:$0xff]
      %v3248 = vld [vmem:[#allocation2 + $0xe0] sm:$0xff]
      %v3249 = vld [vmem:[#allocation2 + $0xf0] sm:$0xff]
      %v3250 = vld [vmem:[#allocation2 + $0xf8] sm:$0xff]
      %v3251 = vld [vmem:[#allocation2 + $0x108] sm:$0xff]
      %v3252 = vld [vmem:[#allocation2 + $0x110] sm:$0xff]
      %v3253 = vld [vmem:[#allocation2 + $0x120] sm:$0xff]
      %v3254 = vld [vmem:[#allocation2 + $0x128] sm:$0xff]
      %v3255 = vld [vmem:[#allocation2 + $0x138] sm:$0xff]
      %v3256 = vld [vmem:[#allocation2 + $0x140] sm:$0xff]
      %v3257 = vld [vmem:[#allocation2 + $0x150] sm:$0xff]
      %v3258 = vld [vmem:[#allocation2 + $0x158] sm:$0xff]
      %v3259 = vld [vmem:[#allocation2 + $0x168] sm:$0xff]
      %v3260 = vld [vmem:[#allocation2 + $0x170] sm:$0xff]
      %v3261 = vld [vmem:[#allocation2 + $0x180] sm:$0xff]
      %v3262 = vld [vmem:[#allocation2 + $0x188] sm:$0xff]
      %v3263 = vld [vmem:[#allocation2 + $0x198] sm:$0xff]
      %v3264 = vld [vmem:[#allocation2 + $0x1a0] sm:$0xff]
      %v3265 = vld [vmem:[%s3] sm:$0xf]
      %v3267 = vsel %vm3134, %v3265, 0
      %v3270 = vsel %vm3134, %v3229, 0
      %v3273 = vsel %vm3134, %v3230, 0
      %v3276 = vsel %vm3134, %v3231, 0
      %v3279 = vsel %vm3134, %v3232, 0
      %v3282 = vsel %vm3134, %v3233, 0
      %v3285 = vsel %vm3134, %v3234, 0
      %v3288 = vsel %vm3134, %v3235, 0
      %v3291 = vsel %vm3134, %v3236, 0
      %v3294 = vsel %vm3134, %v3237, 0
      %v3297 = vsel %vm3134, %v3238, 0
      %v3300 = vsel %vm3134, %v3239, 0
      %v3303 = vsel %vm3134, %v3240, 0
      %v3306 = vsel %vm3134, %v3241, 0
      %v3309 = vsel %vm3134, %v3242, 0
      %v3312 = vsel %vm3134, %v3243, 0
      %v3315 = vsel %vm3134, %v3244, 0
      %v3318 = vsel %vm3134, %v3245, 0
      %v3321 = vsel %vm3134, %v3246, 0
      %v3324 = vsel %vm3134, %v3247, 0
      %v3327 = vsel %vm3134, %v3248, 0
      %v3330 = vsel %vm3134, %v3249, 0
      %v3333 = vsel %vm3134, %v3250, 0
      %v3336 = vsel %vm3134, %v3251, 0
      %v3339 = vsel %vm3134, %v3252, 0
      %v3342 = vsel %vm3134, %v3253, 0
      %v3345 = vsel %vm3134, %v3254, 0
      %v3348 = vsel %vm3134, %v3255, 0
      %v3351 = vsel %vm3134, %v3256, 0
      %v3354 = vsel %vm3134, %v3257, 0
      %v3357 = vsel %vm3134, %v3258, 0
      %v3360 = vsel %vm3134, %v3259, 0
      %v3363 = vsel %vm3134, %v3260, 0
      %3365 = vmatprep.subr.mxu0 0.0
      %3366 = vmatpush1.xpose.msra.mxu0 %v3315
      %3367 = vmatprep.subr.mxu0 0.0
      %3368 = vmatpush1.xpose.msra.mxu0 %v3312
      %3369 = vmatprep.subr.mxu0 0.0
      %3370 = vmatpush1.xpose.msra.mxu0 %v3309
      %3371 = vmatprep.subr.mxu0 0.0
      %3372 = vmatpush1.xpose.msra.mxu0 %v3306
      %3373 = vmatprep.subr.mxu0 0.0
      %3374 = vmatpush1.xpose.msra.mxu0 %v3303
      %3375 = vmatprep.subr.mxu0 0.0
      %3376 = vmatpush1.xpose.msra.mxu0 %v3300
      %3377 = vmatprep.subr.mxu0 0.0
      %3378 = vmatpush1.xpose.msra.mxu0 %v3297
      %3379 = vmatprep.subr.mxu0 0.0
      %3380 = vmatpush1.xpose.msra.mxu0 %v3294
      %3381 = vmatprep.subr.mxu0 0.0
      %3382 = vmatpush1.xpose.msra.mxu0 %v3291
      %3383 = vmatprep.subr.mxu0 0.0
      %3384 = vmatpush1.xpose.msra.mxu0 %v3288
      %3385 = vmatprep.subr.mxu0 0.0
      %3386 = vmatpush1.xpose.msra.mxu0 %v3285
      %3387 = vmatprep.subr.mxu0 0.0
      %3388 = vmatpush1.xpose.msra.mxu0 %v3282
      %3389 = vmatprep.subr.mxu0 0.0
      %3390 = vmatpush1.xpose.msra.mxu0 %v3279
      %3391 = vmatprep.subr.mxu0 0.0
      %3392 = vmatpush1.xpose.msra.mxu0 %v3276
      %3393 = vmatprep.subr.mxu0 0.0
      %3394 = vmatpush1.xpose.msra.mxu0 %v3273
      %3395 = vmatprep.subr.mxu0 0.0
      %3396 = vmatpush1.xpose.msra.mxu0 %v3270
      %3397 = vmatprep.subr.mxu0 0.0
      %3398 = vmatpush2.xpose.msra.mxu0 %v3363
      %3399 = vmatprep.subr.mxu0 0.0
      %3400 = vmatpush2.xpose.msra.mxu0 %v3360
      %3401 = vmatprep.subr.mxu0 0.0
      %3402 = vmatpush2.xpose.msra.mxu0 %v3357
      %3403 = vmatprep.subr.mxu0 0.0
      %3404 = vmatpush2.xpose.msra.mxu0 %v3354
      %3405 = vmatprep.subr.mxu0 0.0
      %3406 = vmatpush2.xpose.msra.mxu0 %v3351
      %3407 = vmatprep.subr.mxu0 0.0
      %3408 = vmatpush2.xpose.msra.mxu0 %v3348
      %3409 = vmatprep.subr.mxu0 0.0
      %3410 = vmatpush2.xpose.msra.mxu0 %v3345
      %3411 = vmatprep.subr.mxu0 0.0
      %3412 = vmatpush2.xpose.msra.mxu0 %v3342
      %3413 = vmatprep.subr.mxu0 0.0
      %3414 = vmatpush2.xpose.msra.mxu0 %v3339
      %3415 = vmatprep.subr.mxu0 0.0
      %3416 = vmatpush2.xpose.msra.mxu0 %v3336
      %3417 = vmatprep.subr.mxu0 0.0
      %3418 = vmatpush2.xpose.msra.mxu0 %v3333
      %3419 = vmatprep.subr.mxu0 0.0
      %3420 = vmatpush2.xpose.msra.mxu0 %v3330
      %3421 = vmatprep.subr.mxu0 0.0
      %3422 = vmatpush2.xpose.msra.mxu0 %v3327
      %3423 = vmatprep.subr.mxu0 0.0
      %3424 = vmatpush2.xpose.msra.mxu0 %v3324
      %3425 = vmatprep.subr.mxu0 0.0
      %3426 = vmatpush2.xpose.msra.mxu0 %v3321
      %3427 = vmatprep.subr.mxu0 0.0
      %3428 = vmatpush2.xpose.msra.mxu0 %v3318
      %3429 = vmatprep.mubr.f32.mxu0 0.0
      %3430 = vmatmul.mubr.f32.gmra.mxu0 %v3267
      %v3431 = vpop.f32.mrf.mxu0
      %v3432 = vadd.f32 0.0, %v3431
      %v3433 = vpop.f32.mrf.mxu0
      %v3434 = vadd.f32 0.0, %v3433
      %3435 = vdwg.mxu0
      %v3436 = vadd.f32 %v3227, %v3432
      %v3437 = vadd.f32 %v3227, %v3434
      %s3438 = scalar_lea.vmem %s3, 12
      %v3439 = vld [vmem:[%s3438] sm:$0xf]
      %v3441 = vsel %vm3134, %v3439, 0
      %v3444 = vsel %vm3134, %v3261, 0
      %v3447 = vsel %vm3134, %v3262, 0
      %3449 = vmatprep.subr.mxu0 0.0
      %3450 = vmatpush1.xpose.msra.mxu0 %v3321
      %3451 = vmatprep.subr.mxu0 0.0
      %3452 = vmatpush1.xpose.msra.mxu0 %v3318
      %3453 = vmatprep.subr.mxu0 0.0
      %3454 = vmatpush1.xpose.msra.mxu0 %v3315
      %3455 = vmatprep.subr.mxu0 0.0
      %3456 = vmatpush1.xpose.msra.mxu0 %v3312
      %3457 = vmatprep.subr.mxu0 0.0
      %3458 = vmatpush1.xpose.msra.mxu0 %v3309
      %3459 = vmatprep.subr.mxu0 0.0
      %3460 = vmatpush1.xpose.msra.mxu0 %v3306
      %3461 = vmatprep.subr.mxu0 0.0
      %3462 = vmatpush1.xpose.msra.mxu0 %v3303
      %3463 = vmatprep.subr.mxu0 0.0
      %3464 = vmatpush1.xpose.msra.mxu0 %v3300
      %3465 = vmatprep.subr.mxu0 0.0
      %3466 = vmatpush1.xpose.msra.mxu0 %v3297
      %3467 = vmatprep.subr.mxu0 0.0
      %3468 = vmatpush1.xpose.msra.mxu0 %v3294
      %3469 = vmatprep.subr.mxu0 0.0
      %3470 = vmatpush1.xpose.msra.mxu0 %v3291
      %3471 = vmatprep.subr.mxu0 0.0
      %3472 = vmatpush1.xpose.msra.mxu0 %v3288
      %3473 = vmatprep.subr.mxu0 0.0
      %3474 = vmatpush1.xpose.msra.mxu0 %v3285
      %3475 = vmatprep.subr.mxu0 0.0
      %3476 = vmatpush1.xpose.msra.mxu0 %v3282
      %3477 = vmatprep.subr.mxu0 0.0
      %3478 = vmatpush1.xpose.msra.mxu0 %v3279
      %3479 = vmatprep.subr.mxu0 0.0
      %3480 = vmatpush1.xpose.msra.mxu0 %v3276
      %3481 = vmatprep.subr.mxu0 0.0
      %3482 = vmatpush2.xpose.msra.mxu0 %v3447
      %3483 = vmatprep.subr.mxu0 0.0
      %3484 = vmatpush2.xpose.msra.mxu0 %v3444
      %3485 = vmatprep.subr.mxu0 0.0
      %3486 = vmatpush2.xpose.msra.mxu0 %v3363
      %3487 = vmatprep.subr.mxu0 0.0
      %3488 = vmatpush2.xpose.msra.mxu0 %v3360
      %3489 = vmatprep.subr.mxu0 0.0
      %3490 = vmatpush2.xpose.msra.mxu0 %v3357
      %3491 = vmatprep.subr.mxu0 0.0
      %3492 = vmatpush2.xpose.msra.mxu0 %v3354
      %3493 = vmatprep.subr.mxu0 0.0
      %3494 = vmatpush2.xpose.msra.mxu0 %v3351
      %3495 = vmatprep.subr.mxu0 0.0
      %3496 = vmatpush2.xpose.msra.mxu0 %v3348
      %3497 = vmatprep.subr.mxu0 0.0
      %3498 = vmatpush2.xpose.msra.mxu0 %v3345
      %3499 = vmatprep.subr.mxu0 0.0
      %3500 = vmatpush2.xpose.msra.mxu0 %v3342
      %3501 = vmatprep.subr.mxu0 0.0
      %3502 = vmatpush2.xpose.msra.mxu0 %v3339
      %3503 = vmatprep.subr.mxu0 0.0
      %3504 = vmatpush2.xpose.msra.mxu0 %v3336
      %3505 = vmatprep.subr.mxu0 0.0
      %3506 = vmatpush2.xpose.msra.mxu0 %v3333
      %3507 = vmatprep.subr.mxu0 0.0
      %3508 = vmatpush2.xpose.msra.mxu0 %v3330
      %3509 = vmatprep.subr.mxu0 0.0
      %3510 = vmatpush2.xpose.msra.mxu0 %v3327
      %3511 = vmatprep.subr.mxu0 0.0
      %3512 = vmatpush2.xpose.msra.mxu0 %v3324
      %3513 = vmatprep.mubr.f32.mxu0 0.0
      %3514 = vmatmul.mubr.f32.gmra.mxu0 %v3441
      %v3515 = vpop.f32.mrf.mxu0
      %v3516 = vadd.f32 0.0, %v3515
      %v3517 = vpop.f32.mrf.mxu0
      %v3518 = vadd.f32 0.0, %v3517
      %3519 = vdwg.mxu0
      %v3520 = vadd.f32 %v3436, %v3516
      %v3521 = vadd.f32 %v3437, %v3518
      %s3522 = scalar_lea.vmem %s3, 24
      %v3523 = vld [vmem:[%s3522] sm:$0xf]
      %v3525 = vsel %vm3134, %v3523, 0
      %v3528 = vsel %vm3134, %v3263, 0
      %v3531 = vsel %vm3134, %v3264, 0
      %3533 = vmatprep.subr.mxu0 0.0
      %3534 = vmatpush1.xpose.msra.mxu0 %v3327
      %3535 = vmatprep.subr.mxu0 0.0
      %3536 = vmatpush1.xpose.msra.mxu0 %v3324
      %3537 = vmatprep.subr.mxu0 0.0
      %3538 = vmatpush1.xpose.msra.mxu0 %v3321
      %3539 = vmatprep.subr.mxu0 0.0
      %3540 = vmatpush1.xpose.msra.mxu0 %v3318
      %3541 = vmatprep.subr.mxu0 0.0
      %3542 = vmatpush1.xpose.msra.mxu0 %v3315
      %3543 = vmatprep.subr.mxu0 0.0
      %3544 = vmatpush1.xpose.msra.mxu0 %v3312
      %3545 = vmatprep.subr.mxu0 0.0
      %3546 = vmatpush1.xpose.msra.mxu0 %v3309
      %3547 = vmatprep.subr.mxu0 0.0
      %3548 = vmatpush1.xpose.msra.mxu0 %v3306
      %3549 = vmatprep.subr.mxu0 0.0
      %3550 = vmatpush1.xpose.msra.mxu0 %v3303
      %3551 = vmatprep.subr.mxu0 0.0
      %3552 = vmatpush1.xpose.msra.mxu0 %v3300
      %3553 = vmatprep.subr.mxu0 0.0
      %3554 = vmatpush1.xpose.msra.mxu0 %v3297
      %3555 = vmatprep.subr.mxu0 0.0
      %3556 = vmatpush1.xpose.msra.mxu0 %v3294
      %3557 = vmatprep.subr.mxu0 0.0
      %3558 = vmatpush1.xpose.msra.mxu0 %v3291
      %3559 = vmatprep.subr.mxu0 0.0
      %3560 = vmatpush1.xpose.msra.mxu0 %v3288
      %3561 = vmatprep.subr.mxu0 0.0
      %3562 = vmatpush1.xpose.msra.mxu0 %v3285
      %3563 = vmatprep.subr.mxu0 0.0
      %3564 = vmatpush1.xpose.msra.mxu0 %v3282
      %3565 = vmatprep.subr.mxu0 0.0
      %3566 = vmatpush2.xpose.msra.mxu0 %v3531
      %3567 = vmatprep.subr.mxu0 0.0
      %3568 = vmatpush2.xpose.msra.mxu0 %v3528
      %3569 = vmatprep.subr.mxu0 0.0
      %3570 = vmatpush2.xpose.msra.mxu0 %v3447
      %3571 = vmatprep.subr.mxu0 0.0
      %3572 = vmatpush2.xpose.msra.mxu0 %v3444
      %3573 = vmatprep.subr.mxu0 0.0
      %3574 = vmatpush2.xpose.msra.mxu0 %v3363
      %3575 = vmatprep.subr.mxu0 0.0
      %3576 = vmatpush2.xpose.msra.mxu0 %v3360
      %3577 = vmatprep.subr.mxu0 0.0
      %3578 = vmatpush2.xpose.msra.mxu0 %v3357
      %3579 = vmatprep.subr.mxu0 0.0
      %3580 = vmatpush2.xpose.msra.mxu0 %v3354
      %3581 = vmatprep.subr.mxu0 0.0
      %3582 = vmatpush2.xpose.msra.mxu0 %v3351
      %3583 = vmatprep.subr.mxu0 0.0
      %3584 = vmatpush2.xpose.msra.mxu0 %v3348
      %3585 = vmatprep.subr.mxu0 0.0
      %3586 = vmatpush2.xpose.msra.mxu0 %v3345
      %3587 = vmatprep.subr.mxu0 0.0
      %3588 = vmatpush2.xpose.msra.mxu0 %v3342
      %3589 = vmatprep.subr.mxu0 0.0
      %3590 = vmatpush2.xpose.msra.mxu0 %v3339
      %3591 = vmatprep.subr.mxu0 0.0
      %3592 = vmatpush2.xpose.msra.mxu0 %v3336
      %3593 = vmatprep.subr.mxu0 0.0
      %3594 = vmatpush2.xpose.msra.mxu0 %v3333
      %3595 = vmatprep.subr.mxu0 0.0
      %3596 = vmatpush2.xpose.msra.mxu0 %v3330
      %3597 = vmatprep.mubr.f32.mxu0 0.0
      %3598 = vmatmul.mubr.f32.gmra.mxu0 %v3525
      %v3599 = vpop.f32.mrf.mxu0
      %v3600 = vadd.f32 0.0, %v3599
      %v3601 = vpop.f32.mrf.mxu0
      %v3602 = vadd.f32 0.0, %v3601
      %3603 = vdwg.mxu0
      %v3604 = vadd.f32 %v3520, %v3600
      %v3605 = vadd.f32 %v3521, %v3602
      %v3606 = vld [vmem:[#allocation2 + $0x1] sm:$0xff]
      %v3607 = vld [vmem:[#allocation2 + $0x9] sm:$0xff]
      %v3608 = vld [vmem:[#allocation2 + $0x19] sm:$0xff]
      %v3609 = vld [vmem:[#allocation2 + $0x21] sm:$0xff]
      %v3610 = vld [vmem:[#allocation2 + $0x31] sm:$0xff]
      %v3611 = vld [vmem:[#allocation2 + $0x39] sm:$0xff]
      %v3612 = vld [vmem:[#allocation2 + $0x49] sm:$0xff]
      %v3613 = vld [vmem:[#allocation2 + $0x51] sm:$0xff]
      %v3614 = vld [vmem:[#allocation2 + $0x61] sm:$0xff]
      %v3615 = vld [vmem:[#allocation2 + $0x69] sm:$0xff]
      %v3616 = vld [vmem:[#allocation2 + $0x79] sm:$0xff]
      %v3617 = vld [vmem:[#allocation2 + $0x81] sm:$0xff]
      %v3618 = vld [vmem:[#allocation2 + $0x91] sm:$0xff]
      %v3619 = vld [vmem:[#allocation2 + $0x99] sm:$0xff]
      %v3620 = vld [vmem:[#allocation2 + $0xa9] sm:$0xff]
      %v3621 = vld [vmem:[#allocation2 + $0xb1] sm:$0xff]
      %v3622 = vld [vmem:[#allocation2 + $0xc1] sm:$0xff]
      %v3623 = vld [vmem:[#allocation2 + $0xc9] sm:$0xff]
      %v3624 = vld [vmem:[#allocation2 + $0xd9] sm:$0xff]
      %v3625 = vld [vmem:[#allocation2 + $0xe1] sm:$0xff]
      %v3626 = vld [vmem:[#allocation2 + $0xf1] sm:$0xff]
      %v3627 = vld [vmem:[#allocation2 + $0xf9] sm:$0xff]
      %v3628 = vld [vmem:[#allocation2 + $0x109] sm:$0xff]
      %v3629 = vld [vmem:[#allocation2 + $0x111] sm:$0xff]
      %v3630 = vld [vmem:[#allocation2 + $0x121] sm:$0xff]
      %v3631 = vld [vmem:[#allocation2 + $0x129] sm:$0xff]
      %v3632 = vld [vmem:[#allocation2 + $0x139] sm:$0xff]
      %v3633 = vld [vmem:[#allocation2 + $0x141] sm:$0xff]
      %v3634 = vld [vmem:[#allocation2 + $0x151] sm:$0xff]
      %v3635 = vld [vmem:[#allocation2 + $0x159] sm:$0xff]
      %v3636 = vld [vmem:[#allocation2 + $0x169] sm:$0xff]
      %v3637 = vld [vmem:[#allocation2 + $0x171] sm:$0xff]
      %v3638 = vld [vmem:[#allocation2 + $0x181] sm:$0xff]
      %v3639 = vld [vmem:[#allocation2 + $0x189] sm:$0xff]
      %v3640 = vld [vmem:[#allocation2 + $0x199] sm:$0xff]
      %v3641 = vld [vmem:[#allocation2 + $0x1a1] sm:$0xff]
      %s3642 = scalar_lea.vmem %s3, 4
      %v3643 = vld [vmem:[%s3642] sm:$0xf]
      %v3645 = vsel %vm3134, %v3643, 0
      %v3648 = vsel %vm3134, %v3606, 0
      %v3651 = vsel %vm3134, %v3607, 0
      %v3654 = vsel %vm3134, %v3608, 0
      %v3657 = vsel %vm3134, %v3609, 0
      %v3660 = vsel %vm3134, %v3610, 0
      %v3663 = vsel %vm3134, %v3611, 0
      %v3666 = vsel %vm3134, %v3612, 0
      %v3669 = vsel %vm3134, %v3613, 0
      %v3672 = vsel %vm3134, %v3614, 0
      %v3675 = vsel %vm3134, %v3615, 0
      %v3678 = vsel %vm3134, %v3616, 0
      %v3681 = vsel %vm3134, %v3617, 0
      %v3684 = vsel %vm3134, %v3618, 0
      %v3687 = vsel %vm3134, %v3619, 0
      %v3690 = vsel %vm3134, %v3620, 0
      %v3693 = vsel %vm3134, %v3621, 0
      %v3696 = vsel %vm3134, %v3622, 0
      %v3699 = vsel %vm3134, %v3623, 0
      %v3702 = vsel %vm3134, %v3624, 0
      %v3705 = vsel %vm3134, %v3625, 0
      %v3708 = vsel %vm3134, %v3626, 0
      %v3711 = vsel %vm3134, %v3627, 0
      %v3714 = vsel %vm3134, %v3628, 0
      %v3717 = vsel %vm3134, %v3629, 0
      %v3720 = vsel %vm3134, %v3630, 0
      %v3723 = vsel %vm3134, %v3631, 0
      %v3726 = vsel %vm3134, %v3632, 0
      %v3729 = vsel %vm3134, %v3633, 0
      %v3732 = vsel %vm3134, %v3634, 0
      %v3735 = vsel %vm3134, %v3635, 0
      %v3738 = vsel %vm3134, %v3636, 0
      %v3741 = vsel %vm3134, %v3637, 0
      %3743 = vmatprep.subr.mxu0 0.0
      %3744 = vmatpush1.xpose.msra.mxu0 %v3693
      %3745 = vmatprep.subr.mxu0 0.0
      %3746 = vmatpush1.xpose.msra.mxu0 %v3690
      %3747 = vmatprep.subr.mxu0 0.0
      %3748 = vmatpush1.xpose.msra.mxu0 %v3687
      %3749 = vmatprep.subr.mxu0 0.0
      %3750 = vmatpush1.xpose.msra.mxu0 %v3684
      %3751 = vmatprep.subr.mxu0 0.0
      %3752 = vmatpush1.xpose.msra.mxu0 %v3681
      %3753 = vmatprep.subr.mxu0 0.0
      %3754 = vmatpush1.xpose.msra.mxu0 %v3678
      %3755 = vmatprep.subr.mxu0 0.0
      %3756 = vmatpush1.xpose.msra.mxu0 %v3675
      %3757 = vmatprep.subr.mxu0 0.0
      %3758 = vmatpush1.xpose.msra.mxu0 %v3672
      %3759 = vmatprep.subr.mxu0 0.0
      %3760 = vmatpush1.xpose.msra.mxu0 %v3669
      %3761 = vmatprep.subr.mxu0 0.0
      %3762 = vmatpush1.xpose.msra.mxu0 %v3666
      %3763 = vmatprep.subr.mxu0 0.0
      %3764 = vmatpush1.xpose.msra.mxu0 %v3663
      %3765 = vmatprep.subr.mxu0 0.0
      %3766 = vmatpush1.xpose.msra.mxu0 %v3660
      %3767 = vmatprep.subr.mxu0 0.0
      %3768 = vmatpush1.xpose.msra.mxu0 %v3657
      %3769 = vmatprep.subr.mxu0 0.0
      %3770 = vmatpush1.xpose.msra.mxu0 %v3654
      %3771 = vmatprep.subr.mxu0 0.0
      %3772 = vmatpush1.xpose.msra.mxu0 %v3651
      %3773 = vmatprep.subr.mxu0 0.0
      %3774 = vmatpush1.xpose.msra.mxu0 %v3648
      %3775 = vmatprep.subr.mxu0 0.0
      %3776 = vmatpush2.xpose.msra.mxu0 %v3741
      %3777 = vmatprep.subr.mxu0 0.0
      %3778 = vmatpush2.xpose.msra.mxu0 %v3738
      %3779 = vmatprep.subr.mxu0 0.0
      %3780 = vmatpush2.xpose.msra.mxu0 %v3735
      %3781 = vmatprep.subr.mxu0 0.0
      %3782 = vmatpush2.xpose.msra.mxu0 %v3732
      %3783 = vmatprep.subr.mxu0 0.0
      %3784 = vmatpush2.xpose.msra.mxu0 %v3729
      %3785 = vmatprep.subr.mxu0 0.0
      %3786 = vmatpush2.xpose.msra.mxu0 %v3726
      %3787 = vmatprep.subr.mxu0 0.0
      %3788 = vmatpush2.xpose.msra.mxu0 %v3723
      %3789 = vmatprep.subr.mxu0 0.0
      %3790 = vmatpush2.xpose.msra.mxu0 %v3720
      %3791 = vmatprep.subr.mxu0 0.0
      %3792 = vmatpush2.xpose.msra.mxu0 %v3717
      %3793 = vmatprep.subr.mxu0 0.0
      %3794 = vmatpush2.xpose.msra.mxu0 %v3714
      %3795 = vmatprep.subr.mxu0 0.0
      %3796 = vmatpush2.xpose.msra.mxu0 %v3711
      %3797 = vmatprep.subr.mxu0 0.0
      %3798 = vmatpush2.xpose.msra.mxu0 %v3708
      %3799 = vmatprep.subr.mxu0 0.0
      %3800 = vmatpush2.xpose.msra.mxu0 %v3705
      %3801 = vmatprep.subr.mxu0 0.0
      %3802 = vmatpush2.xpose.msra.mxu0 %v3702
      %3803 = vmatprep.subr.mxu0 0.0
      %3804 = vmatpush2.xpose.msra.mxu0 %v3699
      %3805 = vmatprep.subr.mxu0 0.0
      %3806 = vmatpush2.xpose.msra.mxu0 %v3696
      %3807 = vmatprep.mubr.f32.mxu0 0.0
      %3808 = vmatmul.mubr.f32.gmra.mxu0 %v3645
      %v3809 = vpop.f32.mrf.mxu0
      %v3810 = vadd.f32 0.0, %v3809
      %v3811 = vpop.f32.mrf.mxu0
      %v3812 = vadd.f32 0.0, %v3811
      %3813 = vdwg.mxu0
      %v3814 = vadd.f32 %v3604, %v3810
      %v3815 = vadd.f32 %v3605, %v3812
      %s3816 = scalar_lea.vmem %s3, 16
      %v3817 = vld [vmem:[%s3816] sm:$0xf]
      %v3819 = vsel %vm3134, %v3817, 0
      %v3822 = vsel %vm3134, %v3638, 0
      %v3825 = vsel %vm3134, %v3639, 0
      %3827 = vmatprep.subr.mxu0 0.0
      %3828 = vmatpush1.xpose.msra.mxu0 %v3699
      %3829 = vmatprep.subr.mxu0 0.0
      %3830 = vmatpush1.xpose.msra.mxu0 %v3696
      %3831 = vmatprep.subr.mxu0 0.0
      %3832 = vmatpush1.xpose.msra.mxu0 %v3693
      %3833 = vmatprep.subr.mxu0 0.0
      %3834 = vmatpush1.xpose.msra.mxu0 %v3690
      %3835 = vmatprep.subr.mxu0 0.0
      %3836 = vmatpush1.xpose.msra.mxu0 %v3687
      %3837 = vmatprep.subr.mxu0 0.0
      %3838 = vmatpush1.xpose.msra.mxu0 %v3684
      %3839 = vmatprep.subr.mxu0 0.0
      %3840 = vmatpush1.xpose.msra.mxu0 %v3681
      %3841 = vmatprep.subr.mxu0 0.0
      %3842 = vmatpush1.xpose.msra.mxu0 %v3678
      %3843 = vmatprep.subr.mxu0 0.0
      %3844 = vmatpush1.xpose.msra.mxu0 %v3675
      %3845 = vmatprep.subr.mxu0 0.0
      %3846 = vmatpush1.xpose.msra.mxu0 %v3672
      %3847 = vmatprep.subr.mxu0 0.0
      %3848 = vmatpush1.xpose.msra.mxu0 %v3669
      %3849 = vmatprep.subr.mxu0 0.0
      %3850 = vmatpush1.xpose.msra.mxu0 %v3666
      %3851 = vmatprep.subr.mxu0 0.0
      %3852 = vmatpush1.xpose.msra.mxu0 %v3663
      %3853 = vmatprep.subr.mxu0 0.0
      %3854 = vmatpush1.xpose.msra.mxu0 %v3660
      %3855 = vmatprep.subr.mxu0 0.0
      %3856 = vmatpush1.xpose.msra.mxu0 %v3657
      %3857 = vmatprep.subr.mxu0 0.0
      %3858 = vmatpush1.xpose.msra.mxu0 %v3654
      %3859 = vmatprep.subr.mxu0 0.0
      %3860 = vmatpush2.xpose.msra.mxu0 %v3825
      %3861 = vmatprep.subr.mxu0 0.0
      %3862 = vmatpush2.xpose.msra.mxu0 %v3822
      %3863 = vmatprep.subr.mxu0 0.0
      %3864 = vmatpush2.xpose.msra.mxu0 %v3741
      %3865 = vmatprep.subr.mxu0 0.0
      %3866 = vmatpush2.xpose.msra.mxu0 %v3738
      %3867 = vmatprep.subr.mxu0 0.0
      %3868 = vmatpush2.xpose.msra.mxu0 %v3735
      %3869 = vmatprep.subr.mxu0 0.0
      %3870 = vmatpush2.xpose.msra.mxu0 %v3732
      %3871 = vmatprep.subr.mxu0 0.0
      %3872 = vmatpush2.xpose.msra.mxu0 %v3729
      %3873 = vmatprep.subr.mxu0 0.0
      %3874 = vmatpush2.xpose.msra.mxu0 %v3726
      %3875 = vmatprep.subr.mxu0 0.0
      %3876 = vmatpush2.xpose.msra.mxu0 %v3723
      %3877 = vmatprep.subr.mxu0 0.0
      %3878 = vmatpush2.xpose.msra.mxu0 %v3720
      %3879 = vmatprep.subr.mxu0 0.0
      %3880 = vmatpush2.xpose.msra.mxu0 %v3717
      %3881 = vmatprep.subr.mxu0 0.0
      %3882 = vmatpush2.xpose.msra.mxu0 %v3714
      %3883 = vmatprep.subr.mxu0 0.0
      %3884 = vmatpush2.xpose.msra.mxu0 %v3711
      %3885 = vmatprep.subr.mxu0 0.0
      %3886 = vmatpush2.xpose.msra.mxu0 %v3708
      %3887 = vmatprep.subr.mxu0 0.0
      %3888 = vmatpush2.xpose.msra.mxu0 %v3705
      %3889 = vmatprep.subr.mxu0 0.0
      %3890 = vmatpush2.xpose.msra.mxu0 %v3702
      %3891 = vmatprep.mubr.f32.mxu0 0.0
      %3892 = vmatmul.mubr.f32.gmra.mxu0 %v3819
      %v3893 = vpop.f32.mrf.mxu0
      %v3894 = vadd.f32 0.0, %v3893
      %v3895 = vpop.f32.mrf.mxu0
      %v3896 = vadd.f32 0.0, %v3895
      %3897 = vdwg.mxu0
      %v3898 = vadd.f32 %v3814, %v3894
      %v3899 = vadd.f32 %v3815, %v3896
      %s3900 = scalar_lea.vmem %s3, 28
      %v3901 = vld [vmem:[%s3900] sm:$0xf]
      %v3903 = vsel %vm3134, %v3901, 0
      %v3906 = vsel %vm3134, %v3640, 0
      %v3909 = vsel %vm3134, %v3641, 0
      %3911 = vmatprep.subr.mxu0 0.0
      %3912 = vmatpush1.xpose.msra.mxu0 %v3705
      %3913 = vmatprep.subr.mxu0 0.0
      %3914 = vmatpush1.xpose.msra.mxu0 %v3702
      %3915 = vmatprep.subr.mxu0 0.0
      %3916 = vmatpush1.xpose.msra.mxu0 %v3699
      %3917 = vmatprep.subr.mxu0 0.0
      %3918 = vmatpush1.xpose.msra.mxu0 %v3696
      %3919 = vmatprep.subr.mxu0 0.0
      %3920 = vmatpush1.xpose.msra.mxu0 %v3693
      %3921 = vmatprep.subr.mxu0 0.0
      %3922 = vmatpush1.xpose.msra.mxu0 %v3690
      %3923 = vmatprep.subr.mxu0 0.0
      %3924 = vmatpush1.xpose.msra.mxu0 %v3687
      %3925 = vmatprep.subr.mxu0 0.0
      %3926 = vmatpush1.xpose.msra.mxu0 %v3684
      %3927 = vmatprep.subr.mxu0 0.0
      %3928 = vmatpush1.xpose.msra.mxu0 %v3681
      %3929 = vmatprep.subr.mxu0 0.0
      %3930 = vmatpush1.xpose.msra.mxu0 %v3678
      %3931 = vmatprep.subr.mxu0 0.0
      %3932 = vmatpush1.xpose.msra.mxu0 %v3675
      %3933 = vmatprep.subr.mxu0 0.0
      %3934 = vmatpush1.xpose.msra.mxu0 %v3672
      %3935 = vmatprep.subr.mxu0 0.0
      %3936 = vmatpush1.xpose.msra.mxu0 %v3669
      %3937 = vmatprep.subr.mxu0 0.0
      %3938 = vmatpush1.xpose.msra.mxu0 %v3666
      %3939 = vmatprep.subr.mxu0 0.0
      %3940 = vmatpush1.xpose.msra.mxu0 %v3663
      %3941 = vmatprep.subr.mxu0 0.0
      %3942 = vmatpush1.xpose.msra.mxu0 %v3660
      %3943 = vmatprep.subr.mxu0 0.0
      %3944 = vmatpush2.xpose.msra.mxu0 %v3909
      %3945 = vmatprep.subr.mxu0 0.0
      %3946 = vmatpush2.xpose.msra.mxu0 %v3906
      %3947 = vmatprep.subr.mxu0 0.0
      %3948 = vmatpush2.xpose.msra.mxu0 %v3825
      %3949 = vmatprep.subr.mxu0 0.0
      %3950 = vmatpush2.xpose.msra.mxu0 %v3822
      %3951 = vmatprep.subr.mxu0 0.0
      %3952 = vmatpush2.xpose.msra.mxu0 %v3741
      %3953 = vmatprep.subr.mxu0 0.0
      %3954 = vmatpush2.xpose.msra.mxu0 %v3738
      %3955 = vmatprep.subr.mxu0 0.0
      %3956 = vmatpush2.xpose.msra.mxu0 %v3735
      %3957 = vmatprep.subr.mxu0 0.0
      %3958 = vmatpush2.xpose.msra.mxu0 %v3732
      %3959 = vmatprep.subr.mxu0 0.0
      %3960 = vmatpush2.xpose.msra.mxu0 %v3729
      %3961 = vmatprep.subr.mxu0 0.0
      %3962 = vmatpush2.xpose.msra.mxu0 %v3726
      %3963 = vmatprep.subr.mxu0 0.0
      %3964 = vmatpush2.xpose.msra.mxu0 %v3723
      %3965 = vmatprep.subr.mxu0 0.0
      %3966 = vmatpush2.xpose.msra.mxu0 %v3720
      %3967 = vmatprep.subr.mxu0 0.0
      %3968 = vmatpush2.xpose.msra.mxu0 %v3717
      %3969 = vmatprep.subr.mxu0 0.0
      %3970 = vmatpush2.xpose.msra.mxu0 %v3714
      %3971 = vmatprep.subr.mxu0 0.0
      %3972 = vmatpush2.xpose.msra.mxu0 %v3711
      %3973 = vmatprep.subr.mxu0 0.0
      %3974 = vmatpush2.xpose.msra.mxu0 %v3708
      %3975 = vmatprep.mubr.f32.mxu0 0.0
      %3976 = vmatmul.mubr.f32.gmra.mxu0 %v3903
      %v3977 = vpop.f32.mrf.mxu0
      %v3978 = vadd.f32 0.0, %v3977
      %v3979 = vpop.f32.mrf.mxu0
      %v3980 = vadd.f32 0.0, %v3979
      %3981 = vdwg.mxu0
      %v3982 = vadd.f32 %v3898, %v3978
      %v3983 = vadd.f32 %v3899, %v3980
      %v3984 = vld [vmem:[#allocation2 + $0x2] sm:$0xff]
      %v3985 = vld [vmem:[#allocation2 + $0xa] sm:$0xff]
      %v3986 = vld [vmem:[#allocation2 + $0x1a] sm:$0xff]
      %v3987 = vld [vmem:[#allocation2 + $0x22] sm:$0xff]
      %v3988 = vld [vmem:[#allocation2 + $0x32] sm:$0xff]
      %v3989 = vld [vmem:[#allocation2 + $0x3a] sm:$0xff]
      %v3990 = vld [vmem:[#allocation2 + $0x4a] sm:$0xff]
      %v3991 = vld [vmem:[#allocation2 + $0x52] sm:$0xff]
      %v3992 = vld [vmem:[#allocation2 + $0x62] sm:$0xff]
      %v3993 = vld [vmem:[#allocation2 + $0x6a] sm:$0xff]
      %v3994 = vld [vmem:[#allocation2 + $0x7a] sm:$0xff]
      %v3995 = vld [vmem:[#allocation2 + $0x82] sm:$0xff]
      %v3996 = vld [vmem:[#allocation2 + $0x92] sm:$0xff]
      %v3997 = vld [vmem:[#allocation2 + $0x9a] sm:$0xff]
      %v3998 = vld [vmem:[#allocation2 + $0xaa] sm:$0xff]
      %v3999 = vld [vmem:[#allocation2 + $0xb2] sm:$0xff]
      %v4000 = vld [vmem:[#allocation2 + $0xc2] sm:$0xff]
      %v4001 = vld [vmem:[#allocation2 + $0xca] sm:$0xff]
      %v4002 = vld [vmem:[#allocation2 + $0xda] sm:$0xff]
      %v4003 = vld [vmem:[#allocation2 + $0xe2] sm:$0xff]
      %v4004 = vld [vmem:[#allocation2 + $0xf2] sm:$0xff]
      %v4005 = vld [vmem:[#allocation2 + $0xfa] sm:$0xff]
      %v4006 = vld [vmem:[#allocation2 + $0x10a] sm:$0xff]
      %v4007 = vld [vmem:[#allocation2 + $0x112] sm:$0xff]
      %v4008 = vld [vmem:[#allocation2 + $0x122] sm:$0xff]
      %v4009 = vld [vmem:[#allocation2 + $0x12a] sm:$0xff]
      %v4010 = vld [vmem:[#allocation2 + $0x13a] sm:$0xff]
      %v4011 = vld [vmem:[#allocation2 + $0x142] sm:$0xff]
      %v4012 = vld [vmem:[#allocation2 + $0x152] sm:$0xff]
      %v4013 = vld [vmem:[#allocation2 + $0x15a] sm:$0xff]
      %v4014 = vld [vmem:[#allocation2 + $0x16a] sm:$0xff]
      %v4015 = vld [vmem:[#allocation2 + $0x172] sm:$0xff]
      %v4016 = vld [vmem:[#allocation2 + $0x182] sm:$0xff]
      %v4017 = vld [vmem:[#allocation2 + $0x18a] sm:$0xff]
      %v4018 = vld [vmem:[#allocation2 + $0x19a] sm:$0xff]
      %v4019 = vld [vmem:[#allocation2 + $0x1a2] sm:$0xff]
      %s4020 = scalar_lea.vmem %s3, 8
      %v4021 = vld [vmem:[%s4020] sm:$0xf]
      %v4023 = vsel %vm3134, %v4021, 0
      %v4026 = vsel %vm3134, %v3984, 0
      %v4029 = vsel %vm3134, %v3985, 0
      %v4032 = vsel %vm3134, %v3986, 0
      %v4035 = vsel %vm3134, %v3987, 0
      %v4038 = vsel %vm3134, %v3988, 0
      %v4041 = vsel %vm3134, %v3989, 0
      %v4044 = vsel %vm3134, %v3990, 0
      %v4047 = vsel %vm3134, %v3991, 0
      %v4050 = vsel %vm3134, %v3992, 0
      %v4053 = vsel %vm3134, %v3993, 0
      %v4056 = vsel %vm3134, %v3994, 0
      %v4059 = vsel %vm3134, %v3995, 0
      %v4062 = vsel %vm3134, %v3996, 0
      %v4065 = vsel %vm3134, %v3997, 0
      %v4068 = vsel %vm3134, %v3998, 0
      %v4071 = vsel %vm3134, %v3999, 0
      %v4074 = vsel %vm3134, %v4000, 0
      %v4077 = vsel %vm3134, %v4001, 0
      %v4080 = vsel %vm3134, %v4002, 0
      %v4083 = vsel %vm3134, %v4003, 0
      %v4086 = vsel %vm3134, %v4004, 0
      %v4089 = vsel %vm3134, %v4005, 0
      %v4092 = vsel %vm3134, %v4006, 0
      %v4095 = vsel %vm3134, %v4007, 0
      %v4098 = vsel %vm3134, %v4008, 0
      %v4101 = vsel %vm3134, %v4009, 0
      %v4104 = vsel %vm3134, %v4010, 0
      %v4107 = vsel %vm3134, %v4011, 0
      %v4110 = vsel %vm3134, %v4012, 0
      %v4113 = vsel %vm3134, %v4013, 0
      %v4116 = vsel %vm3134, %v4014, 0
      %v4119 = vsel %vm3134, %v4015, 0
      %4121 = vmatprep.subr.mxu0 0.0
      %4122 = vmatpush1.xpose.msra.mxu0 %v4071
      %4123 = vmatprep.subr.mxu0 0.0
      %4124 = vmatpush1.xpose.msra.mxu0 %v4068
      %4125 = vmatprep.subr.mxu0 0.0
      %4126 = vmatpush1.xpose.msra.mxu0 %v4065
      %4127 = vmatprep.subr.mxu0 0.0
      %4128 = vmatpush1.xpose.msra.mxu0 %v4062
      %4129 = vmatprep.subr.mxu0 0.0
      %4130 = vmatpush1.xpose.msra.mxu0 %v4059
      %4131 = vmatprep.subr.mxu0 0.0
      %4132 = vmatpush1.xpose.msra.mxu0 %v4056
      %4133 = vmatprep.subr.mxu0 0.0
      %4134 = vmatpush1.xpose.msra.mxu0 %v4053
      %4135 = vmatprep.subr.mxu0 0.0
      %4136 = vmatpush1.xpose.msra.mxu0 %v4050
      %4137 = vmatprep.subr.mxu0 0.0
      %4138 = vmatpush1.xpose.msra.mxu0 %v4047
      %4139 = vmatprep.subr.mxu0 0.0
      %4140 = vmatpush1.xpose.msra.mxu0 %v4044
      %4141 = vmatprep.subr.mxu0 0.0
      %4142 = vmatpush1.xpose.msra.mxu0 %v4041
      %4143 = vmatprep.subr.mxu0 0.0
      %4144 = vmatpush1.xpose.msra.mxu0 %v4038
      %4145 = vmatprep.subr.mxu0 0.0
      %4146 = vmatpush1.xpose.msra.mxu0 %v4035
      %4147 = vmatprep.subr.mxu0 0.0
      %4148 = vmatpush1.xpose.msra.mxu0 %v4032
      %4149 = vmatprep.subr.mxu0 0.0
      %4150 = vmatpush1.xpose.msra.mxu0 %v4029
      %4151 = vmatprep.subr.mxu0 0.0
      %4152 = vmatpush1.xpose.msra.mxu0 %v4026
      %4153 = vmatprep.subr.mxu0 0.0
      %4154 = vmatpush2.xpose.msra.mxu0 %v4119
      %4155 = vmatprep.subr.mxu0 0.0
      %4156 = vmatpush2.xpose.msra.mxu0 %v4116
      %4157 = vmatprep.subr.mxu0 0.0
      %4158 = vmatpush2.xpose.msra.mxu0 %v4113
      %4159 = vmatprep.subr.mxu0 0.0
      %4160 = vmatpush2.xpose.msra.mxu0 %v4110
      %4161 = vmatprep.subr.mxu0 0.0
      %4162 = vmatpush2.xpose.msra.mxu0 %v4107
      %4163 = vmatprep.subr.mxu0 0.0
      %4164 = vmatpush2.xpose.msra.mxu0 %v4104
      %4165 = vmatprep.subr.mxu0 0.0
      %4166 = vmatpush2.xpose.msra.mxu0 %v4101
      %4167 = vmatprep.subr.mxu0 0.0
      %4168 = vmatpush2.xpose.msra.mxu0 %v4098
      %4169 = vmatprep.subr.mxu0 0.0
      %4170 = vmatpush2.xpose.msra.mxu0 %v4095
      %4171 = vmatprep.subr.mxu0 0.0
      %4172 = vmatpush2.xpose.msra.mxu0 %v4092
      %4173 = vmatprep.subr.mxu0 0.0
      %4174 = vmatpush2.xpose.msra.mxu0 %v4089
      %4175 = vmatprep.subr.mxu0 0.0
      %4176 = vmatpush2.xpose.msra.mxu0 %v4086
      %4177 = vmatprep.subr.mxu0 0.0
      %4178 = vmatpush2.xpose.msra.mxu0 %v4083
      %4179 = vmatprep.subr.mxu0 0.0
      %4180 = vmatpush2.xpose.msra.mxu0 %v4080
      %4181 = vmatprep.subr.mxu0 0.0
      %4182 = vmatpush2.xpose.msra.mxu0 %v4077
      %4183 = vmatprep.subr.mxu0 0.0
      %4184 = vmatpush2.xpose.msra.mxu0 %v4074
      %4185 = vmatprep.mubr.f32.mxu0 0.0
      %4186 = vmatmul.mubr.f32.gmra.mxu0 %v4023
      %v4187 = vpop.f32.mrf.mxu0
      %v4188 = vadd.f32 0.0, %v4187
      %v4189 = vpop.f32.mrf.mxu0
      %v4190 = vadd.f32 0.0, %v4189
      %4191 = vdwg.mxu0
      %v4192 = vadd.f32 %v3982, %v4188
      %v4193 = vadd.f32 %v3983, %v4190
      %s4194 = scalar_lea.vmem %s3, 20
      %v4195 = vld [vmem:[%s4194] sm:$0xf]
      %v4197 = vsel %vm3134, %v4195, 0
      %v4200 = vsel %vm3134, %v4016, 0
      %v4203 = vsel %vm3134, %v4017, 0
      %4205 = vmatprep.subr.mxu0 0.0
      %4206 = vmatpush1.xpose.msra.mxu0 %v4077
      %4207 = vmatprep.subr.mxu0 0.0
      %4208 = vmatpush1.xpose.msra.mxu0 %v4074
      %4209 = vmatprep.subr.mxu0 0.0
      %4210 = vmatpush1.xpose.msra.mxu0 %v4071
      %4211 = vmatprep.subr.mxu0 0.0
      %4212 = vmatpush1.xpose.msra.mxu0 %v4068
      %4213 = vmatprep.subr.mxu0 0.0
      %4214 = vmatpush1.xpose.msra.mxu0 %v4065
      %4215 = vmatprep.subr.mxu0 0.0
      %4216 = vmatpush1.xpose.msra.mxu0 %v4062
      %4217 = vmatprep.subr.mxu0 0.0
      %4218 = vmatpush1.xpose.msra.mxu0 %v4059
      %4219 = vmatprep.subr.mxu0 0.0
      %4220 = vmatpush1.xpose.msra.mxu0 %v4056
      %4221 = vmatprep.subr.mxu0 0.0
      %4222 = vmatpush1.xpose.msra.mxu0 %v4053
      %4223 = vmatprep.subr.mxu0 0.0
      %4224 = vmatpush1.xpose.msra.mxu0 %v4050
      %4225 = vmatprep.subr.mxu0 0.0
      %4226 = vmatpush1.xpose.msra.mxu0 %v4047
      %4227 = vmatprep.subr.mxu0 0.0
      %4228 = vmatpush1.xpose.msra.mxu0 %v4044
      %4229 = vmatprep.subr.mxu0 0.0
      %4230 = vmatpush1.xpose.msra.mxu0 %v4041
      %4231 = vmatprep.subr.mxu0 0.0
      %4232 = vmatpush1.xpose.msra.mxu0 %v4038
      %4233 = vmatprep.subr.mxu0 0.0
      %4234 = vmatpush1.xpose.msra.mxu0 %v4035
      %4235 = vmatprep.subr.mxu0 0.0
      %4236 = vmatpush1.xpose.msra.mxu0 %v4032
      %4237 = vmatprep.subr.mxu0 0.0
      %4238 = vmatpush2.xpose.msra.mxu0 %v4203
      %4239 = vmatprep.subr.mxu0 0.0
      %4240 = vmatpush2.xpose.msra.mxu0 %v4200
      %4241 = vmatprep.subr.mxu0 0.0
      %4242 = vmatpush2.xpose.msra.mxu0 %v4119
      %4243 = vmatprep.subr.mxu0 0.0
      %4244 = vmatpush2.xpose.msra.mxu0 %v4116
      %4245 = vmatprep.subr.mxu0 0.0
      %4246 = vmatpush2.xpose.msra.mxu0 %v4113
      %4247 = vmatprep.subr.mxu0 0.0
      %4248 = vmatpush2.xpose.msra.mxu0 %v4110
      %4249 = vmatprep.subr.mxu0 0.0
      %4250 = vmatpush2.xpose.msra.mxu0 %v4107
      %4251 = vmatprep.subr.mxu0 0.0
      %4252 = vmatpush2.xpose.msra.mxu0 %v4104
      %4253 = vmatprep.subr.mxu0 0.0
      %4254 = vmatpush2.xpose.msra.mxu0 %v4101
      %4255 = vmatprep.subr.mxu0 0.0
      %4256 = vmatpush2.xpose.msra.mxu0 %v4098
      %4257 = vmatprep.subr.mxu0 0.0
      %4258 = vmatpush2.xpose.msra.mxu0 %v4095
      %4259 = vmatprep.subr.mxu0 0.0
      %4260 = vmatpush2.xpose.msra.mxu0 %v4092
      %4261 = vmatprep.subr.mxu0 0.0
      %4262 = vmatpush2.xpose.msra.mxu0 %v4089
      %4263 = vmatprep.subr.mxu0 0.0
      %4264 = vmatpush2.xpose.msra.mxu0 %v4086
      %4265 = vmatprep.subr.mxu0 0.0
      %4266 = vmatpush2.xpose.msra.mxu0 %v4083
      %4267 = vmatprep.subr.mxu0 0.0
      %4268 = vmatpush2.xpose.msra.mxu0 %v4080
      %4269 = vmatprep.mubr.f32.mxu0 0.0
      %4270 = vmatmul.mubr.f32.gmra.mxu0 %v4197
      %v4271 = vpop.f32.mrf.mxu0
      %v4272 = vadd.f32 0.0, %v4271
      %v4273 = vpop.f32.mrf.mxu0
      %v4274 = vadd.f32 0.0, %v4273
      %4275 = vdwg.mxu0
      %v4276 = vadd.f32 %v4192, %v4272
      %v4277 = vadd.f32 %v4193, %v4274
      %s4278 = scalar_lea.vmem %s3, 32
      %v4279 = vld [vmem:[%s4278] sm:$0xf]
      %v4281 = vsel %vm3134, %v4279, 0
      %v4284 = vsel %vm3134, %v4018, 0
      %v4287 = vsel %vm3134, %v4019, 0
      %4289 = vmatprep.subr.mxu0 0.0
      %4290 = vmatpush1.xpose.msra.mxu0 %v4083
      %4291 = vmatprep.subr.mxu0 0.0
      %4292 = vmatpush1.xpose.msra.mxu0 %v4080
      %4293 = vmatprep.subr.mxu0 0.0
      %4294 = vmatpush1.xpose.msra.mxu0 %v4077
      %4295 = vmatprep.subr.mxu0 0.0
      %4296 = vmatpush1.xpose.msra.mxu0 %v4074
      %4297 = vmatprep.subr.mxu0 0.0
      %4298 = vmatpush1.xpose.msra.mxu0 %v4071
      %4299 = vmatprep.subr.mxu0 0.0
      %4300 = vmatpush1.xpose.msra.mxu0 %v4068
      %4301 = vmatprep.subr.mxu0 0.0
      %4302 = vmatpush1.xpose.msra.mxu0 %v4065
      %4303 = vmatprep.subr.mxu0 0.0
      %4304 = vmatpush1.xpose.msra.mxu0 %v4062
      %4305 = vmatprep.subr.mxu0 0.0
      %4306 = vmatpush1.xpose.msra.mxu0 %v4059
      %4307 = vmatprep.subr.mxu0 0.0
      %4308 = vmatpush1.xpose.msra.mxu0 %v4056
      %4309 = vmatprep.subr.mxu0 0.0
      %4310 = vmatpush1.xpose.msra.mxu0 %v4053
      %4311 = vmatprep.subr.mxu0 0.0
      %4312 = vmatpush1.xpose.msra.mxu0 %v4050
      %4313 = vmatprep.subr.mxu0 0.0
      %4314 = vmatpush1.xpose.msra.mxu0 %v4047
      %4315 = vmatprep.subr.mxu0 0.0
      %4316 = vmatpush1.xpose.msra.mxu0 %v4044
      %4317 = vmatprep.subr.mxu0 0.0
      %4318 = vmatpush1.xpose.msra.mxu0 %v4041
      %4319 = vmatprep.subr.mxu0 0.0
      %4320 = vmatpush1.xpose.msra.mxu0 %v4038
      %4321 = vmatprep.subr.mxu0 0.0
      %4322 = vmatpush2.xpose.msra.mxu0 %v4287
      %4323 = vmatprep.subr.mxu0 0.0
      %4324 = vmatpush2.xpose.msra.mxu0 %v4284
      %4325 = vmatprep.subr.mxu0 0.0
      %4326 = vmatpush2.xpose.msra.mxu0 %v4203
      %4327 = vmatprep.subr.mxu0 0.0
      %4328 = vmatpush2.xpose.msra.mxu0 %v4200
      %4329 = vmatprep.subr.mxu0 0.0
      %4330 = vmatpush2.xpose.msra.mxu0 %v4119
      %4331 = vmatprep.subr.mxu0 0.0
      %4332 = vmatpush2.xpose.msra.mxu0 %v4116
      %4333 = vmatprep.subr.mxu0 0.0
      %4334 = vmatpush2.xpose.msra.mxu0 %v4113
      %4335 = vmatprep.subr.mxu0 0.0
      %4336 = vmatpush2.xpose.msra.mxu0 %v4110
      %4337 = vmatprep.subr.mxu0 0.0
      %4338 = vmatpush2.xpose.msra.mxu0 %v4107
      %4339 = vmatprep.subr.mxu0 0.0
      %4340 = vmatpush2.xpose.msra.mxu0 %v4104
      %4341 = vmatprep.subr.mxu0 0.0
      %4342 = vmatpush2.xpose.msra.mxu0 %v4101
      %4343 = vmatprep.subr.mxu0 0.0
      %4344 = vmatpush2.xpose.msra.mxu0 %v4098
      %4345 = vmatprep.subr.mxu0 0.0
      %4346 = vmatpush2.xpose.msra.mxu0 %v4095
      %4347 = vmatprep.subr.mxu0 0.0
      %4348 = vmatpush2.xpose.msra.mxu0 %v4092
      %4349 = vmatprep.subr.mxu0 0.0
      %4350 = vmatpush2.xpose.msra.mxu0 %v4089
      %4351 = vmatprep.subr.mxu0 0.0
      %4352 = vmatpush2.xpose.msra.mxu0 %v4086
      %4353 = vmatprep.mubr.f32.mxu0 0.0
      %4354 = vmatmul.mubr.f32.gmra.mxu0 %v4281
      %v4355 = vpop.f32.mrf.mxu0
      %v4356 = vadd.f32 0.0, %v4355
      %v4357 = vpop.f32.mrf.mxu0
      %v4358 = vadd.f32 0.0, %v4357
      %4359 = vdwg.mxu0
      %v4360 = vadd.f32 %v4276, %v4356
      %v4361 = vadd.f32 %v4277, %v4358
      %v4362 = vmax.f32 %v4360, 0.0
      %v4363 = vmax.f32 %v4361, 0.0
      %v4366 = vcombine.low %v4362, %v4363
      %4368 = vst [vmem:[%s224] sm:$0xff] %v4366
      %p4369 = scmp.lt.s32.totalorder %s16, 1
      %s4370 = scalar_select %p4369, %s16, 1
      %s4371 = smul.addr %s4370, 2
      %s4372 = smul.addr %s4371, 4
      %s4373 = scalar_lea.vmem %s5, %s4372
      // Predicated region
      $region41: #{deconv_block_forward.1} parent=39 // pred_check
        %p4374 = pneg %p144
      $region42: #{deconv_block_forward.1} parent=39 // pred_check_branch
        %4376 = sbr.rel (%p4374) target = $region44
      $region43: #{deconv_block_forward.1} parent=39 // pred_region
        _
      $region44: #{deconv_block_forward.1} parent=39 // pred_fallthru
        _
    $region40: #{deconv_block_forward.1} parent=5 // pred_fallthru
      _
    %p4377 = scmp.le.s32.totalorder 2, %s11
    // Predicated region
    $region45: #{deconv_block_forward.1} parent=5 // pred_check
      %p4378 = pneg %p4377
    $region46: #{deconv_block_forward.1} parent=5 // pred_check_branch
      %4380 = sbr.rel (%p4378) target = $region48
    $region47: #{deconv_block_forward.1} parent=5 // pred_region
      %s4381 = ssub.s32 %s11, 2
      // Predicated region
      $region49: #{deconv_block_forward.1} parent=47 // pred_check
        %p4382 = pneg %p150
      $region50: #{deconv_block_forward.1} parent=47 // pred_check_branch
        %4384 = sbr.rel (%p4382) target = $region52
      $region51: #{deconv_block_forward.1} parent=47 // pred_region
        %p4385 = scmp.lt.s32.totalorder %s17, 1
        %s4386 = scalar_select %p4385, %s17, 1
        %s4387 = smul.addr %s4386, 2
        %s4388 = smul.addr %s4387, 4
        %s4389 = scalar_lea.vmem %s5, %s4388
      $region52: #{deconv_block_forward.1} parent=47 // pred_fallthru
        _
    $region48: #{deconv_block_forward.1} parent=5 // pred_fallthru
      _
  $region6: #{deconv_block_forward.1} parent=0 // loop_footer
    %s15 = sadd.s32 1, %s11
  $region7: #{deconv_block_forward.1} parent=0 // loop_footer_branch
    %10 = sbr.rel target = $region3
  $region8: #{deconv_block_forward.1} parent=0 // loop_exit
    _

</llo_original>
